<compile_context>
chip_gen: v6e
topology: v6e:2x2x1
jax: 0.10.0
libtpu: 0.0.40
codegen_flags: <defaults>
</compile_context>

<pallas_src>
import functools

import jax
import jax.numpy as jnp
import numpy as np
from jax.experimental import pallas as pl
from jax.experimental.pallas import tpu as pltpu


# ----------------------------------------------------------------------------
# Centered orthonormal DFT matrices (fftshift . (i)fft . ifftshift), packed bf16.
# ----------------------------------------------------------------------------
def _centered_dft_mats(n, inverse):
    eye = jnp.eye(n, dtype=jnp.complex64)
    shifted = jnp.fft.ifftshift(eye, axes=0)
    f = (jnp.fft.ifft if inverse else jnp.fft.fft)(shifted, axis=0, norm="ortho")
    m = jnp.fft.fftshift(f, axes=0)
    return jnp.real(m).astype(jnp.float32), jnp.imag(m).astype(jnp.float32)


def make_dft_tables(H, W):
    """(3, n, n) bf16 tables [R, I, R+I]; the third slice is only used in Gauss mode."""
    def pack_left(n, inverse):
        r, i = _centered_dft_mats(n, inverse)
        return jnp.stack([r, i, r + i]).astype(jnp.bfloat16)

    def pack_right(n, inverse):
        r, i = _centered_dft_mats(n, inverse)
        return jnp.stack([r.T, i.T, (r + i).T]).astype(jnp.bfloat16)

    return (pack_left(H, True), pack_right(W, True),
            pack_left(H, False), pack_right(W, False))


def _mm(a, b):
    return jnp.dot(a, b, preferred_element_type=jnp.float32)


def _cplx_mm_left(R, I, S, xr, xi):
    """(R + iI) @ (xr + i xi). S=(R+I) -> Gauss 3-mult; S=None -> plain 4-matmul."""
    bf = jnp.bfloat16
    ar, ai = xr.astype(bf), xi.astype(bf)
    if S is None:
        return _mm(R, ar) - _mm(I, ai), _mm(R, ai) + _mm(I, ar)
    t1, t2 = _mm(R, ar), _mm(I, ai)
    t3 = _mm(S, (xr + xi).astype(bf))
    return t1 - t2, t3 - t1 - t2


def _cplx_mm_right(xr, xi, Rt, It, St):
    """(xr + i xi) @ (R + iI), with pre-transposed right-hand tables."""
    bf = jnp.bfloat16
    ar, ai = xr.astype(bf), xi.astype(bf)
    if St is None:
        return _mm(ar, Rt) - _mm(ai, It), _mm(ai, Rt) + _mm(ar, It)
    t1, t2 = _mm(ar, Rt), _mm(ai, It)
    t3 = _mm((xr + xi).astype(bf), St)
    return t1 - t2, t3 - t1 - t2


# ----------------------------------------------------------------------------
# Phase 1: sens_reduce over coil blocks (accumulated) + 1x1-conv regularizer.
# ----------------------------------------------------------------------------
def _sens_reduce_reg_kernel(cur_r_ref, cur_i_ref, sens_r_ref, sens_i_ref,
                            inv_h_ref, inv_wt_ref, w1_ref, b1_ref, w2_ref, b2_ref,
                            m_r_ref, m_i_ref, acc_r_ref, acc_i_ref, *, use_gauss):
    _, cb, _H, W = cur_r_ref.shape
    Hb = acc_r_ref.shape[0]
    CH = w1_ref.shape[0]
    # Coil-reduction axis: MUST stay the innermost grid axis so the revisited
    # m_r/m_i output block is finalized before its block index changes.
    k = pl.program_id(2)

    @pl.when(k == 0)
    def _():
        acc_r_ref[...] = jnp.zeros_like(acc_r_ref)
        acc_i_ref[...] = jnp.zeros_like(acc_i_ref)

    IhR, IhI = inv_h_ref[0], inv_h_ref[1]
    IhS = inv_h_ref[2] if use_gauss else None
    IwR, IwI = inv_wt_ref[0], inv_wt_ref[1]
    IwS = inv_wt_ref[2] if use_gauss else None

    red_r = acc_r_ref[...]
    red_i = acc_i_ref[...]
    # Fused per-coil ifft2c (H-direction row-block first, then W-direction) --
    # no (cb, H, W) staging temporaries; conj(sens) multiply + coil sum in f32.
    for c in range(cb):
        xr = cur_r_ref[0, c]
        xi = cur_i_ref[0, c]
        hr, hi = _cplx_mm_left(IhR, IhI, IhS, xr, xi)        # (Hb, W)
        zr, zi = _cplx_mm_right(hr, hi, IwR, IwI, IwS)       # (Hb, W)
        sr = sens_r_ref[0, c].astype(jnp.float32)
        si = sens_i_ref[0, c].astype(jnp.float32)
        red_r = red_r + zr * sr + zi * si
        red_i = red_i + zi * sr - zr * si
    acc_r_ref[...] = red_r
    acc_i_ref[...] = red_i

    # ---- finalize: regularizer Conv1x1(2->CH) + ReLU + Conv1x1(CH->2) --------
    @pl.when(k == pl.num_programs(2) - 1)
    def _():
        rr = acc_r_ref[...]
        ri = acc_i_ref[...]
        mr = jnp.zeros((Hb, W), jnp.float32)
        mi = jnp.zeros((Hb, W), jnp.float32)
        for j in range(CH):
            h = jnp.maximum(rr * w1_ref[j, 0] + ri * w1_ref[j, 1] + b1_ref[0, j], 0.0)
            mr = mr + h * w2_ref[0, j]
            mi = mi + h * w2_ref[1, j]
        m_r_ref[0] = mr + b2_ref[0, 0]
        m_i_ref[0] = mi + b2_ref[0, 1]


# ----------------------------------------------------------------------------
# Phase 2: sens_expand + fft2c + soft data consistency, per coil block.
# ----------------------------------------------------------------------------
def _sens_expand_dc_kernel(m_r_ref, m_i_ref, cur_r_ref, cur_i_ref,
                           ref_r_ref, ref_i_ref, sens_r_ref, sens_i_ref,
                           mask_ref, fwd_h_ref, fwd_wt_ref, dcw_ref,
                           out_r_ref, out_i_ref, *, use_gauss):
    _, cb, _H, _W = cur_r_ref.shape

    FhR, FhI = fwd_h_ref[0], fwd_h_ref[1]
    FhS = fwd_h_ref[2] if use_gauss else None
    FwR, FwI = fwd_wt_ref[0], fwd_wt_ref[1]
    FwS = fwd_wt_ref[2] if use_gauss else None

    mr = m_r_ref[0]                              # (H, W) f32
    mi = m_i_ref[0]
    mask = mask_ref[...] != 0.0                  # (1, W) -> broadcasts over (H, W)
    dcw = dcw_ref[0, 0]

    # Fused per-coil sens_expand + fft2c + soft DC; no (cb, H, W) staging scratch.
    for c in range(cb):
        sr = sens_r_ref[0, c].astype(jnp.float32)
        si = sens_i_ref[0, c].astype(jnp.float32)
        er = mr * sr - mi * si
        ei = mr * si + mi * sr
        hr, hi = _cplx_mm_left(FhR, FhI, FhS, er, ei)
        kr, ki = _cplx_mm_right(hr, hi, FwR, FwI, FwS)
        cr = cur_r_ref[0, c]
        ci = cur_i_ref[0, c]
        rr = ref_r_ref[0, c]
        ri = ref_i_ref[0, c]
        out_r_ref[0, c] = cr - jnp.where(mask, (cr - rr) * dcw, 0.0) - kr
        out_i_ref[0, c] = ci - jnp.where(mask, (ci - ri) * dcw, 0.0) - ki


# ----------------------------------------------------------------------------
# Per-chip budgeting / spec helpers.
# ----------------------------------------------------------------------------
def _tpu_chip_profile():
    """(vmem_limit_bytes, tensorcores_per_chip, use_gauss) for the default device."""
    kind = ""
    try:
        kind = jax.devices()[0].device_kind.lower()
    except Exception:
        pass
    vmem_cap = None
    try:
        info = pltpu.get_tpu_info()
        for attr in ("vmem_capacity_bytes", "vmem_size_bytes", "vmem_bytes"):
            v = getattr(info, attr, None)
            if v:
                vmem_cap = int(v)
                break
    except Exception:
        vmem_cap = None
    if vmem_cap is None:
        vmem_cap = (64 << 20) if "v7" in kind else (128 << 20)
    n_cores = 2 if "v7" in kind else 1
    # Gauss's 3-mult only pays on MXU-bound v5e; v6e/v7x are HBM/VPU-bound so the
    # plain 4-matmul form (fewer full-plane VPU adds / casts) is preferred there.
    use_gauss = "v5" in kind
    # Headroom for Mosaic-internal scratch / bf16 temporaries:
    #   v7x (64 MiB physical) -> ~51 MiB; v5e/v6e (128 MiB) -> ~102 MiB.
    vmem_limit = min(int(vmem_cap * 0.80), vmem_cap - (12 << 20))
    return vmem_limit, n_cores, use_gauss


def _phase2_vmem_bytes(cb, H, W):
    plane = cb * H * W
    est = 2 * (2 * plane * 4 + 2 * plane * 4 + 2 * plane * 2)  # cur/ref f32, sens bf16 (x2 buf)
    est += 2 * 2 * plane * 4                                   # out re/im (double-buffered)
    est += 3 * (H * H + W * W) * 2                             # DFT tables (single-buffered)
    est += 2 * H * W * 4                                       # regularized image m
    return est


def _choose_coil_block(C, H, W, vmem_limit):
    budget = int(vmem_limit * 0.85)
    for cand in (8, 6, 4, 3, 2, 1):
        if C % cand == 0 and _phase2_vmem_bytes(cand, H, W) <= budget:
            return cand
    return 1


def _single_buffered(block_shape, index_map):
    """BlockSpec with single buffering for (nearly) grid-invariant operands."""
    try:
        return pl.BlockSpec(block_shape, index_map, pipeline_mode=pl.Buffered(1))
    except Exception:  # older jax without pipeline_mode / Buffered
        return pl.BlockSpec(block_shape, index_map)


# ----------------------------------------------------------------------------
# Wrappers.
# ----------------------------------------------------------------------------
def varnet_block_split(cur_r, cur_i, ref_r, ref_i, mask_row, sens_r, sens_i,
                       params, dft=None, coil_block=None, h_split=None, chip=None):
    """One VarNetBlock on re/im-split planar tensors.

    cur_*/ref_*: (B, C, H, W) float32; sens_*: (B, C, H, W) float32 or bfloat16;
    mask_row: (1, W) column mask. Returns (out_r, out_i) float32, same layout.
    """
    B, C, H, W = cur_r.shape
    dc_weight, w1, b1, w2, b2 = params
    if chip is None:
        chip = _tpu_chip_profile()
    vmem_limit, n_cores, use_gauss = chip
    if dft is None:
        dft = make_dft_tables(H, W)
    inv_h, inv_wt, fwd_h, fwd_wt = dft

    # sens maps are re-read by both phases of every cascade block -> keep them bf16.
    sens_r = sens_r.astype(jnp.bfloat16)
    sens_i = sens_i.astype(jnp.bfloat16)

    if coil_block is None:
        coil_block = _choose_coil_block(C, H, W, vmem_limit)
    cb = int(coil_block)
    assert C % cb == 0, "coil_block must divide the number of coils"
    n_cb = C // cb

    # Optional H-split of phase 1 so both v7x TensorCores stay busy at tiny batch.
    if h_split is None:
        h_split = 2 if (n_cores >= 2 and B < n_cores) else 1
    h_split = int(h_split)
    if h_split < 1 or H % h_split != 0 or (h_split > 1 and (H // h_split) % 16 != 0):
        h_split = 1
    Hb = H // h_split

    dcw = jnp.reshape(dc_weight, (1, 1)).astype(jnp.float32)
    mask_row = jnp.reshape(mask_row, (1, W)).astype(jnp.float32)

    n_mm = 3 if use_gauss else 4
    CH = w1.shape[0]
    smem_spec = pl.BlockSpec(memory_space=pltpu.MemorySpace.SMEM)

    # -- phase 1: sens_reduce (coil-accumulated, optionally H-split) + regularizer --
    cur1_spec = pl.BlockSpec((1, cb, H, W), lambda b, h, k: (b, k, 0, 0))
    sens1_spec = pl.BlockSpec((1, cb, Hb, W), lambda b, h, k: (b, k, h, 0))
    invh_spec = _single_buffered((3, Hb, H), lambda b, h, k: (0, h, 0))
    invw_spec = _single_buffered((3, W, W), lambda b, h, k: (0, 0, 0))
    img1_spec = pl.BlockSpec((1, Hb, W), lambda b, h, k: (b, h, 0))

    flops1 = int(B * C * n_mm * 2 * H * W * (H + W)
                 + B * C * 8 * H * W + B * CH * 6 * H * W)
    bytes1 = int(h_split * 2 * B * C * H * W * 4    # cur re/im (re-read per h block)
                 + 2 * B * C * H * W * 2            # sens re/im (bf16)
                 + 2 * B * H * W * 4                # m re/im out
                 + 6 * (H * H + W * W))             # bf16 DFT tables
    cost1 = pl.CostEstimate(flops=flops1, transcendentals=0, bytes_accessed=bytes1)

    m_r, m_i = pl.pallas_call(
        functools.partial(_sens_reduce_reg_kernel, use_gauss=use_gauss),
        out_shape=(jax.ShapeDtypeStruct((B, H, W), jnp.float32),
                   jax.ShapeDtypeStruct((B, H, W), jnp.float32)),
        grid_spec=pltpu.PrefetchScalarGridSpec(
            num_scalar_prefetch=0,
            grid=(B, h_split, n_cb),               # coil-reduction axis innermost
            in_specs=[cur1_spec, cur1_spec,        # current_kspace re/im (f32)
                      sens1_spec, sens1_spec,      # sens_maps re/im (bf16)
                      invh_spec, invw_spec,        # inverse DFT tables (bf16)
                      smem_spec, smem_spec, smem_spec, smem_spec],  # w1,b1,w2,b2
            out_specs=(img1_spec, img1_spec),
            scratch_shapes=[pltpu.VMEM((Hb, W), jnp.float32),
                            pltpu.VMEM((Hb, W), jnp.float32)]),
        compiler_params=pltpu.CompilerParams(
            dimension_semantics=("parallel", "parallel", "arbitrary"),
            vmem_limit_bytes=vmem_limit),
        cost_estimate=cost1,
    )(cur_r, cur_i, sens_r, sens_i, inv_h, inv_wt, w1, b1, w2, b2)

    # -- phase 2: sens_expand + fft2c + soft DC, fully parallel over (B, coil blocks) --
    coil2_spec = pl.BlockSpec((1, cb, H, W), lambda b, k: (b, k, 0, 0))
    img2_spec = _single_buffered((1, H, W), lambda b, k: (b, 0, 0))
    fwdh_spec = _single_buffered((3, H, H), lambda b, k: (0, 0, 0))
    fwdw_spec = _single_buffered((3, W, W), lambda b, k: (0, 0, 0))
    mask_spec = _single_buffered((1, W), lambda b, k: (0, 0))

    flops2 = int(B * C * n_mm * 2 * H * W * (H + W) + B * C * 14 * H * W)
    bytes2 = int(2 * B * H * W * 4 + 3 * 2 * B * C * H * W * 4
                 + 2 * B * C * H * W * 2 + 6 * (H * H + W * W))
    cost2 = pl.CostEstimate(flops=flops2, transcendentals=0, bytes_accessed=bytes2)

    out_r, out_i = pl.pallas_call(
        functools.partial(_sens_expand_dc_kernel, use_gauss=use_gauss),
        out_shape=(jax.ShapeDtypeStruct((B, C, H, W), jnp.float32),
                   jax.ShapeDtypeStruct((B, C, H, W), jnp.float32)),
        grid_spec=pltpu.PrefetchScalarGridSpec(
            num_scalar_prefetch=0,
            grid=(B, n_cb),
            in_specs=[img2_spec, img2_spec,        # regularized image re/im
                      coil2_spec, coil2_spec,      # current_kspace re/im (aliased to out)
                      coil2_spec, coil2_spec,      # ref_kspace re/im (f32)
                      coil2_spec, coil2_spec,      # sens_maps re/im (bf16)
                      mask_spec,                   # 1-D column mask
                      fwdh_spec, fwdw_spec,        # forward DFT tables (bf16)
                      smem_spec],                  # dc_weight
            out_specs=(coil2_spec, coil2_spec)),
        compiler_params=pltpu.CompilerParams(
            dimension_semantics=("parallel", "parallel"),
            vmem_limit_bytes=vmem_limit),
        cost_estimate=cost2,
        input_output_aliases={2: 0, 3: 1},         # current_kspace is dead after this block
    )(m_r, m_i, cur_r, cur_i, ref_r, ref_i, sens_r, sens_i, mask_row,
      fwd_h, fwd_wt, dcw)

    return out_r, out_i


def varnet_block(current_kspace, ref_kspace, mask, sens_maps, params,
                 coil_block=None, h_split=None):
    """Convenience wrapper for interleaved (B, C, H, W, 2) tensors (single block)."""
    out_r, out_i = varnet_block_split(
        current_kspace[..., 0], current_kspace[..., 1],
        ref_kspace[..., 0], ref_kspace[..., 1],
        jnp.reshape(mask, (1, -1)).astype(jnp.float32),
        sens_maps[..., 0], sens_maps[..., 1],
        params, coil_block=coil_block, h_split=h_split)
    return jnp.stack([out_r, out_i], axis=-1)


def varnet_cascade(masked_kspace, mask, sens_maps, cascade_params,
                   coil_block=None, h_split=None):
    """Stack of VarNetBlocks; re/im split, bf16 sens and DFT tables built once."""
    B, C, H, W, _ = masked_kspace.shape
    chip = _tpu_chip_profile()
    cur_r, cur_i = masked_kspace[..., 0], masked_kspace[..., 1]
    ref_r, ref_i = cur_r, cur_i
    sens_r = sens_maps[..., 0].astype(jnp.bfloat16)   # cast once at the boundary
    sens_i = sens_maps[..., 1].astype(jnp.bfloat16)
    mask_row = jnp.reshape(mask, (1, -1)).astype(jnp.float32)
    dft = make_dft_tables(H, W)
    for params in cascade_params:
        cur_r, cur_i = varnet_block_split(cur_r, cur_i, ref_r, ref_i, mask_row,
                                          sens_r, sens_i, params, dft=dft,
                                          coil_block=coil_block, h_split=h_split,
                                          chip=chip)
    return jnp.stack([cur_r, cur_i], axis=-1)


# ----------------------------------------------------------------------------
# Pure-JAX reference (PyTorch VarNetBlock semantics).
# ----------------------------------------------------------------------------
def reference_forward(cur, ref, mask, sens, params):
    dc_weight, w1, b1, w2, b2 = params
    curc = cur[..., 0] + 1j * cur[..., 1]
    refc = ref[..., 0] + 1j * ref[..., 1]
    sensc = sens[..., 0] + 1j * sens[..., 1]

    def ifft2c(x):
        return jnp.fft.fftshift(
            jnp.fft.ifft2(jnp.fft.ifftshift(x, axes=(-2, -1)), norm="ortho"),
            axes=(-2, -1))

    def fft2c(x):
        return jnp.fft.fftshift(
            jnp.fft.fft2(jnp.fft.ifftshift(x, axes=(-2, -1)), norm="ortho"),
            axes=(-2, -1))

    m = mask.reshape(1, 1, 1, -1)
    soft_dc = jnp.where(m, curc - refc, 0.0 + 0.0j) * dc_weight[0]
    red = jnp.sum(ifft2c(curc) * jnp.conj(sensc), axis=1, keepdims=True)
    f = jnp.stack([jnp.real(red), jnp.imag(red)], axis=-1)
    h = jnp.maximum(jnp.einsum("bchwf,kf->bchwk", f, w1) + b1[0], 0.0)
    o = jnp.einsum("bchwk,fk->bchwf", h, w2) + b2[0]
    mimg = o[..., 0] + 1j * o[..., 1]
    model_term = fft2c(mimg * sensc)
    outc = curc - soft_dc - model_term
    return jnp.stack([jnp.real(outc), jnp.imag(outc)], axis=-1)


if __name__ == "__main__":
    B, C, H, W, CH = 2, 4, 32, 16, 8
    num_cascades = 2
    key = jax.random.PRNGKey(0)
    k = jax.random.split(key, 4)

    masked_kspace = jax.random.normal(k[0], (B, C, H, W, 2), jnp.float32)
    sens_maps = 0.5 * jax.random.normal(k[1], (B, C, H, W, 2), jnp.float32)
    mask = jax.random.bernoulli(k[2], 0.4, (W,)).reshape(1, 1, 1, W, 1)

    cascade_params = []
    for pkey in jax.random.split(k[3], num_cascades):
        kk = jax.random.split(pkey, 4)
        dc_weight = jnp.ones((1,), jnp.float32)                     # nn.Parameter(torch.ones(1))
        w1 = 0.2 * jax.random.normal(kk[0], (CH, 2), jnp.float32)   # Conv2d(2, CH, 1)
        b1 = 0.1 * jax.random.normal(kk[1], (1, CH), jnp.float32)
        w2 = 0.2 * jax.random.normal(kk[2], (2, CH), jnp.float32)   # Conv2d(CH, 2, 1)
        b2 = 0.1 * jax.random.normal(kk[3], (1, 2), jnp.float32)
        cascade_params.append((dc_weight, w1, b1, w2, b2))

    # coil_block=2 exercises the accumulated (arbitrary) coil axis; h_split=2 exercises
    # the dual-TensorCore H-split of phase 1. jit so input/output aliasing is handled
    # by XLA copy-insertion (ref aliases cur in the first block).
    run = jax.jit(functools.partial(varnet_cascade, cascade_params=cascade_params,
                                    coil_block=2, h_split=2))
    out = jax.block_until_ready(run(masked_kspace, mask, sens_maps))

    # Pure-JAX reference cascade (f32 / exact FFTs).
    pred = masked_kspace
    for params in cascade_params:
        pred = reference_forward(pred, masked_kspace, mask, sens_maps, params)

    # Tolerance relaxed vs pure-f32: MXU operands and sens maps are bf16 (f32 accum).
    np.testing.assert_allclose(np.asarray(out), np.asarray(pred), rtol=4e-2, atol=4e-2)
    print("KERNEL_OK")
</pallas_src>

<mosaic_0001>
module attributes {stable_mosaic.version = 11 : i64} {
  func.func @_sens_reduce_reg_kernel(%arg0: i32, %arg1: i32, %arg2: i32, %arg3: memref<1x2x32x16xf32, #tpu.memory_space<vmem>>, %arg4: memref<1x2x32x16xf32, #tpu.memory_space<vmem>>, %arg5: memref<1x2x16x16xbf16, #tpu.memory_space<vmem>>, %arg6: memref<1x2x16x16xbf16, #tpu.memory_space<vmem>>, %arg7: memref<3x16x32xbf16, #tpu.memory_space<vmem>>, %arg8: memref<3x16x16xbf16, #tpu.memory_space<vmem>>, %arg9: memref<8x2xf32, #tpu.memory_space<smem>>, %arg10: memref<1x8xf32, #tpu.memory_space<smem>>, %arg11: memref<2x8xf32, #tpu.memory_space<smem>>, %arg12: memref<1x2xf32, #tpu.memory_space<smem>>, %arg13: memref<1x16x16xf32, #tpu.memory_space<vmem>>, %arg14: memref<1x16x16xf32, #tpu.memory_space<vmem>>, %arg15: memref<16x16xf32, #tpu.memory_space<vmem>>, %arg16: memref<16x16xf32, #tpu.memory_space<vmem>>) attributes {dimension_semantics = [#tpu.dimension_semantics<parallel>, #tpu.dimension_semantics<parallel>, #tpu.dimension_semantics<arbitrary>], iteration_bounds = array<i64: 2, 2, 2>, scalar_prefetch = 0 : i64, scratch_operands = 2 : i64, tpu.core_type = #tpu.core_type<tc>, window_params = [{transform_indices = @transform_0, window_bounds = array<i64: 1, 2, 32, 16>}, {transform_indices = @transform_1, window_bounds = array<i64: 1, 2, 32, 16>}, {transform_indices = @transform_2, window_bounds = array<i64: 1, 2, 16, 16>}, {transform_indices = @transform_3, window_bounds = array<i64: 1, 2, 16, 16>}, {pipeline_mode = #tpu.pipeline_mode<synchronous>, transform_indices = @transform_4, window_bounds = array<i64: 3, 16, 32>}, {pipeline_mode = #tpu.pipeline_mode<synchronous>, transform_indices = @transform_5, window_bounds = array<i64: 3, 16, 16>}, {transform_indices = @transform_6, window_bounds = array<i64: 8, 2>}, {transform_indices = @transform_7, window_bounds = array<i64: 1, 8>}, {transform_indices = @transform_8, window_bounds = array<i64: 2, 8>}, {transform_indices = @transform_9, window_bounds = array<i64: 1, 2>}, {transform_indices = @transform_10, window_bounds = array<i64: 1, 16, 16>}, {transform_indices = @transform_11, window_bounds = array<i64: 1, 16, 16>}]} {
    %c0_i32 = arith.constant 0 : i32
    %0 = arith.cmpi eq, %arg2, %c0_i32 : i32
    %1 = arith.extui %0 : i1 to i32
    %c0_i32_0 = arith.constant 0 : i32
    %2 = arith.cmpi ne, %1, %c0_i32_0 : i32
    scf.if %2 {
      %cst_67 = arith.constant 0.000000e+00 : f32
      %86 = vector.broadcast %cst_67 : f32 to vector<16x16xf32>
      %c0_68 = arith.constant 0 : index
      %c0_69 = arith.constant 0 : index
      %87 = vector.load %arg15[%c0_68, %c0_69] : memref<16x16xf32, #tpu.memory_space<vmem>>, vector<16x16xf32>
      tpu.vector_store %arg15[%c0_68, %c0_69], %86 {strides = array<i32>} : memref<16x16xf32, #tpu.memory_space<vmem>>, vector<16x16xf32>,
      %cst_70 = arith.constant 0.000000e+00 : f32
      %88 = vector.broadcast %cst_70 : f32 to vector<16x16xf32>
      %c0_71 = arith.constant 0 : index
      %c0_72 = arith.constant 0 : index
      %89 = vector.load %arg16[%c0_71, %c0_72] : memref<16x16xf32, #tpu.memory_space<vmem>>, vector<16x16xf32>
      tpu.vector_store %arg16[%c0_71, %c0_72], %88 {strides = array<i32>} : memref<16x16xf32, #tpu.memory_space<vmem>>, vector<16x16xf32>,
    } else {
    }
    %c0 = arith.constant 0 : index
    %c0_1 = arith.constant 0 : index
    %c0_2 = arith.constant 0 : index
    %3 = vector.load %arg7[%c0, %c0_1, %c0_2] : memref<3x16x32xbf16, #tpu.memory_space<vmem>>, vector<1x16x32xbf16>
    %4 = vector.shape_cast %3 : vector<1x16x32xbf16> to vector<16x32xbf16>
    %c1 = arith.constant 1 : index
    %c0_3 = arith.constant 0 : index
    %c0_4 = arith.constant 0 : index
    %5 = vector.load %arg7[%c1, %c0_3, %c0_4] : memref<3x16x32xbf16, #tpu.memory_space<vmem>>, vector<1x16x32xbf16>
    %6 = vector.shape_cast %5 : vector<1x16x32xbf16> to vector<16x32xbf16>
    %c0_5 = arith.constant 0 : index
    %c0_6 = arith.constant 0 : index
    %c0_7 = arith.constant 0 : index
    %7 = vector.load %arg8[%c0_5, %c0_6, %c0_7] : memref<3x16x16xbf16, #tpu.memory_space<vmem>>, vector<1x16x16xbf16>
    %8 = vector.shape_cast %7 : vector<1x16x16xbf16> to vector<16x16xbf16>
    %c1_8 = arith.constant 1 : index
    %c0_9 = arith.constant 0 : index
    %c0_10 = arith.constant 0 : index
    %9 = vector.load %arg8[%c1_8, %c0_9, %c0_10] : memref<3x16x16xbf16, #tpu.memory_space<vmem>>, vector<1x16x16xbf16>
    %10 = vector.shape_cast %9 : vector<1x16x16xbf16> to vector<16x16xbf16>
    %c0_11 = arith.constant 0 : index
    %c0_12 = arith.constant 0 : index
    %11 = vector.load %arg15[%c0_11, %c0_12] : memref<16x16xf32, #tpu.memory_space<vmem>>, vector<16x16xf32>
    %c0_13 = arith.constant 0 : index
    %c0_14 = arith.constant 0 : index
    %12 = vector.load %arg16[%c0_13, %c0_14] : memref<16x16xf32, #tpu.memory_space<vmem>>, vector<16x16xf32>
    %c0_15 = arith.constant 0 : index
    %c0_16 = arith.constant 0 : index
    %c0_17 = arith.constant 0 : index
    %c0_18 = arith.constant 0 : index
    %13 = vector.load %arg3[%c0_15, %c0_16, %c0_17, %c0_18] : memref<1x2x32x16xf32, #tpu.memory_space<vmem>>, vector<1x1x32x16xf32>
    %14 = vector.shape_cast %13 : vector<1x1x32x16xf32> to vector<32x16xf32>
    %c0_19 = arith.constant 0 : index
    %c0_20 = arith.constant 0 : index
    %c0_21 = arith.constant 0 : index
    %c0_22 = arith.constant 0 : index
    %15 = vector.load %arg4[%c0_19, %c0_20, %c0_21, %c0_22] : memref<1x2x32x16xf32, #tpu.memory_space<vmem>>, vector<1x1x32x16xf32>
    %16 = vector.shape_cast %15 : vector<1x1x32x16xf32> to vector<32x16xf32>
    %17 = arith.truncf %14 : vector<32x16xf32> to vector<32x16xbf16>
    %18 = arith.truncf %16 : vector<32x16xf32> to vector<32x16xbf16>
    %cst = arith.constant dense<0.000000e+00> : vector<16x16xf32>
    %19 = tpu.matmul %4, %17, %cst {dimension_numbers = #tpu.dot_dimension_numbers<[1], [0], [0], [1], [0, 0, 1, 1], [], []>} : vector<16x32xbf16>, vector<32x16xbf16>, vector<16x16xf32> -> vector<16x16xf32>
    %cst_23 = arith.constant dense<0.000000e+00> : vector<16x16xf32>
    %20 = tpu.matmul %6, %18, %cst_23 {dimension_numbers = #tpu.dot_dimension_numbers<[1], [0], [0], [1], [0, 0, 1, 1], [], []>} : vector<16x32xbf16>, vector<32x16xbf16>, vector<16x16xf32> -> vector<16x16xf32>
    %21 = arith.subf %19, %20 : vector<16x16xf32>
    %cst_24 = arith.constant dense<0.000000e+00> : vector<16x16xf32>
    %22 = tpu.matmul %4, %18, %cst_24 {dimension_numbers = #tpu.dot_dimension_numbers<[1], [0], [0], [1], [0, 0, 1, 1], [], []>} : vector<16x32xbf16>, vector<32x16xbf16>, vector<16x16xf32> -> vector<16x16xf32>
    %cst_25 = arith.constant dense<0.000000e+00> : vector<16x16xf32>
    %23 = tpu.matmul %6, %17, %cst_25 {dimension_numbers = #tpu.dot_dimension_numbers<[1], [0], [0], [1], [0, 0, 1, 1], [], []>} : vector<16x32xbf16>, vector<32x16xbf16>, vector<16x16xf32> -> vector<16x16xf32>
    %24 = arith.addf %22, %23 : vector<16x16xf32>
    %25 = arith.truncf %21 : vector<16x16xf32> to vector<16x16xbf16>
    %26 = arith.truncf %24 : vector<16x16xf32> to vector<16x16xbf16>
    %cst_26 = arith.constant dense<0.000000e+00> : vector<16x16xf32>
    %27 = tpu.matmul %25, %8, %cst_26 {dimension_numbers = #tpu.dot_dimension_numbers<[1], [0], [0], [1], [0, 0, 1, 1], [], []>} : vector<16x16xbf16>, vector<16x16xbf16>, vector<16x16xf32> -> vector<16x16xf32>
    %cst_27 = arith.constant dense<0.000000e+00> : vector<16x16xf32>
    %28 = tpu.matmul %26, %10, %cst_27 {dimension_numbers = #tpu.dot_dimension_numbers<[1], [0], [0], [1], [0, 0, 1, 1], [], []>} : vector<16x16xbf16>, vector<16x16xbf16>, vector<16x16xf32> -> vector<16x16xf32>
    %29 = arith.subf %27, %28 : vector<16x16xf32>
    %cst_28 = arith.constant dense<0.000000e+00> : vector<16x16xf32>
    %30 = tpu.matmul %26, %8, %cst_28 {dimension_numbers = #tpu.dot_dimension_numbers<[1], [0], [0], [1], [0, 0, 1, 1], [], []>} : vector<16x16xbf16>, vector<16x16xbf16>, vector<16x16xf32> -> vector<16x16xf32>
    %cst_29 = arith.constant dense<0.000000e+00> : vector<16x16xf32>
    %31 = tpu.matmul %25, %10, %cst_29 {dimension_numbers = #tpu.dot_dimension_numbers<[1], [0], [0], [1], [0, 0, 1, 1], [], []>} : vector<16x16xbf16>, vector<16x16xbf16>, vector<16x16xf32> -> vector<16x16xf32>
    %32 = arith.addf %30, %31 : vector<16x16xf32>
    %c0_30 = arith.constant 0 : index
    %c0_31 = arith.constant 0 : index
    %c0_32 = arith.constant 0 : index
    %c0_33 = arith.constant 0 : index
    %33 = vector.load %arg5[%c0_30, %c0_31, %c0_32, %c0_33] : memref<1x2x16x16xbf16, #tpu.memory_space<vmem>>, vector<1x1x16x16xbf16>
    %34 = vector.shape_cast %33 : vector<1x1x16x16xbf16> to vector<16x16xbf16>
    %35 = arith.extf %34 : vector<16x16xbf16> to vector<16x16xf32>
    %c0_34 = arith.constant 0 : index
    %c0_35 = arith.constant 0 : index
    %c0_36 = arith.constant 0 : index
    %c0_37 = arith.constant 0 : index
    %36 = vector.load %arg6[%c0_34, %c0_35, %c0_36, %c0_37] : memref<1x2x16x16xbf16, #tpu.memory_space<vmem>>, vector<1x1x16x16xbf16>
    %37 = vector.shape_cast %36 : vector<1x1x16x16xbf16> to vector<16x16xbf16>
    %38 = arith.extf %37 : vector<16x16xbf16> to vector<16x16xf32>
    %39 = arith.mulf %29, %35 : vector<16x16xf32>
    %40 = arith.addf %11, %39 : vector<16x16xf32>
    %41 = arith.mulf %32, %38 : vector<16x16xf32>
    %42 = arith.addf %40, %41 : vector<16x16xf32>
    %43 = arith.mulf %32, %35 : vector<16x16xf32>
    %44 = arith.addf %12, %43 : vector<16x16xf32>
    %45 = arith.mulf %29, %38 : vector<16x16xf32>
    %46 = arith.subf %44, %45 : vector<16x16xf32>
    %c0_38 = arith.constant 0 : index
    %c1_39 = arith.constant 1 : index
    %c0_40 = arith.constant 0 : index
    %c0_41 = arith.constant 0 : index
    %47 = vector.load %arg3[%c0_38, %c1_39, %c0_40, %c0_41] : memref<1x2x32x16xf32, #tpu.memory_space<vmem>>, vector<1x1x32x16xf32>
    %48 = vector.shape_cast %47 : vector<1x1x32x16xf32> to vector<32x16xf32>
    %c0_42 = arith.constant 0 : index
    %c1_43 = arith.constant 1 : index
    %c0_44 = arith.constant 0 : index
    %c0_45 = arith.constant 0 : index
    %49 = vector.load %arg4[%c0_42, %c1_43, %c0_44, %c0_45] : memref<1x2x32x16xf32, #tpu.memory_space<vmem>>, vector<1x1x32x16xf32>
    %50 = vector.shape_cast %49 : vector<1x1x32x16xf32> to vector<32x16xf32>
    %51 = arith.truncf %48 : vector<32x16xf32> to vector<32x16xbf16>
    %52 = arith.truncf %50 : vector<32x16xf32> to vector<32x16xbf16>
    %cst_46 = arith.constant dense<0.000000e+00> : vector<16x16xf32>
    %53 = tpu.matmul %4, %51, %cst_46 {dimension_numbers = #tpu.dot_dimension_numbers<[1], [0], [0], [1], [0, 0, 1, 1], [], []>} : vector<16x32xbf16>, vector<32x16xbf16>, vector<16x16xf32> -> vector<16x16xf32>
    %cst_47 = arith.constant dense<0.000000e+00> : vector<16x16xf32>
    %54 = tpu.matmul %6, %52, %cst_47 {dimension_numbers = #tpu.dot_dimension_numbers<[1], [0], [0], [1], [0, 0, 1, 1], [], []>} : vector<16x32xbf16>, vector<32x16xbf16>, vector<16x16xf32> -> vector<16x16xf32>
    %55 = arith.subf %53, %54 : vector<16x16xf32>
    %cst_48 = arith.constant dense<0.000000e+00> : vector<16x16xf32>
    %56 = tpu.matmul %4, %52, %cst_48 {dimension_numbers = #tpu.dot_dimension_numbers<[1], [0], [0], [1], [0, 0, 1, 1], [], []>} : vector<16x32xbf16>, vector<32x16xbf16>, vector<16x16xf32> -> vector<16x16xf32>
    %cst_49 = arith.constant dense<0.000000e+00> : vector<16x16xf32>
    %57 = tpu.matmul %6, %51, %cst_49 {dimension_numbers = #tpu.dot_dimension_numbers<[1], [0], [0], [1], [0, 0, 1, 1], [], []>} : vector<16x32xbf16>, vector<32x16xbf16>, vector<16x16xf32> -> vector<16x16xf32>
    %58 = arith.addf %56, %57 : vector<16x16xf32>
    %59 = arith.truncf %55 : vector<16x16xf32> to vector<16x16xbf16>
    %60 = arith.truncf %58 : vector<16x16xf32> to vector<16x16xbf16>
    %cst_50 = arith.constant dense<0.000000e+00> : vector<16x16xf32>
    %61 = tpu.matmul %59, %8, %cst_50 {dimension_numbers = #tpu.dot_dimension_numbers<[1], [0], [0], [1], [0, 0, 1, 1], [], []>} : vector<16x16xbf16>, vector<16x16xbf16>, vector<16x16xf32> -> vector<16x16xf32>
    %cst_51 = arith.constant dense<0.000000e+00> : vector<16x16xf32>
    %62 = tpu.matmul %60, %10, %cst_51 {dimension_numbers = #tpu.dot_dimension_numbers<[1], [0], [0], [1], [0, 0, 1, 1], [], []>} : vector<16x16xbf16>, vector<16x16xbf16>, vector<16x16xf32> -> vector<16x16xf32>
    %63 = arith.subf %61, %62 : vector<16x16xf32>
    %cst_52 = arith.constant dense<0.000000e+00> : vector<16x16xf32>
    %64 = tpu.matmul %60, %8, %cst_52 {dimension_numbers = #tpu.dot_dimension_numbers<[1], [0], [0], [1], [0, 0, 1, 1], [], []>} : vector<16x16xbf16>, vector<16x16xbf16>, vector<16x16xf32> -> vector<16x16xf32>
    %cst_53 = arith.constant dense<0.000000e+00> : vector<16x16xf32>
    %65 = tpu.matmul %59, %10, %cst_53 {dimension_numbers = #tpu.dot_dimension_numbers<[1], [0], [0], [1], [0, 0, 1, 1], [], []>} : vector<16x16xbf16>, vector<16x16xbf16>, vector<16x16xf32> -> vector<16x16xf32>
    %66 = arith.addf %64, %65 : vector<16x16xf32>
    %c0_54 = arith.constant 0 : index
    %c1_55 = arith.constant 1 : index
    %c0_56 = arith.constant 0 : index
    %c0_57 = arith.constant 0 : index
    %67 = vector.load %arg5[%c0_54, %c1_55, %c0_56, %c0_57] : memref<1x2x16x16xbf16, #tpu.memory_space<vmem>>, vector<1x1x16x16xbf16>
    %68 = vector.shape_cast %67 : vector<1x1x16x16xbf16> to vector<16x16xbf16>
    %69 = arith.extf %68 : vector<16x16xbf16> to vector<16x16xf32>
    %c0_58 = arith.constant 0 : index
    %c1_59 = arith.constant 1 : index
    %c0_60 = arith.constant 0 : index
    %c0_61 = arith.constant 0 : index
    %70 = vector.load %arg6[%c0_58, %c1_59, %c0_60, %c0_61] : memref<1x2x16x16xbf16, #tpu.memory_space<vmem>>, vector<1x1x16x16xbf16>
    %71 = vector.shape_cast %70 : vector<1x1x16x16xbf16> to vector<16x16xbf16>
    %72 = arith.extf %71 : vector<16x16xbf16> to vector<16x16xf32>
    %73 = arith.mulf %63, %69 : vector<16x16xf32>
    %74 = arith.addf %42, %73 : vector<16x16xf32>
    %75 = arith.mulf %66, %72 : vector<16x16xf32>
    %76 = arith.addf %74, %75 : vector<16x16xf32>
    %77 = arith.mulf %66, %69 : vector<16x16xf32>
    %78 = arith.addf %46, %77 : vector<16x16xf32>
    %79 = arith.mulf %63, %72 : vector<16x16xf32>
    %80 = arith.subf %78, %79 : vector<16x16xf32>
    %c0_62 = arith.constant 0 : index
    %c0_63 = arith.constant 0 : index
    %81 = vector.load %arg15[%c0_62, %c0_63] : memref<16x16xf32, #tpu.memory_space<vmem>>, vector<16x16xf32>
    tpu.vector_store %arg15[%c0_62, %c0_63], %76 {strides = array<i32>} : memref<16x16xf32, #tpu.memory_space<vmem>>, vector<16x16xf32>,
    %c0_64 = arith.constant 0 : index
    %c0_65 = arith.constant 0 : index
    %82 = vector.load %arg16[%c0_64, %c0_65] : memref<16x16xf32, #tpu.memory_space<vmem>>, vector<16x16xf32>
    tpu.vector_store %arg16[%c0_64, %c0_65], %80 {strides = array<i32>} : memref<16x16xf32, #tpu.memory_space<vmem>>, vector<16x16xf32>,
    %c1_i32 = arith.constant 1 : i32
    %83 = arith.cmpi eq, %arg2, %c1_i32 : i32
    %84 = arith.extui %83 : i1 to i32
    %c0_i32_66 = arith.constant 0 : i32
    %85 = arith.cmpi ne, %84, %c0_i32_66 : i32
    scf.if %85 {
      %c0_67 = arith.constant 0 : index
      %c0_68 = arith.constant 0 : index
      %86 = vector.load %arg15[%c0_67, %c0_68] : memref<16x16xf32, #tpu.memory_space<vmem>>, vector<16x16xf32>
      %c0_69 = arith.constant 0 : index
      %c0_70 = arith.constant 0 : index
      %87 = vector.load %arg16[%c0_69, %c0_70] : memref<16x16xf32, #tpu.memory_space<vmem>>, vector<16x16xf32>
      %cst_71 = arith.constant 0.000000e+00 : f32
      %88 = vector.broadcast %cst_71 : f32 to vector<16x16xf32>
      %cst_72 = arith.constant 0.000000e+00 : f32
      %89 = vector.broadcast %cst_72 : f32 to vector<16x16xf32>
      %c0_73 = arith.constant 0 : index
      %c0_74 = arith.constant 0 : index
      %90 = memref.load %arg9[%c0_73, %c0_74] : memref<8x2xf32, #tpu.memory_space<smem>>
      %91 = vector.broadcast %90 : f32 to vector<16x16xf32>
      %92 = arith.mulf %86, %91 : vector<16x16xf32>
      %c0_75 = arith.constant 0 : index
      %c1_76 = arith.constant 1 : index
      %93 = memref.load %arg9[%c0_75, %c1_76] : memref<8x2xf32, #tpu.memory_space<smem>>
      %94 = vector.broadcast %93 : f32 to vector<16x16xf32>
      %95 = arith.mulf %87, %94 : vector<16x16xf32>
      %96 = arith.addf %92, %95 : vector<16x16xf32>
      %c0_77 = arith.constant 0 : index
      %c0_78 = arith.constant 0 : index
      %97 = memref.load %arg10[%c0_77, %c0_78] : memref<1x8xf32, #tpu.memory_space<smem>>
      %98 = vector.broadcast %97 : f32 to vector<16x16xf32>
      %99 = arith.addf %96, %98 : vector<16x16xf32>
      %cst_79 = arith.constant 0.000000e+00 : f32
      %100 = vector.broadcast %cst_79 : f32 to vector<16x16xf32>
      %101 = arith.maximumf %99, %100 : vector<16x16xf32>
      %c0_80 = arith.constant 0 : index
      %c0_81 = arith.constant 0 : index
      %102 = memref.load %arg11[%c0_80, %c0_81] : memref<2x8xf32, #tpu.memory_space<smem>>
      %103 = vector.broadcast %102 : f32 to vector<16x16xf32>
      %104 = arith.mulf %101, %103 : vector<16x16xf32>
      %105 = arith.addf %88, %104 : vector<16x16xf32>
      %c1_82 = arith.constant 1 : index
      %c0_83 = arith.constant 0 : index
      %106 = memref.load %arg11[%c1_82, %c0_83] : memref<2x8xf32, #tpu.memory_space<smem>>
      %107 = vector.broadcast %106 : f32 to vector<16x16xf32>
      %108 = arith.mulf %101, %107 : vector<16x16xf32>
      %109 = arith.addf %89, %108 : vector<16x16xf32>
      %c1_84 = arith.constant 1 : index
      %c0_85 = arith.constant 0 : index
      %110 = memref.load %arg9[%c1_84, %c0_85] : memref<8x2xf32, #tpu.memory_space<smem>>
      %111 = vector.broadcast %110 : f32 to vector<16x16xf32>
      %112 = arith.mulf %86, %111 : vector<16x16xf32>
      %c1_86 = arith.constant 1 : index
      %c1_87 = arith.constant 1 : index
      %113 = memref.load %arg9[%c1_86, %c1_87] : memref<8x2xf32, #tpu.memory_space<smem>>
      %114 = vector.broadcast %113 : f32 to vector<16x16xf32>
      %115 = arith.mulf %87, %114 : vector<16x16xf32>
      %116 = arith.addf %112, %115 : vector<16x16xf32>
      %c0_88 = arith.constant 0 : index
      %c1_89 = arith.constant 1 : index
      %117 = memref.load %arg10[%c0_88, %c1_89] : memref<1x8xf32, #tpu.memory_space<smem>>
      %118 = vector.broadcast %117 : f32 to vector<16x16xf32>
      %119 = arith.addf %116, %118 : vector<16x16xf32>
      %cst_90 = arith.constant 0.000000e+00 : f32
      %120 = vector.broadcast %cst_90 : f32 to vector<16x16xf32>
      %121 = arith.maximumf %119, %120 : vector<16x16xf32>
      %c0_91 = arith.constant 0 : index
      %c1_92 = arith.constant 1 : index
      %122 = memref.load %arg11[%c0_91, %c1_92] : memref<2x8xf32, #tpu.memory_space<smem>>
      %123 = vector.broadcast %122 : f32 to vector<16x16xf32>
      %124 = arith.mulf %121, %123 : vector<16x16xf32>
      %125 = arith.addf %105, %124 : vector<16x16xf32>
      %c1_93 = arith.constant 1 : index
      %c1_94 = arith.constant 1 : index
      %126 = memref.load %arg11[%c1_93, %c1_94] : memref<2x8xf32, #tpu.memory_space<smem>>
      %127 = vector.broadcast %126 : f32 to vector<16x16xf32>
      %128 = arith.mulf %121, %127 : vector<16x16xf32>
      %129 = arith.addf %109, %128 : vector<16x16xf32>
      %c2 = arith.constant 2 : index
      %c0_95 = arith.constant 0 : index
      %130 = memref.load %arg9[%c2, %c0_95] : memref<8x2xf32, #tpu.memory_space<smem>>
      %131 = vector.broadcast %130 : f32 to vector<16x16xf32>
      %132 = arith.mulf %86, %131 : vector<16x16xf32>
      %c2_96 = arith.constant 2 : index
      %c1_97 = arith.constant 1 : index
      %133 = memref.load %arg9[%c2_96, %c1_97] : memref<8x2xf32, #tpu.memory_space<smem>>
      %134 = vector.broadcast %133 : f32 to vector<16x16xf32>
      %135 = arith.mulf %87, %134 : vector<16x16xf32>
      %136 = arith.addf %132, %135 : vector<16x16xf32>
      %c0_98 = arith.constant 0 : index
      %c2_99 = arith.constant 2 : index
      %137 = memref.load %arg10[%c0_98, %c2_99] : memref<1x8xf32, #tpu.memory_space<smem>>
      %138 = vector.broadcast %137 : f32 to vector<16x16xf32>
      %139 = arith.addf %136, %138 : vector<16x16xf32>
      %cst_100 = arith.constant 0.000000e+00 : f32
      %140 = vector.broadcast %cst_100 : f32 to vector<16x16xf32>
      %141 = arith.maximumf %139, %140 : vector<16x16xf32>
      %c0_101 = arith.constant 0 : index
      %c2_102 = arith.constant 2 : index
      %142 = memref.load %arg11[%c0_101, %c2_102] : memref<2x8xf32, #tpu.memory_space<smem>>
      %143 = vector.broadcast %142 : f32 to vector<16x16xf32>
      %144 = arith.mulf %141, %143 : vector<16x16xf32>
      %145 = arith.addf %125, %144 : vector<16x16xf32>
      %c1_103 = arith.constant 1 : index
      %c2_104 = arith.constant 2 : index
      %146 = memref.load %arg11[%c1_103, %c2_104] : memref<2x8xf32, #tpu.memory_space<smem>>
      %147 = vector.broadcast %146 : f32 to vector<16x16xf32>
      %148 = arith.mulf %141, %147 : vector<16x16xf32>
      %149 = arith.addf %129, %148 : vector<16x16xf32>
      %c3 = arith.constant 3 : index
      %c0_105 = arith.constant 0 : index
      %150 = memref.load %arg9[%c3, %c0_105] : memref<8x2xf32, #tpu.memory_space<smem>>
      %151 = vector.broadcast %150 : f32 to vector<16x16xf32>
      %152 = arith.mulf %86, %151 : vector<16x16xf32>
      %c3_106 = arith.constant 3 : index
      %c1_107 = arith.constant 1 : index
      %153 = memref.load %arg9[%c3_106, %c1_107] : memref<8x2xf32, #tpu.memory_space<smem>>
      %154 = vector.broadcast %153 : f32 to vector<16x16xf32>
      %155 = arith.mulf %87, %154 : vector<16x16xf32>
      %156 = arith.addf %152, %155 : vector<16x16xf32>
      %c0_108 = arith.constant 0 : index
      %c3_109 = arith.constant 3 : index
      %157 = memref.load %arg10[%c0_108, %c3_109] : memref<1x8xf32, #tpu.memory_space<smem>>
      %158 = vector.broadcast %157 : f32 to vector<16x16xf32>
      %159 = arith.addf %156, %158 : vector<16x16xf32>
      %cst_110 = arith.constant 0.000000e+00 : f32
      %160 = vector.broadcast %cst_110 : f32 to vector<16x16xf32>
      %161 = arith.maximumf %159, %160 : vector<16x16xf32>
      %c0_111 = arith.constant 0 : index
      %c3_112 = arith.constant 3 : index
      %162 = memref.load %arg11[%c0_111, %c3_112] : memref<2x8xf32, #tpu.memory_space<smem>>
      %163 = vector.broadcast %162 : f32 to vector<16x16xf32>
      %164 = arith.mulf %161, %163 : vector<16x16xf32>
      %165 = arith.addf %145, %164 : vector<16x16xf32>
      %c1_113 = arith.constant 1 : index
      %c3_114 = arith.constant 3 : index
      %166 = memref.load %arg11[%c1_113, %c3_114] : memref<2x8xf32, #tpu.memory_space<smem>>
      %167 = vector.broadcast %166 : f32 to vector<16x16xf32>
      %168 = arith.mulf %161, %167 : vector<16x16xf32>
      %169 = arith.addf %149, %168 : vector<16x16xf32>
      %c4 = arith.constant 4 : index
      %c0_115 = arith.constant 0 : index
      %170 = memref.load %arg9[%c4, %c0_115] : memref<8x2xf32, #tpu.memory_space<smem>>
      %171 = vector.broadcast %170 : f32 to vector<16x16xf32>
      %172 = arith.mulf %86, %171 : vector<16x16xf32>
      %c4_116 = arith.constant 4 : index
      %c1_117 = arith.constant 1 : index
      %173 = memref.load %arg9[%c4_116, %c1_117] : memref<8x2xf32, #tpu.memory_space<smem>>
      %174 = vector.broadcast %173 : f32 to vector<16x16xf32>
      %175 = arith.mulf %87, %174 : vector<16x16xf32>
      %176 = arith.addf %172, %175 : vector<16x16xf32>
      %c0_118 = arith.constant 0 : index
      %c4_119 = arith.constant 4 : index
      %177 = memref.load %arg10[%c0_118, %c4_119] : memref<1x8xf32, #tpu.memory_space<smem>>
      %178 = vector.broadcast %177 : f32 to vector<16x16xf32>
      %179 = arith.addf %176, %178 : vector<16x16xf32>
      %cst_120 = arith.constant 0.000000e+00 : f32
      %180 = vector.broadcast %cst_120 : f32 to vector<16x16xf32>
      %181 = arith.maximumf %179, %180 : vector<16x16xf32>
      %c0_121 = arith.constant 0 : index
      %c4_122 = arith.constant 4 : index
      %182 = memref.load %arg11[%c0_121, %c4_122] : memref<2x8xf32, #tpu.memory_space<smem>>
      %183 = vector.broadcast %182 : f32 to vector<16x16xf32>
      %184 = arith.mulf %181, %183 : vector<16x16xf32>
      %185 = arith.addf %165, %184 : vector<16x16xf32>
      %c1_123 = arith.constant 1 : index
      %c4_124 = arith.constant 4 : index
      %186 = memref.load %arg11[%c1_123, %c4_124] : memref<2x8xf32, #tpu.memory_space<smem>>
      %187 = vector.broadcast %186 : f32 to vector<16x16xf32>
      %188 = arith.mulf %181, %187 : vector<16x16xf32>
      %189 = arith.addf %169, %188 : vector<16x16xf32>
      %c5 = arith.constant 5 : index
      %c0_125 = arith.constant 0 : index
      %190 = memref.load %arg9[%c5, %c0_125] : memref<8x2xf32, #tpu.memory_space<smem>>
      %191 = vector.broadcast %190 : f32 to vector<16x16xf32>
      %192 = arith.mulf %86, %191 : vector<16x16xf32>
      %c5_126 = arith.constant 5 : index
      %c1_127 = arith.constant 1 : index
      %193 = memref.load %arg9[%c5_126, %c1_127] : memref<8x2xf32, #tpu.memory_space<smem>>
      %194 = vector.broadcast %193 : f32 to vector<16x16xf32>
      %195 = arith.mulf %87, %194 : vector<16x16xf32>
      %196 = arith.addf %192, %195 : vector<16x16xf32>
      %c0_128 = arith.constant 0 : index
      %c5_129 = arith.constant 5 : index
      %197 = memref.load %arg10[%c0_128, %c5_129] : memref<1x8xf32, #tpu.memory_space<smem>>
      %198 = vector.broadcast %197 : f32 to vector<16x16xf32>
      %199 = arith.addf %196, %198 : vector<16x16xf32>
      %cst_130 = arith.constant 0.000000e+00 : f32
      %200 = vector.broadcast %cst_130 : f32 to vector<16x16xf32>
      %201 = arith.maximumf %199, %200 : vector<16x16xf32>
      %c0_131 = arith.constant 0 : index
      %c5_132 = arith.constant 5 : index
      %202 = memref.load %arg11[%c0_131, %c5_132] : memref<2x8xf32, #tpu.memory_space<smem>>
      %203 = vector.broadcast %202 : f32 to vector<16x16xf32>
      %204 = arith.mulf %201, %203 : vector<16x16xf32>
      %205 = arith.addf %185, %204 : vector<16x16xf32>
      %c1_133 = arith.constant 1 : index
      %c5_134 = arith.constant 5 : index
      %206 = memref.load %arg11[%c1_133, %c5_134] : memref<2x8xf32, #tpu.memory_space<smem>>
      %207 = vector.broadcast %206 : f32 to vector<16x16xf32>
      %208 = arith.mulf %201, %207 : vector<16x16xf32>
      %209 = arith.addf %189, %208 : vector<16x16xf32>
      %c6 = arith.constant 6 : index
      %c0_135 = arith.constant 0 : index
      %210 = memref.load %arg9[%c6, %c0_135] : memref<8x2xf32, #tpu.memory_space<smem>>
      %211 = vector.broadcast %210 : f32 to vector<16x16xf32>
      %212 = arith.mulf %86, %211 : vector<16x16xf32>
      %c6_136 = arith.constant 6 : index
      %c1_137 = arith.constant 1 : index
      %213 = memref.load %arg9[%c6_136, %c1_137] : memref<8x2xf32, #tpu.memory_space<smem>>
      %214 = vector.broadcast %213 : f32 to vector<16x16xf32>
      %215 = arith.mulf %87, %214 : vector<16x16xf32>
      %216 = arith.addf %212, %215 : vector<16x16xf32>
      %c0_138 = arith.constant 0 : index
      %c6_139 = arith.constant 6 : index
      %217 = memref.load %arg10[%c0_138, %c6_139] : memref<1x8xf32, #tpu.memory_space<smem>>
      %218 = vector.broadcast %217 : f32 to vector<16x16xf32>
      %219 = arith.addf %216, %218 : vector<16x16xf32>
      %cst_140 = arith.constant 0.000000e+00 : f32
      %220 = vector.broadcast %cst_140 : f32 to vector<16x16xf32>
      %221 = arith.maximumf %219, %220 : vector<16x16xf32>
      %c0_141 = arith.constant 0 : index
      %c6_142 = arith.constant 6 : index
      %222 = memref.load %arg11[%c0_141, %c6_142] : memref<2x8xf32, #tpu.memory_space<smem>>
      %223 = vector.broadcast %222 : f32 to vector<16x16xf32>
      %224 = arith.mulf %221, %223 : vector<16x16xf32>
      %225 = arith.addf %205, %224 : vector<16x16xf32>
      %c1_143 = arith.constant 1 : index
      %c6_144 = arith.constant 6 : index
      %226 = memref.load %arg11[%c1_143, %c6_144] : memref<2x8xf32, #tpu.memory_space<smem>>
      %227 = vector.broadcast %226 : f32 to vector<16x16xf32>
      %228 = arith.mulf %221, %227 : vector<16x16xf32>
      %229 = arith.addf %209, %228 : vector<16x16xf32>
      %c7 = arith.constant 7 : index
      %c0_145 = arith.constant 0 : index
      %230 = memref.load %arg9[%c7, %c0_145] : memref<8x2xf32, #tpu.memory_space<smem>>
      %231 = vector.broadcast %230 : f32 to vector<16x16xf32>
      %232 = arith.mulf %86, %231 : vector<16x16xf32>
      %c7_146 = arith.constant 7 : index
      %c1_147 = arith.constant 1 : index
      %233 = memref.load %arg9[%c7_146, %c1_147] : memref<8x2xf32, #tpu.memory_space<smem>>
      %234 = vector.broadcast %233 : f32 to vector<16x16xf32>
      %235 = arith.mulf %87, %234 : vector<16x16xf32>
      %236 = arith.addf %232, %235 : vector<16x16xf32>
      %c0_148 = arith.constant 0 : index
      %c7_149 = arith.constant 7 : index
      %237 = memref.load %arg10[%c0_148, %c7_149] : memref<1x8xf32, #tpu.memory_space<smem>>
      %238 = vector.broadcast %237 : f32 to vector<16x16xf32>
      %239 = arith.addf %236, %238 : vector<16x16xf32>
      %cst_150 = arith.constant 0.000000e+00 : f32
      %240 = vector.broadcast %cst_150 : f32 to vector<16x16xf32>
      %241 = arith.maximumf %239, %240 : vector<16x16xf32>
      %c0_151 = arith.constant 0 : index
      %c7_152 = arith.constant 7 : index
      %242 = memref.load %arg11[%c0_151, %c7_152] : memref<2x8xf32, #tpu.memory_space<smem>>
      %243 = vector.broadcast %242 : f32 to vector<16x16xf32>
      %244 = arith.mulf %241, %243 : vector<16x16xf32>
      %245 = arith.addf %225, %244 : vector<16x16xf32>
      %c1_153 = arith.constant 1 : index
      %c7_154 = arith.constant 7 : index
      %246 = memref.load %arg11[%c1_153, %c7_154] : memref<2x8xf32, #tpu.memory_space<smem>>
      %247 = vector.broadcast %246 : f32 to vector<16x16xf32>
      %248 = arith.mulf %241, %247 : vector<16x16xf32>
      %249 = arith.addf %229, %248 : vector<16x16xf32>
      %c0_155 = arith.constant 0 : index
      %c0_156 = arith.constant 0 : index
      %250 = memref.load %arg12[%c0_155, %c0_156] : memref<1x2xf32, #tpu.memory_space<smem>>
      %251 = vector.broadcast %250 : f32 to vector<16x16xf32>
      %252 = arith.addf %245, %251 : vector<16x16xf32>
      %c0_157 = arith.constant 0 : index
      %c0_158 = arith.constant 0 : index
      %c0_159 = arith.constant 0 : index
      %253 = vector.load %arg13[%c0_157, %c0_158, %c0_159] : memref<1x16x16xf32, #tpu.memory_space<vmem>>, vector<1x16x16xf32>
      %254 = vector.shape_cast %253 : vector<1x16x16xf32> to vector<16x16xf32>
      %255 = vector.shape_cast %252 : vector<16x16xf32> to vector<1x16x16xf32>
      tpu.vector_store %arg13[%c0_157, %c0_158, %c0_159], %255 {strides = array<i32>} : memref<1x16x16xf32, #tpu.memory_space<vmem>>, vector<1x16x16xf32>,
      %c0_160 = arith.constant 0 : index
      %c1_161 = arith.constant 1 : index
      %256 = memref.load %arg12[%c0_160, %c1_161] : memref<1x2xf32, #tpu.memory_space<smem>>
      %257 = vector.broadcast %256 : f32 to vector<16x16xf32>
      %258 = arith.addf %249, %257 : vector<16x16xf32>
      %c0_162 = arith.constant 0 : index
      %c0_163 = arith.constant 0 : index
      %c0_164 = arith.constant 0 : index
      %259 = vector.load %arg14[%c0_162, %c0_163, %c0_164] : memref<1x16x16xf32, #tpu.memory_space<vmem>>, vector<1x16x16xf32>
      %260 = vector.shape_cast %259 : vector<1x16x16xf32> to vector<16x16xf32>
      %261 = vector.shape_cast %258 : vector<16x16xf32> to vector<1x16x16xf32>
      tpu.vector_store %arg14[%c0_162, %c0_163, %c0_164], %261 {strides = array<i32>} : memref<1x16x16xf32, #tpu.memory_space<vmem>>, vector<1x16x16xf32>,
    } else {
    }
    return
  }
  func.func @transform_0(%arg0: i32, %arg1: i32, %arg2: i32) -> (i32, i32, i32, i32) {
    %c0_i32 = arith.constant 0 : i32
    %c0_i32_0 = arith.constant 0 : i32
    %c0_i32_1 = arith.constant 0 : i32
    return %arg0, %arg2, %c0_i32, %c0_i32_0 : i32, i32, i32, i32
  }
  func.func @transform_1(%arg0: i32, %arg1: i32, %arg2: i32) -> (i32, i32, i32, i32) {
    %c0_i32 = arith.constant 0 : i32
    %c0_i32_0 = arith.constant 0 : i32
    %c0_i32_1 = arith.constant 0 : i32
    return %arg0, %arg2, %c0_i32, %c0_i32_0 : i32, i32, i32, i32
  }
  func.func @transform_2(%arg0: i32, %arg1: i32, %arg2: i32) -> (i32, i32, i32, i32) {
    %c0_i32 = arith.constant 0 : i32
    %c0_i32_0 = arith.constant 0 : i32
    return %arg0, %arg2, %arg1, %c0_i32 : i32, i32, i32, i32
  }
  func.func @transform_3(%arg0: i32, %arg1: i32, %arg2: i32) -> (i32, i32, i32, i32) {
    %c0_i32 = arith.constant 0 : i32
    %c0_i32_0 = arith.constant 0 : i32
    return %arg0, %arg2, %arg1, %c0_i32 : i32, i32, i32, i32
  }
  func.func @transform_4(%arg0: i32, %arg1: i32, %arg2: i32) -> (i32, i32, i32) {
    %c0_i32 = arith.constant 0 : i32
    %c0_i32_0 = arith.constant 0 : i32
    %c0_i32_1 = arith.constant 0 : i32
    return %c0_i32, %arg1, %c0_i32_0 : i32, i32, i32
  }
  func.func @transform_5(%arg0: i32, %arg1: i32, %arg2: i32) -> (i32, i32, i32) {
    %c0_i32 = arith.constant 0 : i32
    %c0_i32_0 = arith.constant 0 : i32
    %c0_i32_1 = arith.constant 0 : i32
    %c0_i32_2 = arith.constant 0 : i32
    return %c0_i32, %c0_i32_0, %c0_i32_1 : i32, i32, i32
  }
  func.func @transform_6(%arg0: i32, %arg1: i32, %arg2: i32) -> (i32, i32) {
    %c0_i32 = arith.constant 0 : i32
    %c0_i32_0 = arith.constant 0 : i32
    %c0_i32_1 = arith.constant 0 : i32
    return %c0_i32, %c0_i32_0 : i32, i32
  }
  func.func @transform_7(%arg0: i32, %arg1: i32, %arg2: i32) -> (i32, i32) {
    %c0_i32 = arith.constant 0 : i32
    %c0_i32_0 = arith.constant 0 : i32
    %c0_i32_1 = arith.constant 0 : i32
    return %c0_i32, %c0_i32_0 : i32, i32
  }
  func.func @transform_8(%arg0: i32, %arg1: i32, %arg2: i32) -> (i32, i32) {
    %c0_i32 = arith.constant 0 : i32
    %c0_i32_0 = arith.constant 0 : i32
    %c0_i32_1 = arith.constant 0 : i32
    return %c0_i32, %c0_i32_0 : i32, i32
  }
  func.func @transform_9(%arg0: i32, %arg1: i32, %arg2: i32) -> (i32, i32) {
    %c0_i32 = arith.constant 0 : i32
    %c0_i32_0 = arith.constant 0 : i32
    %c0_i32_1 = arith.constant 0 : i32
    return %c0_i32, %c0_i32_0 : i32, i32
  }
  func.func @transform_10(%arg0: i32, %arg1: i32, %arg2: i32) -> (i32, i32, i32) {
    %c0_i32 = arith.constant 0 : i32
    %c0_i32_0 = arith.constant 0 : i32
    return %arg0, %arg1, %c0_i32 : i32, i32, i32
  }
  func.func @transform_11(%arg0: i32, %arg1: i32, %arg2: i32) -> (i32, i32, i32) {
    %c0_i32 = arith.constant 0 : i32
    %c0_i32_0 = arith.constant 0 : i32
    return %arg0, %arg1, %c0_i32 : i32, i32, i32
  }
}

module attributes {stable_mosaic.version = 11 : i64} {
  func.func @_sens_expand_dc_kernel(%arg0: i32, %arg1: i32, %arg2: memref<1x32x16xf32, #tpu.memory_space<vmem>>, %arg3: memref<1x32x16xf32, #tpu.memory_space<vmem>>, %arg4: memref<1x2x32x16xf32, #tpu.memory_space<vmem>>, %arg5: memref<1x2x32x16xf32, #tpu.memory_space<vmem>>, %arg6: memref<1x2x32x16xf32, #tpu.memory_space<vmem>>, %arg7: memref<1x2x32x16xf32, #tpu.memory_space<vmem>>, %arg8: memref<1x2x32x16xbf16, #tpu.memory_space<vmem>>, %arg9: memref<1x2x32x16xbf16, #tpu.memory_space<vmem>>, %arg10: memref<1x16xf32, #tpu.memory_space<vmem>>, %arg11: memref<3x32x32xbf16, #tpu.memory_space<vmem>>, %arg12: memref<3x16x16xbf16, #tpu.memory_space<vmem>>, %arg13: memref<1x1xf32, #tpu.memory_space<smem>>, %arg14: memref<1x2x32x16xf32, #tpu.memory_space<vmem>>, %arg15: memref<1x2x32x16xf32, #tpu.memory_space<vmem>>) attributes {dimension_semantics = [#tpu.dimension_semantics<parallel>, #tpu.dimension_semantics<parallel>], iteration_bounds = array<i64: 2, 2>, scalar_prefetch = 0 : i64, scratch_operands = 0 : i64, tpu.core_type = #tpu.core_type<tc>, window_params = [{pipeline_mode = #tpu.pipeline_mode<synchronous>, transform_indices = @transform_0, window_bounds = array<i64: 1, 32, 16>}, {pipeline_mode = #tpu.pipeline_mode<synchronous>, transform_indices = @transform_1, window_bounds = array<i64: 1, 32, 16>}, {transform_indices = @transform_2, window_bounds = array<i64: 1, 2, 32, 16>}, {transform_indices = @transform_3, window_bounds = array<i64: 1, 2, 32, 16>}, {transform_indices = @transform_4, window_bounds = array<i64: 1, 2, 32, 16>}, {transform_indices = @transform_5, window_bounds = array<i64: 1, 2, 32, 16>}, {transform_indices = @transform_6, window_bounds = array<i64: 1, 2, 32, 16>}, {transform_indices = @transform_7, window_bounds = array<i64: 1, 2, 32, 16>}, {pipeline_mode = #tpu.pipeline_mode<synchronous>, transform_indices = @transform_8, window_bounds = array<i64: 1, 16>}, {pipeline_mode = #tpu.pipeline_mode<synchronous>, transform_indices = @transform_9, window_bounds = array<i64: 3, 32, 32>}, {pipeline_mode = #tpu.pipeline_mode<synchronous>, transform_indices = @transform_10, window_bounds = array<i64: 3, 16, 16>}, {transform_indices = @transform_11, window_bounds = array<i64: 1, 1>}, {transform_indices = @transform_12, window_bounds = array<i64: 1, 2, 32, 16>}, {transform_indices = @transform_13, window_bounds = array<i64: 1, 2, 32, 16>}]} {
    %c0 = arith.constant 0 : index
    %c0_0 = arith.constant 0 : index
    %c0_1 = arith.constant 0 : index
    %0 = vector.load %arg11[%c0, %c0_0, %c0_1] : memref<3x32x32xbf16, #tpu.memory_space<vmem>>, vector<1x32x32xbf16>
    %1 = vector.shape_cast %0 : vector<1x32x32xbf16> to vector<32x32xbf16>
    %c1 = arith.constant 1 : index
    %c0_2 = arith.constant 0 : index
    %c0_3 = arith.constant 0 : index
    %2 = vector.load %arg11[%c1, %c0_2, %c0_3] : memref<3x32x32xbf16, #tpu.memory_space<vmem>>, vector<1x32x32xbf16>
    %3 = vector.shape_cast %2 : vector<1x32x32xbf16> to vector<32x32xbf16>
    %c0_4 = arith.constant 0 : index
    %c0_5 = arith.constant 0 : index
    %c0_6 = arith.constant 0 : index
    %4 = vector.load %arg12[%c0_4, %c0_5, %c0_6] : memref<3x16x16xbf16, #tpu.memory_space<vmem>>, vector<1x16x16xbf16>
    %5 = vector.shape_cast %4 : vector<1x16x16xbf16> to vector<16x16xbf16>
    %c1_7 = arith.constant 1 : index
    %c0_8 = arith.constant 0 : index
    %c0_9 = arith.constant 0 : index
    %6 = vector.load %arg12[%c1_7, %c0_8, %c0_9] : memref<3x16x16xbf16, #tpu.memory_space<vmem>>, vector<1x16x16xbf16>
    %7 = vector.shape_cast %6 : vector<1x16x16xbf16> to vector<16x16xbf16>
    %c0_10 = arith.constant 0 : index
    %c0_11 = arith.constant 0 : index
    %c0_12 = arith.constant 0 : index
    %8 = vector.load %arg2[%c0_10, %c0_11, %c0_12] : memref<1x32x16xf32, #tpu.memory_space<vmem>>, vector<1x32x16xf32>
    %9 = vector.shape_cast %8 : vector<1x32x16xf32> to vector<32x16xf32>
    %c0_13 = arith.constant 0 : index
    %c0_14 = arith.constant 0 : index
    %c0_15 = arith.constant 0 : index
    %10 = vector.load %arg3[%c0_13, %c0_14, %c0_15] : memref<1x32x16xf32, #tpu.memory_space<vmem>>, vector<1x32x16xf32>
    %11 = vector.shape_cast %10 : vector<1x32x16xf32> to vector<32x16xf32>
    %c0_16 = arith.constant 0 : index
    %c0_17 = arith.constant 0 : index
    %12 = vector.load %arg10[%c0_16, %c0_17] : memref<1x16xf32, #tpu.memory_space<vmem>>, vector<1x16xf32>
    %cst = arith.constant 0.000000e+00 : f32
    %13 = vector.broadcast %cst : f32 to vector<1x16xf32>
    %14 = arith.cmpf one, %12, %13 : vector<1x16xf32>
    %c0_18 = arith.constant 0 : index
    %c0_19 = arith.constant 0 : index
    %15 = memref.load %arg13[%c0_18, %c0_19] : memref<1x1xf32, #tpu.memory_space<smem>>
    %c0_20 = arith.constant 0 : index
    %c0_21 = arith.constant 0 : index
    %c0_22 = arith.constant 0 : index
    %c0_23 = arith.constant 0 : index
    %16 = vector.load %arg8[%c0_20, %c0_21, %c0_22, %c0_23] : memref<1x2x32x16xbf16, #tpu.memory_space<vmem>>, vector<1x1x32x16xbf16>
    %17 = vector.shape_cast %16 : vector<1x1x32x16xbf16> to vector<32x16xbf16>
    %18 = arith.extf %17 : vector<32x16xbf16> to vector<32x16xf32>
    %c0_24 = arith.constant 0 : index
    %c0_25 = arith.constant 0 : index
    %c0_26 = arith.constant 0 : index
    %c0_27 = arith.constant 0 : index
    %19 = vector.load %arg9[%c0_24, %c0_25, %c0_26, %c0_27] : memref<1x2x32x16xbf16, #tpu.memory_space<vmem>>, vector<1x1x32x16xbf16>
    %20 = vector.shape_cast %19 : vector<1x1x32x16xbf16> to vector<32x16xbf16>
    %21 = arith.extf %20 : vector<32x16xbf16> to vector<32x16xf32>
    %22 = arith.mulf %9, %18 : vector<32x16xf32>
    %23 = arith.mulf %11, %21 : vector<32x16xf32>
    %24 = arith.subf %22, %23 : vector<32x16xf32>
    %25 = arith.mulf %9, %21 : vector<32x16xf32>
    %26 = arith.mulf %11, %18 : vector<32x16xf32>
    %27 = arith.addf %25, %26 : vector<32x16xf32>
    %28 = arith.truncf %24 : vector<32x16xf32> to vector<32x16xbf16>
    %29 = arith.truncf %27 : vector<32x16xf32> to vector<32x16xbf16>
    %cst_28 = arith.constant dense<0.000000e+00> : vector<32x16xf32>
    %30 = tpu.matmul %1, %28, %cst_28 {dimension_numbers = #tpu.dot_dimension_numbers<[1], [0], [0], [1], [0, 0, 1, 1], [], []>} : vector<32x32xbf16>, vector<32x16xbf16>, vector<32x16xf32> -> vector<32x16xf32>
    %cst_29 = arith.constant dense<0.000000e+00> : vector<32x16xf32>
    %31 = tpu.matmul %3, %29, %cst_29 {dimension_numbers = #tpu.dot_dimension_numbers<[1], [0], [0], [1], [0, 0, 1, 1], [], []>} : vector<32x32xbf16>, vector<32x16xbf16>, vector<32x16xf32> -> vector<32x16xf32>
    %32 = arith.subf %30, %31 : vector<32x16xf32>
    %cst_30 = arith.constant dense<0.000000e+00> : vector<32x16xf32>
    %33 = tpu.matmul %1, %29, %cst_30 {dimension_numbers = #tpu.dot_dimension_numbers<[1], [0], [0], [1], [0, 0, 1, 1], [], []>} : vector<32x32xbf16>, vector<32x16xbf16>, vector<32x16xf32> -> vector<32x16xf32>
    %cst_31 = arith.constant dense<0.000000e+00> : vector<32x16xf32>
    %34 = tpu.matmul %3, %28, %cst_31 {dimension_numbers = #tpu.dot_dimension_numbers<[1], [0], [0], [1], [0, 0, 1, 1], [], []>} : vector<32x32xbf16>, vector<32x16xbf16>, vector<32x16xf32> -> vector<32x16xf32>
    %35 = arith.addf %33, %34 : vector<32x16xf32>
    %36 = arith.truncf %32 : vector<32x16xf32> to vector<32x16xbf16>
    %37 = arith.truncf %35 : vector<32x16xf32> to vector<32x16xbf16>
    %cst_32 = arith.constant dense<0.000000e+00> : vector<32x16xf32>
    %38 = tpu.matmul %36, %5, %cst_32 {dimension_numbers = #tpu.dot_dimension_numbers<[1], [0], [0], [1], [0, 0, 1, 1], [], []>} : vector<32x16xbf16>, vector<16x16xbf16>, vector<32x16xf32> -> vector<32x16xf32>
    %cst_33 = arith.constant dense<0.000000e+00> : vector<32x16xf32>
    %39 = tpu.matmul %37, %7, %cst_33 {dimension_numbers = #tpu.dot_dimension_numbers<[1], [0], [0], [1], [0, 0, 1, 1], [], []>} : vector<32x16xbf16>, vector<16x16xbf16>, vector<32x16xf32> -> vector<32x16xf32>
    %40 = arith.subf %38, %39 : vector<32x16xf32>
    %cst_34 = arith.constant dense<0.000000e+00> : vector<32x16xf32>
    %41 = tpu.matmul %37, %5, %cst_34 {dimension_numbers = #tpu.dot_dimension_numbers<[1], [0], [0], [1], [0, 0, 1, 1], [], []>} : vector<32x16xbf16>, vector<16x16xbf16>, vector<32x16xf32> -> vector<32x16xf32>
    %cst_35 = arith.constant dense<0.000000e+00> : vector<32x16xf32>
    %42 = tpu.matmul %36, %7, %cst_35 {dimension_numbers = #tpu.dot_dimension_numbers<[1], [0], [0], [1], [0, 0, 1, 1], [], []>} : vector<32x16xbf16>, vector<16x16xbf16>, vector<32x16xf32> -> vector<32x16xf32>
    %43 = arith.addf %41, %42 : vector<32x16xf32>
    %c0_36 = arith.constant 0 : index
    %c0_37 = arith.constant 0 : index
    %c0_38 = arith.constant 0 : index
    %c0_39 = arith.constant 0 : index
    %44 = vector.load %arg4[%c0_36, %c0_37, %c0_38, %c0_39] : memref<1x2x32x16xf32, #tpu.memory_space<vmem>>, vector<1x1x32x16xf32>
    %45 = vector.shape_cast %44 : vector<1x1x32x16xf32> to vector<32x16xf32>
    %c0_40 = arith.constant 0 : index
    %c0_41 = arith.constant 0 : index
    %c0_42 = arith.constant 0 : index
    %c0_43 = arith.constant 0 : index
    %46 = vector.load %arg5[%c0_40, %c0_41, %c0_42, %c0_43] : memref<1x2x32x16xf32, #tpu.memory_space<vmem>>, vector<1x1x32x16xf32>
    %47 = vector.shape_cast %46 : vector<1x1x32x16xf32> to vector<32x16xf32>
    %c0_44 = arith.constant 0 : index
    %c0_45 = arith.constant 0 : index
    %c0_46 = arith.constant 0 : index
    %c0_47 = arith.constant 0 : index
    %48 = vector.load %arg6[%c0_44, %c0_45, %c0_46, %c0_47] : memref<1x2x32x16xf32, #tpu.memory_space<vmem>>, vector<1x1x32x16xf32>
    %49 = vector.shape_cast %48 : vector<1x1x32x16xf32> to vector<32x16xf32>
    %c0_48 = arith.constant 0 : index
    %c0_49 = arith.constant 0 : index
    %c0_50 = arith.constant 0 : index
    %c0_51 = arith.constant 0 : index
    %50 = vector.load %arg7[%c0_48, %c0_49, %c0_50, %c0_51] : memref<1x2x32x16xf32, #tpu.memory_space<vmem>>, vector<1x1x32x16xf32>
    %51 = vector.shape_cast %50 : vector<1x1x32x16xf32> to vector<32x16xf32>
    %52 = arith.subf %45, %49 : vector<32x16xf32>
    %53 = vector.broadcast %15 : f32 to vector<32x16xf32>
    %54 = arith.mulf %52, %53 : vector<32x16xf32>
    %cst_52 = arith.constant 0.000000e+00 : f32
    %55 = vector.shape_cast %14 : vector<1x16xi1> to vector<1x16xi1>
    %56 = vector.broadcast %55 : vector<1x16xi1> to vector<32x16xi1>
    %57 = vector.broadcast %cst_52 : f32 to vector<32x16xf32>
    %58 = arith.select %56, %54, %57 : vector<32x16xi1>, vector<32x16xf32>
    %59 = arith.subf %45, %58 : vector<32x16xf32>
    %60 = arith.subf %59, %40 : vector<32x16xf32>
    %c0_53 = arith.constant 0 : index
    %c0_54 = arith.constant 0 : index
    %c0_55 = arith.constant 0 : index
    %c0_56 = arith.constant 0 : index
    %61 = vector.load %arg14[%c0_53, %c0_54, %c0_55, %c0_56] : memref<1x2x32x16xf32, #tpu.memory_space<vmem>>, vector<1x1x32x16xf32>
    %62 = vector.shape_cast %61 : vector<1x1x32x16xf32> to vector<32x16xf32>
    %63 = vector.shape_cast %60 : vector<32x16xf32> to vector<1x1x32x16xf32>
    tpu.vector_store %arg14[%c0_53, %c0_54, %c0_55, %c0_56], %63 {strides = array<i32>} : memref<1x2x32x16xf32, #tpu.memory_space<vmem>>, vector<1x1x32x16xf32>,
    %64 = arith.subf %47, %51 : vector<32x16xf32>
    %65 = vector.broadcast %15 : f32 to vector<32x16xf32>
    %66 = arith.mulf %64, %65 : vector<32x16xf32>
    %cst_57 = arith.constant 0.000000e+00 : f32
    %67 = vector.shape_cast %14 : vector<1x16xi1> to vector<1x16xi1>
    %68 = vector.broadcast %67 : vector<1x16xi1> to vector<32x16xi1>
    %69 = vector.broadcast %cst_57 : f32 to vector<32x16xf32>
    %70 = arith.select %68, %66, %69 : vector<32x16xi1>, vector<32x16xf32>
    %71 = arith.subf %47, %70 : vector<32x16xf32>
    %72 = arith.subf %71, %43 : vector<32x16xf32>
    %c0_58 = arith.constant 0 : index
    %c0_59 = arith.constant 0 : index
    %c0_60 = arith.constant 0 : index
    %c0_61 = arith.constant 0 : index
    %73 = vector.load %arg15[%c0_58, %c0_59, %c0_60, %c0_61] : memref<1x2x32x16xf32, #tpu.memory_space<vmem>>, vector<1x1x32x16xf32>
    %74 = vector.shape_cast %73 : vector<1x1x32x16xf32> to vector<32x16xf32>
    %75 = vector.shape_cast %72 : vector<32x16xf32> to vector<1x1x32x16xf32>
    tpu.vector_store %arg15[%c0_58, %c0_59, %c0_60, %c0_61], %75 {strides = array<i32>} : memref<1x2x32x16xf32, #tpu.memory_space<vmem>>, vector<1x1x32x16xf32>,
    %c0_62 = arith.constant 0 : index
    %c1_63 = arith.constant 1 : index
    %c0_64 = arith.constant 0 : index
    %c0_65 = arith.constant 0 : index
    %76 = vector.load %arg8[%c0_62, %c1_63, %c0_64, %c0_65] : memref<1x2x32x16xbf16, #tpu.memory_space<vmem>>, vector<1x1x32x16xbf16>
    %77 = vector.shape_cast %76 : vector<1x1x32x16xbf16> to vector<32x16xbf16>
    %78 = arith.extf %77 : vector<32x16xbf16> to vector<32x16xf32>
    %c0_66 = arith.constant 0 : index
    %c1_67 = arith.constant 1 : index
    %c0_68 = arith.constant 0 : index
    %c0_69 = arith.constant 0 : index
    %79 = vector.load %arg9[%c0_66, %c1_67, %c0_68, %c0_69] : memref<1x2x32x16xbf16, #tpu.memory_space<vmem>>, vector<1x1x32x16xbf16>
    %80 = vector.shape_cast %79 : vector<1x1x32x16xbf16> to vector<32x16xbf16>
    %81 = arith.extf %80 : vector<32x16xbf16> to vector<32x16xf32>
    %82 = arith.mulf %9, %78 : vector<32x16xf32>
    %83 = arith.mulf %11, %81 : vector<32x16xf32>
    %84 = arith.subf %82, %83 : vector<32x16xf32>
    %85 = arith.mulf %9, %81 : vector<32x16xf32>
    %86 = arith.mulf %11, %78 : vector<32x16xf32>
    %87 = arith.addf %85, %86 : vector<32x16xf32>
    %88 = arith.truncf %84 : vector<32x16xf32> to vector<32x16xbf16>
    %89 = arith.truncf %87 : vector<32x16xf32> to vector<32x16xbf16>
    %cst_70 = arith.constant dense<0.000000e+00> : vector<32x16xf32>
    %90 = tpu.matmul %1, %88, %cst_70 {dimension_numbers = #tpu.dot_dimension_numbers<[1], [0], [0], [1], [0, 0, 1, 1], [], []>} : vector<32x32xbf16>, vector<32x16xbf16>, vector<32x16xf32> -> vector<32x16xf32>
    %cst_71 = arith.constant dense<0.000000e+00> : vector<32x16xf32>
    %91 = tpu.matmul %3, %89, %cst_71 {dimension_numbers = #tpu.dot_dimension_numbers<[1], [0], [0], [1], [0, 0, 1, 1], [], []>} : vector<32x32xbf16>, vector<32x16xbf16>, vector<32x16xf32> -> vector<32x16xf32>
    %92 = arith.subf %90, %91 : vector<32x16xf32>
    %cst_72 = arith.constant dense<0.000000e+00> : vector<32x16xf32>
    %93 = tpu.matmul %1, %89, %cst_72 {dimension_numbers = #tpu.dot_dimension_numbers<[1], [0], [0], [1], [0, 0, 1, 1], [], []>} : vector<32x32xbf16>, vector<32x16xbf16>, vector<32x16xf32> -> vector<32x16xf32>
    %cst_73 = arith.constant dense<0.000000e+00> : vector<32x16xf32>
    %94 = tpu.matmul %3, %88, %cst_73 {dimension_numbers = #tpu.dot_dimension_numbers<[1], [0], [0], [1], [0, 0, 1, 1], [], []>} : vector<32x32xbf16>, vector<32x16xbf16>, vector<32x16xf32> -> vector<32x16xf32>
    %95 = arith.addf %93, %94 : vector<32x16xf32>
    %96 = arith.truncf %92 : vector<32x16xf32> to vector<32x16xbf16>
    %97 = arith.truncf %95 : vector<32x16xf32> to vector<32x16xbf16>
    %cst_74 = arith.constant dense<0.000000e+00> : vector<32x16xf32>
    %98 = tpu.matmul %96, %5, %cst_74 {dimension_numbers = #tpu.dot_dimension_numbers<[1], [0], [0], [1], [0, 0, 1, 1], [], []>} : vector<32x16xbf16>, vector<16x16xbf16>, vector<32x16xf32> -> vector<32x16xf32>
    %cst_75 = arith.constant dense<0.000000e+00> : vector<32x16xf32>
    %99 = tpu.matmul %97, %7, %cst_75 {dimension_numbers = #tpu.dot_dimension_numbers<[1], [0], [0], [1], [0, 0, 1, 1], [], []>} : vector<32x16xbf16>, vector<16x16xbf16>, vector<32x16xf32> -> vector<32x16xf32>
    %100 = arith.subf %98, %99 : vector<32x16xf32>
    %cst_76 = arith.constant dense<0.000000e+00> : vector<32x16xf32>
    %101 = tpu.matmul %97, %5, %cst_76 {dimension_numbers = #tpu.dot_dimension_numbers<[1], [0], [0], [1], [0, 0, 1, 1], [], []>} : vector<32x16xbf16>, vector<16x16xbf16>, vector<32x16xf32> -> vector<32x16xf32>
    %cst_77 = arith.constant dense<0.000000e+00> : vector<32x16xf32>
    %102 = tpu.matmul %96, %7, %cst_77 {dimension_numbers = #tpu.dot_dimension_numbers<[1], [0], [0], [1], [0, 0, 1, 1], [], []>} : vector<32x16xbf16>, vector<16x16xbf16>, vector<32x16xf32> -> vector<32x16xf32>
    %103 = arith.addf %101, %102 : vector<32x16xf32>
    %c0_78 = arith.constant 0 : index
    %c1_79 = arith.constant 1 : index
    %c0_80 = arith.constant 0 : index
    %c0_81 = arith.constant 0 : index
    %104 = vector.load %arg4[%c0_78, %c1_79, %c0_80, %c0_81] : memref<1x2x32x16xf32, #tpu.memory_space<vmem>>, vector<1x1x32x16xf32>
    %105 = vector.shape_cast %104 : vector<1x1x32x16xf32> to vector<32x16xf32>
    %c0_82 = arith.constant 0 : index
    %c1_83 = arith.constant 1 : index
    %c0_84 = arith.constant 0 : index
    %c0_85 = arith.constant 0 : index
    %106 = vector.load %arg5[%c0_82, %c1_83, %c0_84, %c0_85] : memref<1x2x32x16xf32, #tpu.memory_space<vmem>>, vector<1x1x32x16xf32>
    %107 = vector.shape_cast %106 : vector<1x1x32x16xf32> to vector<32x16xf32>
    %c0_86 = arith.constant 0 : index
    %c1_87 = arith.constant 1 : index
    %c0_88 = arith.constant 0 : index
    %c0_89 = arith.constant 0 : index
    %108 = vector.load %arg6[%c0_86, %c1_87, %c0_88, %c0_89] : memref<1x2x32x16xf32, #tpu.memory_space<vmem>>, vector<1x1x32x16xf32>
    %109 = vector.shape_cast %108 : vector<1x1x32x16xf32> to vector<32x16xf32>
    %c0_90 = arith.constant 0 : index
    %c1_91 = arith.constant 1 : index
    %c0_92 = arith.constant 0 : index
    %c0_93 = arith.constant 0 : index
    %110 = vector.load %arg7[%c0_90, %c1_91, %c0_92, %c0_93] : memref<1x2x32x16xf32, #tpu.memory_space<vmem>>, vector<1x1x32x16xf32>
    %111 = vector.shape_cast %110 : vector<1x1x32x16xf32> to vector<32x16xf32>
    %112 = arith.subf %105, %109 : vector<32x16xf32>
    %113 = vector.broadcast %15 : f32 to vector<32x16xf32>
    %114 = arith.mulf %112, %113 : vector<32x16xf32>
    %cst_94 = arith.constant 0.000000e+00 : f32
    %115 = vector.shape_cast %14 : vector<1x16xi1> to vector<1x16xi1>
    %116 = vector.broadcast %115 : vector<1x16xi1> to vector<32x16xi1>
    %117 = vector.broadcast %cst_94 : f32 to vector<32x16xf32>
    %118 = arith.select %116, %114, %117 : vector<32x16xi1>, vector<32x16xf32>
    %119 = arith.subf %105, %118 : vector<32x16xf32>
    %120 = arith.subf %119, %100 : vector<32x16xf32>
    %c0_95 = arith.constant 0 : index
    %c1_96 = arith.constant 1 : index
    %c0_97 = arith.constant 0 : index
    %c0_98 = arith.constant 0 : index
    %121 = vector.load %arg14[%c0_95, %c1_96, %c0_97, %c0_98] : memref<1x2x32x16xf32, #tpu.memory_space<vmem>>, vector<1x1x32x16xf32>
    %122 = vector.shape_cast %121 : vector<1x1x32x16xf32> to vector<32x16xf32>
    %123 = vector.shape_cast %120 : vector<32x16xf32> to vector<1x1x32x16xf32>
    tpu.vector_store %arg14[%c0_95, %c1_96, %c0_97, %c0_98], %123 {strides = array<i32>} : memref<1x2x32x16xf32, #tpu.memory_space<vmem>>, vector<1x1x32x16xf32>,
    %124 = arith.subf %107, %111 : vector<32x16xf32>
    %125 = vector.broadcast %15 : f32 to vector<32x16xf32>
    %126 = arith.mulf %124, %125 : vector<32x16xf32>
    %cst_99 = arith.constant 0.000000e+00 : f32
    %127 = vector.shape_cast %14 : vector<1x16xi1> to vector<1x16xi1>
    %128 = vector.broadcast %127 : vector<1x16xi1> to vector<32x16xi1>
    %129 = vector.broadcast %cst_99 : f32 to vector<32x16xf32>
    %130 = arith.select %128, %126, %129 : vector<32x16xi1>, vector<32x16xf32>
    %131 = arith.subf %107, %130 : vector<32x16xf32>
    %132 = arith.subf %131, %103 : vector<32x16xf32>
    %c0_100 = arith.constant 0 : index
    %c1_101 = arith.constant 1 : index
    %c0_102 = arith.constant 0 : index
    %c0_103 = arith.constant 0 : index
    %133 = vector.load %arg15[%c0_100, %c1_101, %c0_102, %c0_103] : memref<1x2x32x16xf32, #tpu.memory_space<vmem>>, vector<1x1x32x16xf32>
    %134 = vector.shape_cast %133 : vector<1x1x32x16xf32> to vector<32x16xf32>
    %135 = vector.shape_cast %132 : vector<32x16xf32> to vector<1x1x32x16xf32>
    tpu.vector_store %arg15[%c0_100, %c1_101, %c0_102, %c0_103], %135 {strides = array<i32>} : memref<1x2x32x16xf32, #tpu.memory_space<vmem>>, vector<1x1x32x16xf32>,
    return
  }
  func.func @transform_0(%arg0: i32, %arg1: i32) -> (i32, i32, i32) {
    %c0_i32 = arith.constant 0 : i32
    %c0_i32_0 = arith.constant 0 : i32
    %c0_i32_1 = arith.constant 0 : i32
    return %arg0, %c0_i32, %c0_i32_0 : i32, i32, i32
  }
  func.func @transform_1(%arg0: i32, %arg1: i32) -> (i32, i32, i32) {
    %c0_i32 = arith.constant 0 : i32
    %c0_i32_0 = arith.constant 0 : i32
    %c0_i32_1 = arith.constant 0 : i32
    return %arg0, %c0_i32, %c0_i32_0 : i32, i32, i32
  }
  func.func @transform_2(%arg0: i32, %arg1: i32) -> (i32, i32, i32, i32) {
    %c0_i32 = arith.constant 0 : i32
    %c0_i32_0 = arith.constant 0 : i32
    %c0_i32_1 = arith.constant 0 : i32
    return %arg0, %arg1, %c0_i32, %c0_i32_0 : i32, i32, i32, i32
  }
  func.func @transform_3(%arg0: i32, %arg1: i32) -> (i32, i32, i32, i32) {
    %c0_i32 = arith.constant 0 : i32
    %c0_i32_0 = arith.constant 0 : i32
    %c0_i32_1 = arith.constant 0 : i32
    return %arg0, %arg1, %c0_i32, %c0_i32_0 : i32, i32, i32, i32
  }
  func.func @transform_4(%arg0: i32, %arg1: i32) -> (i32, i32, i32, i32) {
    %c0_i32 = arith.constant 0 : i32
    %c0_i32_0 = arith.constant 0 : i32
    %c0_i32_1 = arith.constant 0 : i32
    return %arg0, %arg1, %c0_i32, %c0_i32_0 : i32, i32, i32, i32
  }
  func.func @transform_5(%arg0: i32, %arg1: i32) -> (i32, i32, i32, i32) {
    %c0_i32 = arith.constant 0 : i32
    %c0_i32_0 = arith.constant 0 : i32
    %c0_i32_1 = arith.constant 0 : i32
    return %arg0, %arg1, %c0_i32, %c0_i32_0 : i32, i32, i32, i32
  }
  func.func @transform_6(%arg0: i32, %arg1: i32) -> (i32, i32, i32, i32) {
    %c0_i32 = arith.constant 0 : i32
    %c0_i32_0 = arith.constant 0 : i32
    %c0_i32_1 = arith.constant 0 : i32
    return %arg0, %arg1, %c0_i32, %c0_i32_0 : i32, i32, i32, i32
  }
  func.func @transform_7(%arg0: i32, %arg1: i32) -> (i32, i32, i32, i32) {
    %c0_i32 = arith.constant 0 : i32
    %c0_i32_0 = arith.constant 0 : i32
    %c0_i32_1 = arith.constant 0 : i32
    return %arg0, %arg1, %c0_i32, %c0_i32_0 : i32, i32, i32, i32
  }
  func.func @transform_8(%arg0: i32, %arg1: i32) -> (i32, i32) {
    %c0_i32 = arith.constant 0 : i32
    %c0_i32_0 = arith.constant 0 : i32
    %c0_i32_1 = arith.constant 0 : i32
    return %c0_i32, %c0_i32_0 : i32, i32
  }
  func.func @transform_9(%arg0: i32, %arg1: i32) -> (i32, i32, i32) {
    %c0_i32 = arith.constant 0 : i32
    %c0_i32_0 = arith.constant 0 : i32
    %c0_i32_1 = arith.constant 0 : i32
    %c0_i32_2 = arith.constant 0 : i32
    return %c0_i32, %c0_i32_0, %c0_i32_1 : i32, i32, i32
  }
  func.func @transform_10(%arg0: i32, %arg1: i32) -> (i32, i32, i32) {
    %c0_i32 = arith.constant 0 : i32
    %c0_i32_0 = arith.constant 0 : i32
    %c0_i32_1 = arith.constant 0 : i32
    %c0_i32_2 = arith.constant 0 : i32
    return %c0_i32, %c0_i32_0, %c0_i32_1 : i32, i32, i32
  }
  func.func @transform_11(%arg0: i32, %arg1: i32) -> (i32, i32) {
    %c0_i32 = arith.constant 0 : i32
    %c0_i32_0 = arith.constant 0 : i32
    %c0_i32_1 = arith.constant 0 : i32
    return %c0_i32, %c0_i32_0 : i32, i32
  }
  func.func @transform_12(%arg0: i32, %arg1: i32) -> (i32, i32, i32, i32) {
    %c0_i32 = arith.constant 0 : i32
    %c0_i32_0 = arith.constant 0 : i32
    %c0_i32_1 = arith.constant 0 : i32
    return %arg0, %arg1, %c0_i32, %c0_i32_0 : i32, i32, i32, i32
  }
  func.func @transform_13(%arg0: i32, %arg1: i32) -> (i32, i32, i32, i32) {
    %c0_i32 = arith.constant 0 : i32
    %c0_i32_0 = arith.constant 0 : i32
    %c0_i32_1 = arith.constant 0 : i32
    return %arg0, %arg1, %c0_i32, %c0_i32_0 : i32, i32, i32, i32
  }
}

</mosaic_0001>

<llo_original>
// kernel: varnet_cascade.5
$region0: #{varnet_cascade.5}
  #allocation0 [shape = 'u32[]', space=smem, size = 0x4, offset = 0x4, fixed_abs, tag = 'smem constant byte address 0x4 - core index']
  #allocation1 [shape = 'u32[144,128]{1,0:T(1,128)}', space=vmem, size = 0x12000, scoped, tag = 'internal scratch']
  #allocation2 [shape = 'f32[1,1]{1,0:T(1,128)S(6)}', space=smem, size = 0x200, scoped, tag = 'scoped memory for varnet_cascade.5']
  %s0 = inlined_call_operand.vmem [shape: f32[2,32,16], index: 0, kind: input, shape index: {}]
  %s1 = inlined_call_operand.vmem [shape: f32[2,32,16], index: 1, kind: input, shape index: {}]
  %s2 = inlined_call_operand.vmem [shape: f32[2,4,32,16], index: 2, kind: input, shape index: {}, may-alias: {2,12}]
  %s3 = inlined_call_operand.vmem [shape: f32[2,4,32,16], index: 3, kind: input, shape index: {}, may-alias: {3,13}]
  %s4 = inlined_call_operand.vmem [shape: f32[2,4,32,16], index: 4, kind: input, shape index: {}]
  %s5 = inlined_call_operand.vmem [shape: f32[2,4,32,16], index: 5, kind: input, shape index: {}]
  %s6 = inlined_call_operand.vmem [shape: bf16[2,4,32,16], index: 6, kind: input, shape index: {}]
  %s7 = inlined_call_operand.vmem [shape: bf16[2,4,32,16], index: 7, kind: input, shape index: {}]
  %s8 = inlined_call_operand.vmem [shape: f32[1,16], index: 8, kind: input, shape index: {}]
  %s9 = inlined_call_operand.vmem [shape: bf16[3,32,32], index: 9, kind: input, shape index: {}]
  %s10 = inlined_call_operand.vmem [shape: bf16[3,16,16], index: 10, kind: input, shape index: {}]
  %s11 = inlined_call_operand.<no memory space> [shape: f32[1,1], index: 11, kind: input, shape index: {}]
  %s12 = inlined_call_operand.vmem [shape: f32[2,4,32,16], index: 12, kind: output, shape index: {0}, may-alias: {2,12}]
  %s13 = inlined_call_operand.vmem [shape: f32[2,4,32,16], index: 13, kind: output, shape index: {1}, may-alias: {3,13}]
  %14 = xla_tuple %s12, %s13
  %s15 = sld [smem:[#allocation0]]
  $region89: #{varnet_cascade.5} parent=0
    _
  %s17 = ssub.s32 1, %s15
  %s18 = scalar_select 0, %s17, %s15
  %19 = sst [smem:[#allocation2]] %s11
  loop: start=0, step=1, limit=6
  $region2: #{varnet_cascade.5} parent=0 // loop_pre_header
    _
  $region3: #{varnet_cascade.5} parent=0 // loop_header
    %s21 = sphi 0, %s25
    %p22 = scmp.ge.s32.totalorder %s21, 6
    %s28 = sphi 0, %s40
    %s29 = sphi 0, %s36
    %s30 = sphi 0, %s28
    %s31 = sphi 0, %s29
    %s32 = sphi 0, %s30
    %s33 = sphi 0, %s31
    %s43 = sphi 0, %s45
    %s46 = sphi 0, %s43
    %s47 = sphi 0, %s46
    %s63 = sphi 0, %s47
    %s69 = sphi 0, %s71
    %s72 = sphi 0, %s69
    %s73 = sphi 0, %s72
    %s89 = sphi 0, %s73
    %s97 = sphi 0, %s99
    %s100 = sphi 0, %s97
    %s101 = sphi 0, %s100
    %s117 = sphi 0, %s101
    %s125 = sphi 0, %s127
    %s128 = sphi 0, %s125
    %s129 = sphi 0, %s128
    %s145 = sphi 0, %s129
    %s153 = sphi 0, %s155
    %s156 = sphi 0, %s153
    %s157 = sphi 0, %s156
    %s173 = sphi 0, %s157
    %s181 = sphi 0, %s183
    %s184 = sphi 0, %s181
    %s185 = sphi 0, %s184
    %s201 = sphi 0, %s185
    %s209 = sphi 0, %s211
    %s212 = sphi 0, %s209
    %s213 = sphi 0, %s212
    %s229 = sphi 0, %s213
    %s237 = sphi 0, %s239
    %s240 = sphi 0, %s237
    %s241 = sphi 0, %s240
    %s257 = sphi 0, %s241
    %s261 = sphi 0, %s261
    %s263 = sphi 0, %s261
    %s264 = sphi 0, %s263
    %s278 = sphi 0, %s264
    %s282 = sphi 0, %s282
    %s284 = sphi 0, %s282
    %s285 = sphi 0, %s284
    %s299 = sphi 0, %s285
    %s303 = sphi 0, %s303
    %s305 = sphi 0, %s303
    %s306 = sphi 0, %s305
    %s320 = sphi 0, %s306
    %s324 = sphi 0, %s324
    %s326 = sphi 0, %s324
    %s327 = sphi 0, %s326
    %s341 = sphi 0, %s327
    %s349 = sphi 0, %s351
    %s352 = sphi 0, %s349
    %s353 = sphi 0, %s352
    %s369 = sphi 0, %s353
    %s377 = sphi 0, %s379
    %s380 = sphi 0, %s377
    %s381 = sphi 0, %s380
    %s397 = sphi 0, %s381
  $region4: #{varnet_cascade.5} parent=0 // loop_header_branch
    %24 = sbr.rel (%p22) target = $region8
  $region5: #{varnet_cascade.5} parent=0 // loop_body
    %s26 = ssub.s32 %s21, 1
    %s27 = ssub.s32 %s21, 2
    %s34 = sadd.s32 1, %s29
    %p35 = scmp.ge.s32.totalorder %s34, 2
    %s36 = scalar_select %p35, 0, %s34
    %s37 = sadd.s32 1, %s28
    %s38 = scalar_select %p35, %s37, %s28
    %p39 = scmp.ge.s32.totalorder %s38, 2
    %s40 = scalar_select %p39, 0, %s38
    %s41 = ssub.s32 %s28, %s40
    %p42 = scmp.eq.s32.totalorder %s41, 0
    %s44 = sadd.s32 %s43, 1
    %s45 = scalar_select %p42, %s43, %s44
    %p48 = pneg %p42
    %p49 = scmp.eq.s32.totalorder %s21, 3
    %p50 = por %p48, %p49
    %p51 = scmp.ne.s32.totalorder %s43, %s46
    %p52 = scmp.eq.s32.totalorder %s21, 0
    %p53 = por %p51, %p52
    %p54 = scmp.ne.s32.totalorder %s43, %s46
    %p55 = scmp.eq.s32.totalorder %s26, 3
    %p56 = por %p54, %p55
    %p57 = scmp.ne.s32.totalorder %s46, %s47
    %p58 = scmp.eq.s32.totalorder %s26, 0
    %p59 = por %p57, %p58
    %p60 = scmp.ne.s32.totalorder %s46, %s47
    %p61 = scmp.eq.s32.totalorder %s27, 3
    %p62 = por %p60, %p61
    %p64 = scmp.ne.s32.totalorder %s47, %s63
    %p65 = scmp.eq.s32.totalorder %s27, 0
    %p66 = por %p64, %p65
    %s67 = ssub.s32 %s28, %s40
    %p68 = scmp.eq.s32.totalorder %s67, 0
    %s70 = sadd.s32 %s69, 1
    %s71 = scalar_select %p68, %s69, %s70
    %p74 = pneg %p68
    %p75 = scmp.eq.s32.totalorder %s21, 3
    %p76 = por %p74, %p75
    %p77 = scmp.ne.s32.totalorder %s69, %s72
    %p78 = scmp.eq.s32.totalorder %s21, 0
    %p79 = por %p77, %p78
    %p80 = scmp.ne.s32.totalorder %s69, %s72
    %p81 = scmp.eq.s32.totalorder %s26, 3
    %p82 = por %p80, %p81
    %p83 = scmp.ne.s32.totalorder %s72, %s73
    %p84 = scmp.eq.s32.totalorder %s26, 0
    %p85 = por %p83, %p84
    %p86 = scmp.ne.s32.totalorder %s72, %s73
    %p87 = scmp.eq.s32.totalorder %s27, 3
    %p88 = por %p86, %p87
    %p90 = scmp.ne.s32.totalorder %s73, %s89
    %p91 = scmp.eq.s32.totalorder %s27, 0
    %p92 = por %p90, %p91
    %s93 = ssub.s32 %s28, %s40
    %s94 = ssub.s32 %s29, %s36
    %s95 = sor.u32 %s93, %s94
    %p96 = scmp.eq.s32.totalorder %s95, 0
    %s98 = sadd.s32 %s97, 1
    %s99 = scalar_select %p96, %s97, %s98
    %p102 = pneg %p96
    %p103 = scmp.eq.s32.totalorder %s21, 3
    %p104 = por %p102, %p103
    %p105 = scmp.ne.s32.totalorder %s97, %s100
    %p106 = scmp.eq.s32.totalorder %s21, 0
    %p107 = por %p105, %p106
    %p108 = scmp.ne.s32.totalorder %s97, %s100
    %p109 = scmp.eq.s32.totalorder %s26, 3
    %p110 = por %p108, %p109
    %p111 = scmp.ne.s32.totalorder %s100, %s101
    %p112 = scmp.eq.s32.totalorder %s26, 0
    %p113 = por %p111, %p112
    %p114 = scmp.ne.s32.totalorder %s100, %s101
    %p115 = scmp.eq.s32.totalorder %s27, 3
    %p116 = por %p114, %p115
    %p118 = scmp.ne.s32.totalorder %s101, %s117
    %p119 = scmp.eq.s32.totalorder %s27, 0
    %p120 = por %p118, %p119
    %s121 = ssub.s32 %s28, %s40
    %s122 = ssub.s32 %s29, %s36
    %s123 = sor.u32 %s121, %s122
    %p124 = scmp.eq.s32.totalorder %s123, 0
    %s126 = sadd.s32 %s125, 1
    %s127 = scalar_select %p124, %s125, %s126
    %p130 = pneg %p124
    %p131 = scmp.eq.s32.totalorder %s21, 3
    %p132 = por %p130, %p131
    %p133 = scmp.ne.s32.totalorder %s125, %s128
    %p134 = scmp.eq.s32.totalorder %s21, 0
    %p135 = por %p133, %p134
    %p136 = scmp.ne.s32.totalorder %s125, %s128
    %p137 = scmp.eq.s32.totalorder %s26, 3
    %p138 = por %p136, %p137
    %p139 = scmp.ne.s32.totalorder %s128, %s129
    %p140 = scmp.eq.s32.totalorder %s26, 0
    %p141 = por %p139, %p140
    %p142 = scmp.ne.s32.totalorder %s128, %s129
    %p143 = scmp.eq.s32.totalorder %s27, 3
    %p144 = por %p142, %p143
    %p146 = scmp.ne.s32.totalorder %s129, %s145
    %p147 = scmp.eq.s32.totalorder %s27, 0
    %p148 = por %p146, %p147
    %s149 = ssub.s32 %s28, %s40
    %s150 = ssub.s32 %s29, %s36
    %s151 = sor.u32 %s149, %s150
    %p152 = scmp.eq.s32.totalorder %s151, 0
    %s154 = sadd.s32 %s153, 1
    %s155 = scalar_select %p152, %s153, %s154
    %p158 = pneg %p152
    %p159 = scmp.eq.s32.totalorder %s21, 3
    %p160 = por %p158, %p159
    %p161 = scmp.ne.s32.totalorder %s153, %s156
    %p162 = scmp.eq.s32.totalorder %s21, 0
    %p163 = por %p161, %p162
    %p164 = scmp.ne.s32.totalorder %s153, %s156
    %p165 = scmp.eq.s32.totalorder %s26, 3
    %p166 = por %p164, %p165
    %p167 = scmp.ne.s32.totalorder %s156, %s157
    %p168 = scmp.eq.s32.totalorder %s26, 0
    %p169 = por %p167, %p168
    %p170 = scmp.ne.s32.totalorder %s156, %s157
    %p171 = scmp.eq.s32.totalorder %s27, 3
    %p172 = por %p170, %p171
    %p174 = scmp.ne.s32.totalorder %s157, %s173
    %p175 = scmp.eq.s32.totalorder %s27, 0
    %p176 = por %p174, %p175
    %s177 = ssub.s32 %s28, %s40
    %s178 = ssub.s32 %s29, %s36
    %s179 = sor.u32 %s177, %s178
    %p180 = scmp.eq.s32.totalorder %s179, 0
    %s182 = sadd.s32 %s181, 1
    %s183 = scalar_select %p180, %s181, %s182
    %p186 = pneg %p180
    %p187 = scmp.eq.s32.totalorder %s21, 3
    %p188 = por %p186, %p187
    %p189 = scmp.ne.s32.totalorder %s181, %s184
    %p190 = scmp.eq.s32.totalorder %s21, 0
    %p191 = por %p189, %p190
    %p192 = scmp.ne.s32.totalorder %s181, %s184
    %p193 = scmp.eq.s32.totalorder %s26, 3
    %p194 = por %p192, %p193
    %p195 = scmp.ne.s32.totalorder %s184, %s185
    %p196 = scmp.eq.s32.totalorder %s26, 0
    %p197 = por %p195, %p196
    %p198 = scmp.ne.s32.totalorder %s184, %s185
    %p199 = scmp.eq.s32.totalorder %s27, 3
    %p200 = por %p198, %p199
    %p202 = scmp.ne.s32.totalorder %s185, %s201
    %p203 = scmp.eq.s32.totalorder %s27, 0
    %p204 = por %p202, %p203
    %s205 = ssub.s32 %s28, %s40
    %s206 = ssub.s32 %s29, %s36
    %s207 = sor.u32 %s205, %s206
    %p208 = scmp.eq.s32.totalorder %s207, 0
    %s210 = sadd.s32 %s209, 1
    %s211 = scalar_select %p208, %s209, %s210
    %p214 = pneg %p208
    %p215 = scmp.eq.s32.totalorder %s21, 3
    %p216 = por %p214, %p215
    %p217 = scmp.ne.s32.totalorder %s209, %s212
    %p218 = scmp.eq.s32.totalorder %s21, 0
    %p219 = por %p217, %p218
    %p220 = scmp.ne.s32.totalorder %s209, %s212
    %p221 = scmp.eq.s32.totalorder %s26, 3
    %p222 = por %p220, %p221
    %p223 = scmp.ne.s32.totalorder %s212, %s213
    %p224 = scmp.eq.s32.totalorder %s26, 0
    %p225 = por %p223, %p224
    %p226 = scmp.ne.s32.totalorder %s212, %s213
    %p227 = scmp.eq.s32.totalorder %s27, 3
    %p228 = por %p226, %p227
    %p230 = scmp.ne.s32.totalorder %s213, %s229
    %p231 = scmp.eq.s32.totalorder %s27, 0
    %p232 = por %p230, %p231
    %s233 = ssub.s32 %s28, %s40
    %s234 = ssub.s32 %s29, %s36
    %s235 = sor.u32 %s233, %s234
    %p236 = scmp.eq.s32.totalorder %s235, 0
    %s238 = sadd.s32 %s237, 1
    %s239 = scalar_select %p236, %s237, %s238
    %p242 = pneg %p236
    %p243 = scmp.eq.s32.totalorder %s21, 3
    %p244 = por %p242, %p243
    %p245 = scmp.ne.s32.totalorder %s237, %s240
    %p246 = scmp.eq.s32.totalorder %s21, 0
    %p247 = por %p245, %p246
    %p248 = scmp.ne.s32.totalorder %s237, %s240
    %p249 = scmp.eq.s32.totalorder %s26, 3
    %p250 = por %p248, %p249
    %p251 = scmp.ne.s32.totalorder %s240, %s241
    %p252 = scmp.eq.s32.totalorder %s26, 0
    %p253 = por %p251, %p252
    %p254 = scmp.ne.s32.totalorder %s240, %s241
    %p255 = scmp.eq.s32.totalorder %s27, 3
    %p256 = por %p254, %p255
    %p258 = scmp.ne.s32.totalorder %s241, %s257
    %p259 = scmp.eq.s32.totalorder %s27, 0
    %p260 = por %p258, %p259
    %s262 = sadd.s32 %s261, 1
    %p265 = scmp.eq.s32.totalorder %s21, 3
    %p266 = scmp.ne.s32.totalorder %s261, %s263
    %p267 = scmp.eq.s32.totalorder %s21, 0
    %p268 = por %p266, %p267
    %p269 = scmp.ne.s32.totalorder %s261, %s263
    %p270 = scmp.eq.s32.totalorder %s26, 3
    %p271 = por %p269, %p270
    %p272 = scmp.ne.s32.totalorder %s263, %s264
    %p273 = scmp.eq.s32.totalorder %s26, 0
    %p274 = por %p272, %p273
    %p275 = scmp.ne.s32.totalorder %s263, %s264
    %p276 = scmp.eq.s32.totalorder %s27, 3
    %p277 = por %p275, %p276
    %p279 = scmp.ne.s32.totalorder %s264, %s278
    %p280 = scmp.eq.s32.totalorder %s27, 0
    %p281 = por %p279, %p280
    %s283 = sadd.s32 %s282, 1
    %p286 = scmp.eq.s32.totalorder %s21, 3
    %p287 = scmp.ne.s32.totalorder %s282, %s284
    %p288 = scmp.eq.s32.totalorder %s21, 0
    %p289 = por %p287, %p288
    %p290 = scmp.ne.s32.totalorder %s282, %s284
    %p291 = scmp.eq.s32.totalorder %s26, 3
    %p292 = por %p290, %p291
    %p293 = scmp.ne.s32.totalorder %s284, %s285
    %p294 = scmp.eq.s32.totalorder %s26, 0
    %p295 = por %p293, %p294
    %p296 = scmp.ne.s32.totalorder %s284, %s285
    %p297 = scmp.eq.s32.totalorder %s27, 3
    %p298 = por %p296, %p297
    %p300 = scmp.ne.s32.totalorder %s285, %s299
    %p301 = scmp.eq.s32.totalorder %s27, 0
    %p302 = por %p300, %p301
    %s304 = sadd.s32 %s303, 1
    %p307 = scmp.eq.s32.totalorder %s21, 3
    %p308 = scmp.ne.s32.totalorder %s303, %s305
    %p309 = scmp.eq.s32.totalorder %s21, 0
    %p310 = por %p308, %p309
    %p311 = scmp.ne.s32.totalorder %s303, %s305
    %p312 = scmp.eq.s32.totalorder %s26, 3
    %p313 = por %p311, %p312
    %p314 = scmp.ne.s32.totalorder %s305, %s306
    %p315 = scmp.eq.s32.totalorder %s26, 0
    %p316 = por %p314, %p315
    %p317 = scmp.ne.s32.totalorder %s305, %s306
    %p318 = scmp.eq.s32.totalorder %s27, 3
    %p319 = por %p317, %p318
    %p321 = scmp.ne.s32.totalorder %s306, %s320
    %p322 = scmp.eq.s32.totalorder %s27, 0
    %p323 = por %p321, %p322
    %s325 = sadd.s32 %s324, 1
    %p328 = scmp.eq.s32.totalorder %s21, 3
    %p329 = scmp.ne.s32.totalorder %s324, %s326
    %p330 = scmp.eq.s32.totalorder %s21, 0
    %p331 = por %p329, %p330
    %p332 = scmp.ne.s32.totalorder %s324, %s326
    %p333 = scmp.eq.s32.totalorder %s26, 3
    %p334 = por %p332, %p333
    %p335 = scmp.ne.s32.totalorder %s326, %s327
    %p336 = scmp.eq.s32.totalorder %s26, 0
    %p337 = por %p335, %p336
    %p338 = scmp.ne.s32.totalorder %s326, %s327
    %p339 = scmp.eq.s32.totalorder %s27, 3
    %p340 = por %p338, %p339
    %p342 = scmp.ne.s32.totalorder %s327, %s341
    %p343 = scmp.eq.s32.totalorder %s27, 0
    %p344 = por %p342, %p343
    %s345 = ssub.s32 %s28, %s40
    %s346 = ssub.s32 %s29, %s36
    %s347 = sor.u32 %s345, %s346
    %p348 = scmp.eq.s32.totalorder %s347, 0
    %s350 = sadd.s32 %s349, 1
    %s351 = scalar_select %p348, %s349, %s350
    %p354 = pneg %p348
    %p355 = scmp.eq.s32.totalorder %s21, 3
    %p356 = por %p354, %p355
    %p357 = scmp.ne.s32.totalorder %s349, %s352
    %p358 = scmp.eq.s32.totalorder %s21, 0
    %p359 = por %p357, %p358
    %p360 = scmp.ne.s32.totalorder %s349, %s352
    %p361 = scmp.eq.s32.totalorder %s26, 3
    %p362 = por %p360, %p361
    %p363 = scmp.ne.s32.totalorder %s352, %s353
    %p364 = scmp.eq.s32.totalorder %s26, 0
    %p365 = por %p363, %p364
    %p366 = scmp.ne.s32.totalorder %s352, %s353
    %p367 = scmp.eq.s32.totalorder %s27, 3
    %p368 = por %p366, %p367
    %p370 = scmp.ne.s32.totalorder %s353, %s369
    %p371 = scmp.eq.s32.totalorder %s27, 0
    %p372 = por %p370, %p371
    %s373 = ssub.s32 %s28, %s40
    %s374 = ssub.s32 %s29, %s36
    %s375 = sor.u32 %s373, %s374
    %p376 = scmp.eq.s32.totalorder %s375, 0
    %s378 = sadd.s32 %s377, 1
    %s379 = scalar_select %p376, %s377, %s378
    %p382 = pneg %p376
    %p383 = scmp.eq.s32.totalorder %s21, 3
    %p384 = por %p382, %p383
    %p385 = scmp.ne.s32.totalorder %s377, %s380
    %p386 = scmp.eq.s32.totalorder %s21, 0
    %p387 = por %p385, %p386
    %p388 = scmp.ne.s32.totalorder %s377, %s380
    %p389 = scmp.eq.s32.totalorder %s26, 3
    %p390 = por %p388, %p389
    %p391 = scmp.ne.s32.totalorder %s380, %s381
    %p392 = scmp.eq.s32.totalorder %s26, 0
    %p393 = por %p391, %p392
    %p394 = scmp.ne.s32.totalorder %s380, %s381
    %p395 = scmp.eq.s32.totalorder %s27, 3
    %p396 = por %p394, %p395
    %p398 = scmp.ne.s32.totalorder %s381, %s397
    %p399 = scmp.eq.s32.totalorder %s27, 0
    %p400 = por %p398, %p399
    %p401 = scmp.le.s32.totalorder 1, %s21
    %p402 = scmp.lt.s32.totalorder %s21, 5
    %p403 = pnand %p401, %p402
    %p404 = pneg %p403
    // Predicated region
    $region9: #{varnet_cascade.5} parent=5 // pred_check
      _
    $region10: #{varnet_cascade.5} parent=5 // pred_check_branch
      %406 = sbr.rel (%p403) target = $region12
    $region11: #{varnet_cascade.5} parent=5 // pred_region
      %s407 = ssub.s32 %s21, 1
      // Predicated region
      $region13: #{varnet_cascade.5} parent=11 // pred_check
        %p408 = pneg %p59
      $region14: #{varnet_cascade.5} parent=11 // pred_check_branch
        %410 = sbr.rel (%p408) target = $region16
      $region15: #{varnet_cascade.5} parent=11 // pred_region
        %p411 = scmp.lt.s32.totalorder %s30, 1
        %s412 = scalar_select %p411, %s30, 1
        %s413 = smul.addr %s412, 4
        %s414 = smul.addr %s413, 8
        %s415 = scalar_lea.vmem %s0, %s414
      $region16: #{varnet_cascade.5} parent=11 // pred_fallthru
        _
      // Predicated region
      $region17: #{varnet_cascade.5} parent=11 // pred_check
        %p416 = pneg %p85
      $region18: #{varnet_cascade.5} parent=11 // pred_check_branch
        %418 = sbr.rel (%p416) target = $region20
      $region19: #{varnet_cascade.5} parent=11 // pred_region
        %p419 = scmp.lt.s32.totalorder %s30, 1
        %s420 = scalar_select %p419, %s30, 1
        %s421 = smul.addr %s420, 4
        %s422 = smul.addr %s421, 8
        %s423 = scalar_lea.vmem %s1, %s422
      $region20: #{varnet_cascade.5} parent=11 // pred_fallthru
        _
      // Predicated region
      $region21: #{varnet_cascade.5} parent=11 // pred_check
        %p424 = pneg %p274
      $region22: #{varnet_cascade.5} parent=11 // pred_check_branch
        %426 = sbr.rel (%p424) target = $region24
      $region23: #{varnet_cascade.5} parent=11 // pred_region
        _
      $region24: #{varnet_cascade.5} parent=11 // pred_fallthru
        _
      // Predicated region
      $region25: #{varnet_cascade.5} parent=11 // pred_check
        %p427 = pneg %p295
      $region26: #{varnet_cascade.5} parent=11 // pred_check_branch
        %429 = sbr.rel (%p427) target = $region28
      $region27: #{varnet_cascade.5} parent=11 // pred_region
        _
      $region28: #{varnet_cascade.5} parent=11 // pred_fallthru
        _
      // Predicated region
      $region29: #{varnet_cascade.5} parent=11 // pred_check
        %p430 = pneg %p316
      $region30: #{varnet_cascade.5} parent=11 // pred_check_branch
        %432 = sbr.rel (%p430) target = $region32
      $region31: #{varnet_cascade.5} parent=11 // pred_region
        _
      $region32: #{varnet_cascade.5} parent=11 // pred_fallthru
        _
      // Predicated region
      $region33: #{varnet_cascade.5} parent=11 // pred_check
        %p433 = pneg %p337
      $region34: #{varnet_cascade.5} parent=11 // pred_check_branch
        %435 = sbr.rel (%p433) target = $region36
      $region35: #{varnet_cascade.5} parent=11 // pred_region
        _
      $region36: #{varnet_cascade.5} parent=11 // pred_fallthru
        _
    $region12: #{varnet_cascade.5} parent=5 // pred_fallthru
      _
    %p436 = scmp.lt.s32.totalorder %s21, 4
    // Predicated region
    $region37: #{varnet_cascade.5} parent=5 // pred_check
      %p437 = pneg %p436
    $region38: #{varnet_cascade.5} parent=5 // pred_check_branch
      %439 = sbr.rel (%p437) target = $region40
    $region39: #{varnet_cascade.5} parent=5 // pred_region
      // Predicated region
      $region41: #{varnet_cascade.5} parent=39 // pred_check
        %p440 = pneg %p107
      $region42: #{varnet_cascade.5} parent=39 // pred_check_branch
        %442 = sbr.rel (%p440) target = $region44
      $region43: #{varnet_cascade.5} parent=39 // pred_region
        %s443 = smul.u32 2, %s29
        %p444 = scmp.lt.s32.totalorder %s28, 1
        %s445 = scalar_select %p444, %s28, 1
        %p446 = scmp.lt.s32.totalorder %s443, 3
        %s447 = scalar_select %p446, %s443, 3
        %s448 = smul.addr %s447, 4
        %s449 = smul.addr %s445, 16
        %s450 = sadd.s32 %s448, %s449
        %s451 = smul.addr %s450, 8
        %s452 = scalar_lea.vmem %s2, %s451
        %s453 = smul.u32 2, %s29
      $region44: #{varnet_cascade.5} parent=39 // pred_fallthru
        _
      // Predicated region
      $region45: #{varnet_cascade.5} parent=39 // pred_check
        %p454 = pneg %p135
      $region46: #{varnet_cascade.5} parent=39 // pred_check_branch
        %456 = sbr.rel (%p454) target = $region48
      $region47: #{varnet_cascade.5} parent=39 // pred_region
        %s457 = smul.u32 2, %s29
        %p458 = scmp.lt.s32.totalorder %s28, 1
        %s459 = scalar_select %p458, %s28, 1
        %p460 = scmp.lt.s32.totalorder %s457, 3
        %s461 = scalar_select %p460, %s457, 3
        %s462 = smul.addr %s461, 4
        %s463 = smul.addr %s459, 16
        %s464 = sadd.s32 %s462, %s463
        %s465 = smul.addr %s464, 8
        %s466 = scalar_lea.vmem %s3, %s465
        %s467 = smul.u32 2, %s29
      $region48: #{varnet_cascade.5} parent=39 // pred_fallthru
        _
      // Predicated region
      $region49: #{varnet_cascade.5} parent=39 // pred_check
        %p468 = pneg %p163
      $region50: #{varnet_cascade.5} parent=39 // pred_check_branch
        %470 = sbr.rel (%p468) target = $region52
      $region51: #{varnet_cascade.5} parent=39 // pred_region
        %s471 = smul.u32 2, %s29
        %p472 = scmp.lt.s32.totalorder %s28, 1
        %s473 = scalar_select %p472, %s28, 1
        %p474 = scmp.lt.s32.totalorder %s471, 3
        %s475 = scalar_select %p474, %s471, 3
        %s476 = smul.addr %s475, 4
        %s477 = smul.addr %s473, 16
        %s478 = sadd.s32 %s476, %s477
        %s479 = smul.addr %s478, 8
        %s480 = scalar_lea.vmem %s4, %s479
        %s481 = smul.u32 2, %s29
      $region52: #{varnet_cascade.5} parent=39 // pred_fallthru
        _
      // Predicated region
      $region53: #{varnet_cascade.5} parent=39 // pred_check
        %p482 = pneg %p191
      $region54: #{varnet_cascade.5} parent=39 // pred_check_branch
        %484 = sbr.rel (%p482) target = $region56
      $region55: #{varnet_cascade.5} parent=39 // pred_region
        %s485 = smul.u32 2, %s29
        %p486 = scmp.lt.s32.totalorder %s28, 1
        %s487 = scalar_select %p486, %s28, 1
        %p488 = scmp.lt.s32.totalorder %s485, 3
        %s489 = scalar_select %p488, %s485, 3
        %s490 = smul.addr %s489, 4
        %s491 = smul.addr %s487, 16
        %s492 = sadd.s32 %s490, %s491
        %s493 = smul.addr %s492, 8
        %s494 = scalar_lea.vmem %s5, %s493
        %s495 = smul.u32 2, %s29
      $region56: #{varnet_cascade.5} parent=39 // pred_fallthru
        _
      // Predicated region
      $region57: #{varnet_cascade.5} parent=39 // pred_check
        %p496 = pneg %p219
      $region58: #{varnet_cascade.5} parent=39 // pred_check_branch
        %498 = sbr.rel (%p496) target = $region60
      $region59: #{varnet_cascade.5} parent=39 // pred_region
        %s499 = smul.u32 2, %s29
        %p500 = scmp.lt.s32.totalorder %s28, 1
        %s501 = scalar_select %p500, %s28, 1
        %p502 = scmp.lt.s32.totalorder %s499, 3
        %s503 = scalar_select %p502, %s499, 3
        %s504 = smul.addr %s503, 4
        %s505 = smul.addr %s501, 16
        %s506 = sadd.s32 %s504, %s505
        %s507 = smul.addr %s506, 4
        %s508 = scalar_lea.vmem %s6, %s507
        %s509 = smul.u32 2, %s29
      $region60: #{varnet_cascade.5} parent=39 // pred_fallthru
        _
      // Predicated region
      $region61: #{varnet_cascade.5} parent=39 // pred_check
        %p510 = pneg %p247
      $region62: #{varnet_cascade.5} parent=39 // pred_check_branch
        %512 = sbr.rel (%p510) target = $region64
      $region63: #{varnet_cascade.5} parent=39 // pred_region
        %s513 = smul.u32 2, %s29
        %p514 = scmp.lt.s32.totalorder %s28, 1
        %s515 = scalar_select %p514, %s28, 1
        %p516 = scmp.lt.s32.totalorder %s513, 3
        %s517 = scalar_select %p516, %s513, 3
        %s518 = smul.addr %s517, 4
        %s519 = smul.addr %s515, 16
        %s520 = sadd.s32 %s518, %s519
        %s521 = smul.addr %s520, 4
        %s522 = scalar_lea.vmem %s7, %s521
        %s523 = smul.u32 2, %s29
      $region64: #{varnet_cascade.5} parent=39 // pred_fallthru
        _
    $region40: #{varnet_cascade.5} parent=5 // pred_fallthru
      _
    %p524 = scmp.le.s32.totalorder 1, %s21
    %p525 = scmp.lt.s32.totalorder %s21, 5
    %p526 = pnand %p524, %p525
    %p527 = pneg %p526
    // Predicated region
    $region65: #{varnet_cascade.5} parent=5 // pred_check
      _
    $region66: #{varnet_cascade.5} parent=5 // pred_check_branch
      %529 = sbr.rel (%p526) target = $region68
    $region67: #{varnet_cascade.5} parent=5 // pred_region
      %s530 = ssub.s32 %s21, 1
      %p531 = scmp.lt.s32.totalorder %s30, 1
      %s532 = scalar_select %p531, %s30, 1
      %s533 = smul.addr %s532, 4
      %s534 = smul.addr %s533, 8
      %s535 = scalar_lea.vmem %s0, %s534
      %p536 = pneg %p59
      %p537 = pneg %p56
      %p538 = scmp.lt.s32.totalorder %s30, 1
      %s539 = scalar_select %p538, %s30, 1
      %s540 = smul.addr %s539, 4
      %s541 = smul.addr %s540, 8
      %s542 = scalar_lea.vmem %s1, %s541
      %p543 = pneg %p85
      %p544 = pneg %p82
      %s545 = smul.u32 2, %s31
      %p546 = scmp.lt.s32.totalorder %s30, 1
      %s547 = scalar_select %p546, %s30, 1
      %p548 = scmp.lt.s32.totalorder %s545, 3
      %s549 = scalar_select %p548, %s545, 3
      %s550 = smul.addr %s549, 4
      %s551 = smul.addr %s547, 16
      %s552 = sadd.s32 %s550, %s551
      %s553 = smul.addr %s552, 8
      %s554 = scalar_lea.vmem %s2, %s553
      %p555 = pneg %p113
      %p556 = pneg %p110
      %s557 = smul.u32 2, %s31
      %p558 = scmp.lt.s32.totalorder %s30, 1
      %s559 = scalar_select %p558, %s30, 1
      %p560 = scmp.lt.s32.totalorder %s557, 3
      %s561 = scalar_select %p560, %s557, 3
      %s562 = smul.addr %s561, 4
      %s563 = smul.addr %s559, 16
      %s564 = sadd.s32 %s562, %s563
      %s565 = smul.addr %s564, 8
      %s566 = scalar_lea.vmem %s3, %s565
      %p567 = pneg %p141
      %p568 = pneg %p138
      %s569 = smul.u32 2, %s31
      %p570 = scmp.lt.s32.totalorder %s30, 1
      %s571 = scalar_select %p570, %s30, 1
      %p572 = scmp.lt.s32.totalorder %s569, 3
      %s573 = scalar_select %p572, %s569, 3
      %s574 = smul.addr %s573, 4
      %s575 = smul.addr %s571, 16
      %s576 = sadd.s32 %s574, %s575
      %s577 = smul.addr %s576, 8
      %s578 = scalar_lea.vmem %s4, %s577
      %p579 = pneg %p169
      %p580 = pneg %p166
      %s581 = smul.u32 2, %s31
      %p582 = scmp.lt.s32.totalorder %s30, 1
      %s583 = scalar_select %p582, %s30, 1
      %p584 = scmp.lt.s32.totalorder %s581, 3
      %s585 = scalar_select %p584, %s581, 3
      %s586 = smul.addr %s585, 4
      %s587 = smul.addr %s583, 16
      %s588 = sadd.s32 %s586, %s587
      %s589 = smul.addr %s588, 8
      %s590 = scalar_lea.vmem %s5, %s589
      %p591 = pneg %p197
      %p592 = pneg %p194
      %s593 = smul.u32 2, %s31
      %p594 = scmp.lt.s32.totalorder %s30, 1
      %s595 = scalar_select %p594, %s30, 1
      %p596 = scmp.lt.s32.totalorder %s593, 3
      %s597 = scalar_select %p596, %s593, 3
      %s598 = smul.addr %s597, 4
      %s599 = smul.addr %s595, 16
      %s600 = sadd.s32 %s598, %s599
      %s601 = smul.addr %s600, 4
      %s602 = scalar_lea.vmem %s6, %s601
      %p603 = pneg %p225
      %p604 = pneg %p222
      %s605 = smul.u32 2, %s31
      %p606 = scmp.lt.s32.totalorder %s30, 1
      %s607 = scalar_select %p606, %s30, 1
      %p608 = scmp.lt.s32.totalorder %s605, 3
      %s609 = scalar_select %p608, %s605, 3
      %s610 = smul.addr %s609, 4
      %s611 = smul.addr %s607, 16
      %s612 = sadd.s32 %s610, %s611
      %s613 = smul.addr %s612, 4
      %s614 = scalar_lea.vmem %s7, %s613
      %p615 = pneg %p253
      %p616 = pneg %p250
      %p617 = pneg %p274
      %p618 = pneg %p271
      %p619 = pneg %p295
      %p620 = pneg %p292
      %p621 = pneg %p316
      %p622 = pneg %p313
      %p623 = pneg %p337
      %p624 = pneg %p334
      %p625 = pneg %p365
      %p626 = pneg %p362
      %s627 = smul.u32 2, %s31
      %p628 = scmp.lt.s32.totalorder %s30, 1
      %s629 = scalar_select %p628, %s30, 1
      %p630 = scmp.lt.s32.totalorder %s627, 3
      %s631 = scalar_select %p630, %s627, 3
      %s632 = smul.addr %s631, 4
      %s633 = smul.addr %s629, 16
      %s634 = sadd.s32 %s632, %s633
      %s635 = smul.addr %s634, 8
      %s636 = scalar_lea.vmem %s12, %s635
      %p637 = pneg %p393
      %p638 = pneg %p390
      %s639 = smul.u32 2, %s31
      %p640 = scmp.lt.s32.totalorder %s30, 1
      %s641 = scalar_select %p640, %s30, 1
      %p642 = scmp.lt.s32.totalorder %s639, 3
      %s643 = scalar_select %p642, %s639, 3
      %s644 = smul.addr %s643, 4
      %s645 = smul.addr %s641, 16
      %s646 = sadd.s32 %s644, %s645
      %s647 = smul.addr %s646, 8
      %s648 = scalar_lea.vmem %s13, %s647
      %p649 = scmp.lt.s32.totalorder %s30, 1
      %s650 = scalar_select %p649, %s30, 1
      %s651 = smul.addr %s650, 4
      %s652 = smul.addr %s651, 8
      %s653 = scalar_lea.vmem %s0, %s652
      %p654 = scmp.lt.s32.totalorder %s30, 1
      %s655 = scalar_select %p654, %s30, 1
      %s656 = smul.addr %s655, 4
      %s657 = smul.addr %s656, 8
      %s658 = scalar_lea.vmem %s1, %s657
      %s659 = smul.u32 2, %s31
      %p660 = scmp.lt.s32.totalorder %s30, 1
      %s661 = scalar_select %p660, %s30, 1
      %p662 = scmp.lt.s32.totalorder %s659, 3
      %s663 = scalar_select %p662, %s659, 3
      %s664 = smul.addr %s663, 4
      %s665 = smul.addr %s661, 16
      %s666 = sadd.s32 %s664, %s665
      %s667 = smul.addr %s666, 8
      %s668 = scalar_lea.vmem %s2, %s667
      %s669 = smul.u32 2, %s31
      %s670 = smul.u32 2, %s31
      %p671 = scmp.lt.s32.totalorder %s30, 1
      %s672 = scalar_select %p671, %s30, 1
      %p673 = scmp.lt.s32.totalorder %s670, 3
      %s674 = scalar_select %p673, %s670, 3
      %s675 = smul.addr %s674, 4
      %s676 = smul.addr %s672, 16
      %s677 = sadd.s32 %s675, %s676
      %s678 = smul.addr %s677, 8
      %s679 = scalar_lea.vmem %s3, %s678
      %s680 = smul.u32 2, %s31
      %s681 = smul.u32 2, %s31
      %p682 = scmp.lt.s32.totalorder %s30, 1
      %s683 = scalar_select %p682, %s30, 1
      %p684 = scmp.lt.s32.totalorder %s681, 3
      %s685 = scalar_select %p684, %s681, 3
      %s686 = smul.addr %s685, 4
      %s687 = smul.addr %s683, 16
      %s688 = sadd.s32 %s686, %s687
      %s689 = smul.addr %s688, 8
      %s690 = scalar_lea.vmem %s4, %s689
      %s691 = smul.u32 2, %s31
      %s692 = smul.u32 2, %s31
      %p693 = scmp.lt.s32.totalorder %s30, 1
      %s694 = scalar_select %p693, %s30, 1
      %p695 = scmp.lt.s32.totalorder %s692, 3
      %s696 = scalar_select %p695, %s692, 3
      %s697 = smul.addr %s696, 4
      %s698 = smul.addr %s694, 16
      %s699 = sadd.s32 %s697, %s698
      %s700 = smul.addr %s699, 8
      %s701 = scalar_lea.vmem %s5, %s700
      %s702 = smul.u32 2, %s31
      %s703 = smul.u32 2, %s31
      %p704 = scmp.lt.s32.totalorder %s30, 1
      %s705 = scalar_select %p704, %s30, 1
      %p706 = scmp.lt.s32.totalorder %s703, 3
      %s707 = scalar_select %p706, %s703, 3
      %s708 = smul.addr %s707, 4
      %s709 = smul.addr %s705, 16
      %s710 = sadd.s32 %s708, %s709
      %s711 = smul.addr %s710, 4
      %s712 = scalar_lea.vmem %s6, %s711
      %s713 = smul.u32 2, %s31
      %s714 = smul.u32 2, %s31
      %p715 = scmp.lt.s32.totalorder %s30, 1
      %s716 = scalar_select %p715, %s30, 1
      %p717 = scmp.lt.s32.totalorder %s714, 3
      %s718 = scalar_select %p717, %s714, 3
      %s719 = smul.addr %s718, 4
      %s720 = smul.addr %s716, 16
      %s721 = sadd.s32 %s719, %s720
      %s722 = smul.addr %s721, 4
      %s723 = scalar_lea.vmem %s7, %s722
      %s724 = smul.u32 2, %s31
      %s725 = smul.u32 2, %s31
      %p726 = scmp.lt.s32.totalorder %s30, 1
      %s727 = scalar_select %p726, %s30, 1
      %p728 = scmp.lt.s32.totalorder %s725, 3
      %s729 = scalar_select %p728, %s725, 3
      %s730 = smul.addr %s729, 4
      %s731 = smul.addr %s727, 16
      %s732 = sadd.s32 %s730, %s731
      %s733 = smul.addr %s732, 8
      %s734 = scalar_lea.vmem %s12, %s733
      %s735 = smul.u32 2, %s31
      %s736 = smul.u32 2, %s31
      %p737 = scmp.lt.s32.totalorder %s30, 1
      %s738 = scalar_select %p737, %s30, 1
      %p739 = scmp.lt.s32.totalorder %s736, 3
      %s740 = scalar_select %p739, %s736, 3
      %s741 = smul.addr %s740, 4
      %s742 = smul.addr %s738, 16
      %s743 = sadd.s32 %s741, %s742
      %s744 = smul.addr %s743, 8
      %s745 = scalar_lea.vmem %s13, %s744
      %s746 = smul.u32 2, %s31
      %v748 = vld [vmem:[%s9] sm:$0xf]
      %v749 = vld [vmem:[%s9 + $0x4] sm:$0xf]
      %v750 = vld [vmem:[%s9 + $0x8] sm:$0xf]
      %v751 = vld [vmem:[%s9 + $0xc] sm:$0xf]
      %s752 = scalar_lea.vmem %s9, 16
      %v753 = vld [vmem:[%s752] sm:$0xf]
      %v754 = vld [vmem:[%s752 + $0x4] sm:$0xf]
      %v755 = vld [vmem:[%s752 + $0x8] sm:$0xf]
      %v756 = vld [vmem:[%s752 + $0xc] sm:$0xf]
      %v757 = vld [vmem:[%s10] sm:$0xf]
      %v758 = vld [vmem:[%s10 + $0x4] sm:$0xf]
      %s759 = scalar_lea.vmem %s10, 8
      %v760 = vld [vmem:[%s759] sm:$0xf]
      %v761 = vld [vmem:[%s759 + $0x4] sm:$0xf]
      %v762 = vld [vmem:[%s653] sm:$0xff]
      %v763 = vld [vmem:[%s653 + $0x8] sm:$0xff]
      %v764 = vld [vmem:[%s653 + $0x10] sm:$0xff]
      %v765 = vld [vmem:[%s653 + $0x18] sm:$0xff]
      %v766 = vld [vmem:[%s658] sm:$0xff]
      %v767 = vld [vmem:[%s658 + $0x8] sm:$0xff]
      %v768 = vld [vmem:[%s658 + $0x10] sm:$0xff]
      %v769 = vld [vmem:[%s658 + $0x18] sm:$0xff]
      %v770 = vld [vmem:[%s8] sm:$0x1]
      %vm771 = vcmp.ne.f32.partialorder %v770, 0.0
      %s772 = sld [smem:[#allocation2]]
      %v773 = vld [vmem:[%s712] sm:$0xf]
      %v774 = vld [vmem:[%s712 + $0x4] sm:$0xf]
      %v775 = vld [vmem:[%s712 + $0x8] sm:$0xf]
      %v776 = vld [vmem:[%s712 + $0xc] sm:$0xf]
      %v777 = vunpack.c.l.bf16 %v773
      %v778 = vunpack.c.l.bf16 %v774
      %v779 = vunpack.c.l.bf16 %v775
      %v780 = vunpack.c.l.bf16 %v776
      %v781 = vld [vmem:[%s723] sm:$0xf]
      %v782 = vld [vmem:[%s723 + $0x4] sm:$0xf]
      %v783 = vld [vmem:[%s723 + $0x8] sm:$0xf]
      %v784 = vld [vmem:[%s723 + $0xc] sm:$0xf]
      %v785 = vunpack.c.l.bf16 %v781
      %v786 = vunpack.c.l.bf16 %v782
      %v787 = vunpack.c.l.bf16 %v783
      %v788 = vunpack.c.l.bf16 %v784
      %v789 = vmul.f32 %v762, %v777
      %v790 = vmul.f32 %v763, %v778
      %v791 = vmul.f32 %v764, %v779
      %v792 = vmul.f32 %v765, %v780
      %v793 = vmul.f32 %v766, %v785
      %v794 = vmul.f32 %v767, %v786
      %v795 = vmul.f32 %v768, %v787
      %v796 = vmul.f32 %v769, %v788
      %v797 = vsub.f32 %v789, %v793
      %v798 = vsub.f32 %v790, %v794
      %v799 = vsub.f32 %v791, %v795
      %v800 = vsub.f32 %v792, %v796
      %v801 = vmul.f32 %v762, %v785
      %v802 = vmul.f32 %v763, %v786
      %v803 = vmul.f32 %v764, %v787
      %v804 = vmul.f32 %v765, %v788
      %v805 = vmul.f32 %v766, %v777
      %v806 = vmul.f32 %v767, %v778
      %v807 = vmul.f32 %v768, %v779
      %v808 = vmul.f32 %v769, %v780
      %v809 = vadd.f32 %v801, %v805
      %v810 = vadd.f32 %v802, %v806
      %v811 = vadd.f32 %v803, %v807
      %v812 = vadd.f32 %v804, %v808
      %v813 = vpack.c.bf16 %v798, %v797
      %v814 = vpack.c.bf16 %v800, %v799
      %v815 = vpack.c.bf16 %v810, %v809
      %v816 = vpack.c.bf16 %v812, %v811
      %v821 = vunpack.c.l.b16 %v748
      %v822 = vunpack.c.l.b16 %v749
      %v823 = vunpack.c.l.b16 %v750
      %v824 = vunpack.c.l.b16 %v751
      %v825 = vpack.c.b16 %v822, %v821
      %v826 = vpack.c.b16 %v824, %v823
      %vm827 = vcmask 261120
      %v829 = vsel %vm827, %v825, 0
      %v832 = vsel %vm827, %v826, 0
      %834 = vmatprep.subr.bf16.mxu0 0
      %835 = vmatpush1.bf16.msra.mxu0 0
      %836 = vmatprep.subr.bf16.mxu0 0
      %837 = vmatpush1.bf16.msra.mxu0 0
      %838 = vmatprep.subr.bf16.mxu0 0
      %839 = vmatpush1.bf16.msra.mxu0 0
      %840 = vmatprep.subr.bf16.mxu0 0
      %841 = vmatpush1.bf16.msra.mxu0 0
      %842 = vmatprep.subr.bf16.mxu0 0
      %843 = vmatpush1.bf16.msra.mxu0 0
      %844 = vmatprep.subr.bf16.mxu0 0
      %845 = vmatpush1.bf16.msra.mxu0 0
      %846 = vmatprep.subr.bf16.mxu0 0
      %847 = vmatpush1.bf16.msra.mxu0 %v814
      %848 = vmatprep.subr.bf16.mxu0 0
      %849 = vmatpush1.bf16.msra.mxu0 %v813
      %850 = vmatprep.subr.bf16.mxu0 0
      %851 = vmatpush2.bf16.msra.mxu0 0
      %852 = vmatprep.subr.bf16.mxu0 0
      %853 = vmatpush2.bf16.msra.mxu0 0
      %854 = vmatprep.subr.bf16.mxu0 0
      %855 = vmatpush2.bf16.msra.mxu0 0
      %856 = vmatprep.subr.bf16.mxu0 0
      %857 = vmatpush2.bf16.msra.mxu0 0
      %858 = vmatprep.subr.bf16.mxu0 0
      %859 = vmatpush2.bf16.msra.mxu0 0
      %860 = vmatprep.subr.bf16.mxu0 0
      %861 = vmatpush2.bf16.msra.mxu0 0
      %862 = vmatprep.subr.bf16.mxu0 0
      %863 = vmatpush2.bf16.msra.mxu0 0
      %864 = vmatprep.subr.bf16.mxu0 0
      %865 = vmatpush2.bf16.msra.mxu0 0
      %866 = vmatprep.mubr.bf16.mxu0 0
      %867 = vmatmul.mubr.bf16.gmra.mxu0 %v829
      %v868 = vpop.f32.mrf.mxu0
      %v869 = vadd.f32 0.0, %v868
      %v870 = vpop.f32.mrf.mxu0
      %v871 = vpop.f32.mrf.mxu0
      %v872 = vadd.f32 0.0, %v871
      %v873 = vpop.f32.mrf.mxu0
      %874 = vmatprep.mubr.bf16.mxu0 0
      %875 = vmatmul.mubr.bf16.gmra.mxu0 %v832
      %v876 = vpop.f32.mrf.mxu0
      %v877 = vadd.f32 0.0, %v876
      %v878 = vpop.f32.mrf.mxu0
      %v879 = vpop.f32.mrf.mxu0
      %v880 = vadd.f32 0.0, %v879
      %v881 = vpop.f32.mrf.mxu0
      %882 = vdwg.mxu0
      %v887 = vunpack.c.l.b16 %v753
      %v888 = vunpack.c.l.b16 %v754
      %v889 = vunpack.c.l.b16 %v755
      %v890 = vunpack.c.l.b16 %v756
      %v891 = vpack.c.b16 %v888, %v887
      %v892 = vpack.c.b16 %v890, %v889
      %v894 = vsel %vm827, %v891, 0
      %v897 = vsel %vm827, %v892, 0
      %899 = vmatprep.subr.bf16.mxu0 0
      %900 = vmatpush1.bf16.msra.mxu0 0
      %901 = vmatprep.subr.bf16.mxu0 0
      %902 = vmatpush1.bf16.msra.mxu0 0
      %903 = vmatprep.subr.bf16.mxu0 0
      %904 = vmatpush1.bf16.msra.mxu0 0
      %905 = vmatprep.subr.bf16.mxu0 0
      %906 = vmatpush1.bf16.msra.mxu0 0
      %907 = vmatprep.subr.bf16.mxu0 0
      %908 = vmatpush1.bf16.msra.mxu0 0
      %909 = vmatprep.subr.bf16.mxu0 0
      %910 = vmatpush1.bf16.msra.mxu0 0
      %911 = vmatprep.subr.bf16.mxu0 0
      %912 = vmatpush1.bf16.msra.mxu0 %v816
      %913 = vmatprep.subr.bf16.mxu0 0
      %914 = vmatpush1.bf16.msra.mxu0 %v815
      %915 = vmatprep.subr.bf16.mxu0 0
      %916 = vmatpush2.bf16.msra.mxu0 0
      %917 = vmatprep.subr.bf16.mxu0 0
      %918 = vmatpush2.bf16.msra.mxu0 0
      %919 = vmatprep.subr.bf16.mxu0 0
      %920 = vmatpush2.bf16.msra.mxu0 0
      %921 = vmatprep.subr.bf16.mxu0 0
      %922 = vmatpush2.bf16.msra.mxu0 0
      %923 = vmatprep.subr.bf16.mxu0 0
      %924 = vmatpush2.bf16.msra.mxu0 0
      %925 = vmatprep.subr.bf16.mxu0 0
      %926 = vmatpush2.bf16.msra.mxu0 0
      %927 = vmatprep.subr.bf16.mxu0 0
      %928 = vmatpush2.bf16.msra.mxu0 0
      %929 = vmatprep.subr.bf16.mxu0 0
      %930 = vmatpush2.bf16.msra.mxu0 0
      %931 = vmatprep.mubr.bf16.mxu0 0
      %932 = vmatmul.mubr.bf16.gmra.mxu0 %v894
      %v933 = vpop.f32.mrf.mxu0
      %v934 = vadd.f32 0.0, %v933
      %v935 = vpop.f32.mrf.mxu0
      %v936 = vpop.f32.mrf.mxu0
      %v937 = vadd.f32 0.0, %v936
      %v938 = vpop.f32.mrf.mxu0
      %939 = vmatprep.mubr.bf16.mxu0 0
      %940 = vmatmul.mubr.bf16.gmra.mxu0 %v897
      %v941 = vpop.f32.mrf.mxu0
      %v942 = vadd.f32 0.0, %v941
      %v943 = vpop.f32.mrf.mxu0
      %v944 = vpop.f32.mrf.mxu0
      %v945 = vadd.f32 0.0, %v944
      %v946 = vpop.f32.mrf.mxu0
      %947 = vdwg.mxu0
      %v948 = vsub.f32 %v869, %v934
      %v949 = vsub.f32 %v872, %v937
      %v950 = vsub.f32 %v877, %v942
      %v951 = vsub.f32 %v880, %v945
      %952 = vmatprep.subr.bf16.mxu0 0
      %953 = vmatpush1.bf16.msra.mxu0 0
      %954 = vmatprep.subr.bf16.mxu0 0
      %955 = vmatpush1.bf16.msra.mxu0 0
      %956 = vmatprep.subr.bf16.mxu0 0
      %957 = vmatpush1.bf16.msra.mxu0 0
      %958 = vmatprep.subr.bf16.mxu0 0
      %959 = vmatpush1.bf16.msra.mxu0 0
      %960 = vmatprep.subr.bf16.mxu0 0
      %961 = vmatpush1.bf16.msra.mxu0 0
      %962 = vmatprep.subr.bf16.mxu0 0
      %963 = vmatpush1.bf16.msra.mxu0 0
      %964 = vmatprep.subr.bf16.mxu0 0
      %965 = vmatpush1.bf16.msra.mxu0 %v814
      %966 = vmatprep.subr.bf16.mxu0 0
      %967 = vmatpush1.bf16.msra.mxu0 %v813
      %968 = vmatprep.subr.bf16.mxu0 0
      %969 = vmatpush2.bf16.msra.mxu0 0
      %970 = vmatprep.subr.bf16.mxu0 0
      %971 = vmatpush2.bf16.msra.mxu0 0
      %972 = vmatprep.subr.bf16.mxu0 0
      %973 = vmatpush2.bf16.msra.mxu0 0
      %974 = vmatprep.subr.bf16.mxu0 0
      %975 = vmatpush2.bf16.msra.mxu0 0
      %976 = vmatprep.subr.bf16.mxu0 0
      %977 = vmatpush2.bf16.msra.mxu0 0
      %978 = vmatprep.subr.bf16.mxu0 0
      %979 = vmatpush2.bf16.msra.mxu0 0
      %980 = vmatprep.subr.bf16.mxu0 0
      %981 = vmatpush2.bf16.msra.mxu0 0
      %982 = vmatprep.subr.bf16.mxu0 0
      %983 = vmatpush2.bf16.msra.mxu0 0
      %984 = vmatprep.mubr.bf16.mxu0 0
      %985 = vmatmul.mubr.bf16.gmra.mxu0 %v894
      %v986 = vpop.f32.mrf.mxu0
      %v987 = vadd.f32 0.0, %v986
      %v988 = vpop.f32.mrf.mxu0
      %v989 = vpop.f32.mrf.mxu0
      %v990 = vadd.f32 0.0, %v989
      %v991 = vpop.f32.mrf.mxu0
      %992 = vmatprep.mubr.bf16.mxu0 0
      %993 = vmatmul.mubr.bf16.gmra.mxu0 %v897
      %v994 = vpop.f32.mrf.mxu0
      %v995 = vadd.f32 0.0, %v994
      %v996 = vpop.f32.mrf.mxu0
      %v997 = vpop.f32.mrf.mxu0
      %v998 = vadd.f32 0.0, %v997
      %v999 = vpop.f32.mrf.mxu0
      %1000 = vdwg.mxu0
      %1001 = vmatprep.subr.bf16.mxu0 0
      %1002 = vmatpush1.bf16.msra.mxu0 0
      %1003 = vmatprep.subr.bf16.mxu0 0
      %1004 = vmatpush1.bf16.msra.mxu0 0
      %1005 = vmatprep.subr.bf16.mxu0 0
      %1006 = vmatpush1.bf16.msra.mxu0 0
      %1007 = vmatprep.subr.bf16.mxu0 0
      %1008 = vmatpush1.bf16.msra.mxu0 0
      %1009 = vmatprep.subr.bf16.mxu0 0
      %1010 = vmatpush1.bf16.msra.mxu0 0
      %1011 = vmatprep.subr.bf16.mxu0 0
      %1012 = vmatpush1.bf16.msra.mxu0 0
      %1013 = vmatprep.subr.bf16.mxu0 0
      %1014 = vmatpush1.bf16.msra.mxu0 %v816
      %1015 = vmatprep.subr.bf16.mxu0 0
      %1016 = vmatpush1.bf16.msra.mxu0 %v815
      %1017 = vmatprep.subr.bf16.mxu0 0
      %1018 = vmatpush2.bf16.msra.mxu0 0
      %1019 = vmatprep.subr.bf16.mxu0 0
      %1020 = vmatpush2.bf16.msra.mxu0 0
      %1021 = vmatprep.subr.bf16.mxu0 0
      %1022 = vmatpush2.bf16.msra.mxu0 0
      %1023 = vmatprep.subr.bf16.mxu0 0
      %1024 = vmatpush2.bf16.msra.mxu0 0
      %1025 = vmatprep.subr.bf16.mxu0 0
      %1026 = vmatpush2.bf16.msra.mxu0 0
      %1027 = vmatprep.subr.bf16.mxu0 0
      %1028 = vmatpush2.bf16.msra.mxu0 0
      %1029 = vmatprep.subr.bf16.mxu0 0
      %1030 = vmatpush2.bf16.msra.mxu0 0
      %1031 = vmatprep.subr.bf16.mxu0 0
      %1032 = vmatpush2.bf16.msra.mxu0 0
      %1033 = vmatprep.mubr.bf16.mxu0 0
      %1034 = vmatmul.mubr.bf16.gmra.mxu0 %v829
      %v1035 = vpop.f32.mrf.mxu0
      %v1036 = vadd.f32 %v987, %v1035
      %v1037 = vpop.f32.mrf.mxu0
      %v1038 = vpop.f32.mrf.mxu0
      %v1039 = vadd.f32 %v990, %v1038
      %v1040 = vpop.f32.mrf.mxu0
      %1041 = vmatprep.mubr.bf16.mxu0 0
      %1042 = vmatmul.mubr.bf16.gmra.mxu0 %v832
      %v1043 = vpop.f32.mrf.mxu0
      %v1044 = vadd.f32 %v995, %v1043
      %v1045 = vpop.f32.mrf.mxu0
      %v1046 = vpop.f32.mrf.mxu0
      %v1047 = vadd.f32 %v998, %v1046
      %v1048 = vpop.f32.mrf.mxu0
      %1049 = vdwg.mxu0
      %v1050 = vpack.c.bf16 %v949, %v948
      %v1051 = vpack.c.bf16 %v951, %v950
      %v1052 = vpack.c.bf16 %v1039, %v1036
      %v1053 = vpack.c.bf16 %v1047, %v1044
      %v1056 = vunpack.c.l.b16 %v757
      %v1057 = vunpack.c.l.b16 %v758
      %v1058 = vpack.c.b16 %v1057, %v1056
      %vm1060 = vcmask 130048
      %v1062 = vsel %vm1060, %v1050, 0
      %v1065 = vsel %vm1060, %v1051, 0
      %1067 = vmatprep.subr.bf16.mxu0 0
      %1068 = vmatpush1.bf16.msra.mxu0 0
      %1069 = vmatprep.subr.bf16.mxu0 0
      %1070 = vmatpush1.bf16.msra.mxu0 0
      %1071 = vmatprep.subr.bf16.mxu0 0
      %1072 = vmatpush1.bf16.msra.mxu0 0
      %1073 = vmatprep.subr.bf16.mxu0 0
      %1074 = vmatpush1.bf16.msra.mxu0 0
      %1075 = vmatprep.subr.bf16.mxu0 0
      %1076 = vmatpush1.bf16.msra.mxu0 0
      %1077 = vmatprep.subr.bf16.mxu0 0
      %1078 = vmatpush1.bf16.msra.mxu0 0
      %1079 = vmatprep.subr.bf16.mxu0 0
      %1080 = vmatpush1.bf16.msra.mxu0 0
      %1081 = vmatprep.subr.bf16.mxu0 0
      %1082 = vmatpush1.bf16.msra.mxu0 %v1058
      %1083 = vmatprep.subr.bf16.mxu0 0
      %1084 = vmatpush2.bf16.msra.mxu0 0
      %1085 = vmatprep.subr.bf16.mxu0 0
      %1086 = vmatpush2.bf16.msra.mxu0 0
      %1087 = vmatprep.subr.bf16.mxu0 0
      %1088 = vmatpush2.bf16.msra.mxu0 0
      %1089 = vmatprep.subr.bf16.mxu0 0
      %1090 = vmatpush2.bf16.msra.mxu0 0
      %1091 = vmatprep.subr.bf16.mxu0 0
      %1092 = vmatpush2.bf16.msra.mxu0 0
      %1093 = vmatprep.subr.bf16.mxu0 0
      %1094 = vmatpush2.bf16.msra.mxu0 0
      %1095 = vmatprep.subr.bf16.mxu0 0
      %1096 = vmatpush2.bf16.msra.mxu0 0
      %1097 = vmatprep.subr.bf16.mxu0 0
      %1098 = vmatpush2.bf16.msra.mxu0 0
      %1099 = vmatprep.mubr.bf16.mxu0 0
      %1100 = vmatmul.mubr.bf16.gmra.mxu0 %v1062
      %v1101 = vpop.f32.mrf.mxu0
      %v1102 = vadd.f32 0.0, %v1101
      %v1103 = vpop.f32.mrf.mxu0
      %v1104 = vpop.f32.mrf.mxu0
      %v1105 = vadd.f32 0.0, %v1104
      %v1106 = vpop.f32.mrf.mxu0
      %1107 = vmatprep.mubr.bf16.mxu0 0
      %1108 = vmatmul.mubr.bf16.gmra.mxu0 %v1065
      %v1109 = vpop.f32.mrf.mxu0
      %v1110 = vadd.f32 0.0, %v1109
      %v1111 = vpop.f32.mrf.mxu0
      %v1112 = vpop.f32.mrf.mxu0
      %v1113 = vadd.f32 0.0, %v1112
      %v1114 = vpop.f32.mrf.mxu0
      %1115 = vdwg.mxu0
      %v1118 = vunpack.c.l.b16 %v760
      %v1119 = vunpack.c.l.b16 %v761
      %v1120 = vpack.c.b16 %v1119, %v1118
      %v1123 = vsel %vm1060, %v1052, 0
      %v1126 = vsel %vm1060, %v1053, 0
      %1128 = vmatprep.subr.bf16.mxu0 0
      %1129 = vmatpush1.bf16.msra.mxu0 0
      %1130 = vmatprep.subr.bf16.mxu0 0
      %1131 = vmatpush1.bf16.msra.mxu0 0
      %1132 = vmatprep.subr.bf16.mxu0 0
      %1133 = vmatpush1.bf16.msra.mxu0 0
      %1134 = vmatprep.subr.bf16.mxu0 0
      %1135 = vmatpush1.bf16.msra.mxu0 0
      %1136 = vmatprep.subr.bf16.mxu0 0
      %1137 = vmatpush1.bf16.msra.mxu0 0
      %1138 = vmatprep.subr.bf16.mxu0 0
      %1139 = vmatpush1.bf16.msra.mxu0 0
      %1140 = vmatprep.subr.bf16.mxu0 0
      %1141 = vmatpush1.bf16.msra.mxu0 0
      %1142 = vmatprep.subr.bf16.mxu0 0
      %1143 = vmatpush1.bf16.msra.mxu0 %v1120
      %1144 = vmatprep.subr.bf16.mxu0 0
      %1145 = vmatpush2.bf16.msra.mxu0 0
      %1146 = vmatprep.subr.bf16.mxu0 0
      %1147 = vmatpush2.bf16.msra.mxu0 0
      %1148 = vmatprep.subr.bf16.mxu0 0
      %1149 = vmatpush2.bf16.msra.mxu0 0
      %1150 = vmatprep.subr.bf16.mxu0 0
      %1151 = vmatpush2.bf16.msra.mxu0 0
      %1152 = vmatprep.subr.bf16.mxu0 0
      %1153 = vmatpush2.bf16.msra.mxu0 0
      %1154 = vmatprep.subr.bf16.mxu0 0
      %1155 = vmatpush2.bf16.msra.mxu0 0
      %1156 = vmatprep.subr.bf16.mxu0 0
      %1157 = vmatpush2.bf16.msra.mxu0 0
      %1158 = vmatprep.subr.bf16.mxu0 0
      %1159 = vmatpush2.bf16.msra.mxu0 0
      %1160 = vmatprep.mubr.bf16.mxu0 0
      %1161 = vmatmul.mubr.bf16.gmra.mxu0 %v1123
      %v1162 = vpop.f32.mrf.mxu0
      %v1163 = vadd.f32 0.0, %v1162
      %v1164 = vpop.f32.mrf.mxu0
      %v1165 = vpop.f32.mrf.mxu0
      %v1166 = vadd.f32 0.0, %v1165
      %v1167 = vpop.f32.mrf.mxu0
      %1168 = vmatprep.mubr.bf16.mxu0 0
      %1169 = vmatmul.mubr.bf16.gmra.mxu0 %v1126
      %v1170 = vpop.f32.mrf.mxu0
      %v1171 = vadd.f32 0.0, %v1170
      %v1172 = vpop.f32.mrf.mxu0
      %v1173 = vpop.f32.mrf.mxu0
      %v1174 = vadd.f32 0.0, %v1173
      %v1175 = vpop.f32.mrf.mxu0
      %1176 = vdwg.mxu0
      %v1177 = vsub.f32 %v1102, %v1163
      %v1178 = vsub.f32 %v1105, %v1166
      %v1179 = vsub.f32 %v1110, %v1171
      %v1180 = vsub.f32 %v1113, %v1174
      %1181 = vmatprep.subr.bf16.mxu0 0
      %1182 = vmatpush1.bf16.msra.mxu0 0
      %1183 = vmatprep.subr.bf16.mxu0 0
      %1184 = vmatpush1.bf16.msra.mxu0 0
      %1185 = vmatprep.subr.bf16.mxu0 0
      %1186 = vmatpush1.bf16.msra.mxu0 0
      %1187 = vmatprep.subr.bf16.mxu0 0
      %1188 = vmatpush1.bf16.msra.mxu0 0
      %1189 = vmatprep.subr.bf16.mxu0 0
      %1190 = vmatpush1.bf16.msra.mxu0 0
      %1191 = vmatprep.subr.bf16.mxu0 0
      %1192 = vmatpush1.bf16.msra.mxu0 0
      %1193 = vmatprep.subr.bf16.mxu0 0
      %1194 = vmatpush1.bf16.msra.mxu0 0
      %1195 = vmatprep.subr.bf16.mxu0 0
      %1196 = vmatpush1.bf16.msra.mxu0 %v1120
      %1197 = vmatprep.subr.bf16.mxu0 0
      %1198 = vmatpush2.bf16.msra.mxu0 0
      %1199 = vmatprep.subr.bf16.mxu0 0
      %1200 = vmatpush2.bf16.msra.mxu0 0
      %1201 = vmatprep.subr.bf16.mxu0 0
      %1202 = vmatpush2.bf16.msra.mxu0 0
      %1203 = vmatprep.subr.bf16.mxu0 0
      %1204 = vmatpush2.bf16.msra.mxu0 0
      %1205 = vmatprep.subr.bf16.mxu0 0
      %1206 = vmatpush2.bf16.msra.mxu0 0
      %1207 = vmatprep.subr.bf16.mxu0 0
      %1208 = vmatpush2.bf16.msra.mxu0 0
      %1209 = vmatprep.subr.bf16.mxu0 0
      %1210 = vmatpush2.bf16.msra.mxu0 0
      %1211 = vmatprep.subr.bf16.mxu0 0
      %1212 = vmatpush2.bf16.msra.mxu0 0
      %1213 = vmatprep.mubr.bf16.mxu0 0
      %1214 = vmatmul.mubr.bf16.gmra.mxu0 %v1062
      %v1215 = vpop.f32.mrf.mxu0
      %v1216 = vadd.f32 0.0, %v1215
      %v1217 = vpop.f32.mrf.mxu0
      %v1218 = vpop.f32.mrf.mxu0
      %v1219 = vadd.f32 0.0, %v1218
      %v1220 = vpop.f32.mrf.mxu0
      %1221 = vmatprep.mubr.bf16.mxu0 0
      %1222 = vmatmul.mubr.bf16.gmra.mxu0 %v1065
      %v1223 = vpop.f32.mrf.mxu0
      %v1224 = vadd.f32 0.0, %v1223
      %v1225 = vpop.f32.mrf.mxu0
      %v1226 = vpop.f32.mrf.mxu0
      %v1227 = vadd.f32 0.0, %v1226
      %v1228 = vpop.f32.mrf.mxu0
      %1229 = vdwg.mxu0
      %1230 = vmatprep.subr.bf16.mxu0 0
      %1231 = vmatpush1.bf16.msra.mxu0 0
      %1232 = vmatprep.subr.bf16.mxu0 0
      %1233 = vmatpush1.bf16.msra.mxu0 0
      %1234 = vmatprep.subr.bf16.mxu0 0
      %1235 = vmatpush1.bf16.msra.mxu0 0
      %1236 = vmatprep.subr.bf16.mxu0 0
      %1237 = vmatpush1.bf16.msra.mxu0 0
      %1238 = vmatprep.subr.bf16.mxu0 0
      %1239 = vmatpush1.bf16.msra.mxu0 0
      %1240 = vmatprep.subr.bf16.mxu0 0
      %1241 = vmatpush1.bf16.msra.mxu0 0
      %1242 = vmatprep.subr.bf16.mxu0 0
      %1243 = vmatpush1.bf16.msra.mxu0 0
      %1244 = vmatprep.subr.bf16.mxu0 0
      %1245 = vmatpush1.bf16.msra.mxu0 %v1058
      %1246 = vmatprep.subr.bf16.mxu0 0
      %1247 = vmatpush2.bf16.msra.mxu0 0
      %1248 = vmatprep.subr.bf16.mxu0 0
      %1249 = vmatpush2.bf16.msra.mxu0 0
      %1250 = vmatprep.subr.bf16.mxu0 0
      %1251 = vmatpush2.bf16.msra.mxu0 0
      %1252 = vmatprep.subr.bf16.mxu0 0
      %1253 = vmatpush2.bf16.msra.mxu0 0
      %1254 = vmatprep.subr.bf16.mxu0 0
      %1255 = vmatpush2.bf16.msra.mxu0 0
      %1256 = vmatprep.subr.bf16.mxu0 0
      %1257 = vmatpush2.bf16.msra.mxu0 0
      %1258 = vmatprep.subr.bf16.mxu0 0
      %1259 = vmatpush2.bf16.msra.mxu0 0
      %1260 = vmatprep.subr.bf16.mxu0 0
      %1261 = vmatpush2.bf16.msra.mxu0 0
      %1262 = vmatprep.mubr.bf16.mxu0 0
      %1263 = vmatmul.mubr.bf16.gmra.mxu0 %v1123
      %v1264 = vpop.f32.mrf.mxu0
      %v1265 = vadd.f32 %v1216, %v1264
      %v1266 = vpop.f32.mrf.mxu0
      %v1267 = vpop.f32.mrf.mxu0
      %v1268 = vadd.f32 %v1219, %v1267
      %v1269 = vpop.f32.mrf.mxu0
      %1270 = vmatprep.mubr.bf16.mxu0 0
      %1271 = vmatmul.mubr.bf16.gmra.mxu0 %v1126
      %v1272 = vpop.f32.mrf.mxu0
      %v1273 = vadd.f32 %v1224, %v1272
      %v1274 = vpop.f32.mrf.mxu0
      %v1275 = vpop.f32.mrf.mxu0
      %v1276 = vadd.f32 %v1227, %v1275
      %v1277 = vpop.f32.mrf.mxu0
      %1278 = vdwg.mxu0
      %v1279 = vld [vmem:[%s668] sm:$0xff]
      %v1280 = vld [vmem:[%s668 + $0x8] sm:$0xff]
      %v1281 = vld [vmem:[%s668 + $0x10] sm:$0xff]
      %v1282 = vld [vmem:[%s668 + $0x18] sm:$0xff]
      %v1283 = vld [vmem:[%s679] sm:$0xff]
      %v1284 = vld [vmem:[%s679 + $0x8] sm:$0xff]
      %v1285 = vld [vmem:[%s679 + $0x10] sm:$0xff]
      %v1286 = vld [vmem:[%s679 + $0x18] sm:$0xff]
      %v1287 = vld [vmem:[%s690] sm:$0xff]
      %v1288 = vld [vmem:[%s690 + $0x8] sm:$0xff]
      %v1289 = vld [vmem:[%s690 + $0x10] sm:$0xff]
      %v1290 = vld [vmem:[%s690 + $0x18] sm:$0xff]
      %v1291 = vld [vmem:[%s701] sm:$0xff]
      %v1292 = vld [vmem:[%s701 + $0x8] sm:$0xff]
      %v1293 = vld [vmem:[%s701 + $0x10] sm:$0xff]
      %v1294 = vld [vmem:[%s701 + $0x18] sm:$0xff]
      %v1295 = vsub.f32 %v1279, %v1287
      %v1296 = vsub.f32 %v1280, %v1288
      %v1297 = vsub.f32 %v1281, %v1289
      %v1298 = vsub.f32 %v1282, %v1290
      %v1299 = vstv %s772
      %v1300 = vmul.f32 %v1295, %v1299
      %v1301 = vmul.f32 %v1296, %v1299
      %v1302 = vmul.f32 %v1297, %v1299
      %v1303 = vmul.f32 %v1298, %v1299
      %v1304 = vsel %vm771, 1, 0
      %v1305 = vlaneseq
      %v1306 = vshrl.u32 %v1305, 7
      %v1307 = vsub.s32 0, %v1306
      %v1308 = vrot.slane %v1304, %v1307
      %vm1309 = vcmp.eq.s32.totalorder %v1308, 1
      %v1310 = vsel %vm1309, %v1300, 0.0
      %v1311 = vsel %vm1309, %v1301, 0.0
      %v1312 = vsel %vm1309, %v1302, 0.0
      %v1313 = vsel %vm1309, %v1303, 0.0
      %v1314 = vsub.f32 %v1279, %v1310
      %v1315 = vsub.f32 %v1280, %v1311
      %v1316 = vsub.f32 %v1281, %v1312
      %v1317 = vsub.f32 %v1282, %v1313
      %v1318 = vsub.f32 %v1314, %v1177
      %v1319 = vsub.f32 %v1315, %v1178
      %v1320 = vsub.f32 %v1316, %v1179
      %v1321 = vsub.f32 %v1317, %v1180
      %1322 = vst.msk [vmem:[%s734] sm:$0xff] %vm1060, %v1318
      %1323 = vst.msk [vmem:[%s734 + $0x8] sm:$0xff] %vm1060, %v1319
      %1324 = vst.msk [vmem:[%s734 + $0x10] sm:$0xff] %vm1060, %v1320
      %1325 = vst.msk [vmem:[%s734 + $0x18] sm:$0xff] %vm1060, %v1321
      %v1326 = vsub.f32 %v1283, %v1291
      %v1327 = vsub.f32 %v1284, %v1292
      %v1328 = vsub.f32 %v1285, %v1293
      %v1329 = vsub.f32 %v1286, %v1294
      %v1330 = vmul.f32 %v1326, %v1299
      %v1331 = vmul.f32 %v1327, %v1299
      %v1332 = vmul.f32 %v1328, %v1299
      %v1333 = vmul.f32 %v1329, %v1299
      %v1334 = vsel %vm1309, %v1330, 0.0
      %v1335 = vsel %vm1309, %v1331, 0.0
      %v1336 = vsel %vm1309, %v1332, 0.0
      %v1337 = vsel %vm1309, %v1333, 0.0
      %v1338 = vsub.f32 %v1283, %v1334
      %v1339 = vsub.f32 %v1284, %v1335
      %v1340 = vsub.f32 %v1285, %v1336
      %v1341 = vsub.f32 %v1286, %v1337
      %v1342 = vsub.f32 %v1338, %v1265
      %v1343 = vsub.f32 %v1339, %v1268
      %v1344 = vsub.f32 %v1340, %v1273
      %v1345 = vsub.f32 %v1341, %v1276
      %1346 = vst.msk [vmem:[%s745] sm:$0xff] %vm1060, %v1342
      %1347 = vst.msk [vmem:[%s745 + $0x8] sm:$0xff] %vm1060, %v1343
      %1348 = vst.msk [vmem:[%s745 + $0x10] sm:$0xff] %vm1060, %v1344
      %1349 = vst.msk [vmem:[%s745 + $0x18] sm:$0xff] %vm1060, %v1345
      %s1350 = scalar_lea.vmem %s712, 16
      %v1351 = vld [vmem:[%s1350] sm:$0xf]
      %v1352 = vld [vmem:[%s1350 + $0x4] sm:$0xf]
      %v1353 = vld [vmem:[%s1350 + $0x8] sm:$0xf]
      %v1354 = vld [vmem:[%s1350 + $0xc] sm:$0xf]
      %v1355 = vunpack.c.l.bf16 %v1351
      %v1356 = vunpack.c.l.bf16 %v1352
      %v1357 = vunpack.c.l.bf16 %v1353
      %v1358 = vunpack.c.l.bf16 %v1354
      %s1359 = scalar_lea.vmem %s723, 16
      %v1360 = vld [vmem:[%s1359] sm:$0xf]
      %v1361 = vld [vmem:[%s1359 + $0x4] sm:$0xf]
      %v1362 = vld [vmem:[%s1359 + $0x8] sm:$0xf]
      %v1363 = vld [vmem:[%s1359 + $0xc] sm:$0xf]
      %v1364 = vunpack.c.l.bf16 %v1360
      %v1365 = vunpack.c.l.bf16 %v1361
      %v1366 = vunpack.c.l.bf16 %v1362
      %v1367 = vunpack.c.l.bf16 %v1363
      %v1368 = vmul.f32 %v762, %v1355
      %v1369 = vmul.f32 %v763, %v1356
      %v1370 = vmul.f32 %v764, %v1357
      %v1371 = vmul.f32 %v765, %v1358
      %v1372 = vmul.f32 %v766, %v1364
      %v1373 = vmul.f32 %v767, %v1365
      %v1374 = vmul.f32 %v768, %v1366
      %v1375 = vmul.f32 %v769, %v1367
      %v1376 = vsub.f32 %v1368, %v1372
      %v1377 = vsub.f32 %v1369, %v1373
      %v1378 = vsub.f32 %v1370, %v1374
      %v1379 = vsub.f32 %v1371, %v1375
      %v1380 = vmul.f32 %v762, %v1364
      %v1381 = vmul.f32 %v763, %v1365
      %v1382 = vmul.f32 %v764, %v1366
      %v1383 = vmul.f32 %v765, %v1367
      %v1384 = vmul.f32 %v766, %v1355
      %v1385 = vmul.f32 %v767, %v1356
      %v1386 = vmul.f32 %v768, %v1357
      %v1387 = vmul.f32 %v769, %v1358
      %v1388 = vadd.f32 %v1380, %v1384
      %v1389 = vadd.f32 %v1381, %v1385
      %v1390 = vadd.f32 %v1382, %v1386
      %v1391 = vadd.f32 %v1383, %v1387
      %v1392 = vpack.c.bf16 %v1377, %v1376
      %v1393 = vpack.c.bf16 %v1379, %v1378
      %v1394 = vpack.c.bf16 %v1389, %v1388
      %v1395 = vpack.c.bf16 %v1391, %v1390
      %1396 = vmatprep.subr.bf16.mxu0 0
      %1397 = vmatpush1.bf16.msra.mxu0 0
      %1398 = vmatprep.subr.bf16.mxu0 0
      %1399 = vmatpush1.bf16.msra.mxu0 0
      %1400 = vmatprep.subr.bf16.mxu0 0
      %1401 = vmatpush1.bf16.msra.mxu0 0
      %1402 = vmatprep.subr.bf16.mxu0 0
      %1403 = vmatpush1.bf16.msra.mxu0 0
      %1404 = vmatprep.subr.bf16.mxu0 0
      %1405 = vmatpush1.bf16.msra.mxu0 0
      %1406 = vmatprep.subr.bf16.mxu0 0
      %1407 = vmatpush1.bf16.msra.mxu0 0
      %1408 = vmatprep.subr.bf16.mxu0 0
      %1409 = vmatpush1.bf16.msra.mxu0 %v1393
      %1410 = vmatprep.subr.bf16.mxu0 0
      %1411 = vmatpush1.bf16.msra.mxu0 %v1392
      %1412 = vmatprep.subr.bf16.mxu0 0
      %1413 = vmatpush2.bf16.msra.mxu0 0
      %1414 = vmatprep.subr.bf16.mxu0 0
      %1415 = vmatpush2.bf16.msra.mxu0 0
      %1416 = vmatprep.subr.bf16.mxu0 0
      %1417 = vmatpush2.bf16.msra.mxu0 0
      %1418 = vmatprep.subr.bf16.mxu0 0
      %1419 = vmatpush2.bf16.msra.mxu0 0
      %1420 = vmatprep.subr.bf16.mxu0 0
      %1421 = vmatpush2.bf16.msra.mxu0 0
      %1422 = vmatprep.subr.bf16.mxu0 0
      %1423 = vmatpush2.bf16.msra.mxu0 0
      %1424 = vmatprep.subr.bf16.mxu0 0
      %1425 = vmatpush2.bf16.msra.mxu0 0
      %1426 = vmatprep.subr.bf16.mxu0 0
      %1427 = vmatpush2.bf16.msra.mxu0 0
      %1428 = vmatprep.mubr.bf16.mxu0 0
      %1429 = vmatmul.mubr.bf16.gmra.mxu0 %v829
      %v1430 = vpop.f32.mrf.mxu0
      %v1431 = vadd.f32 0.0, %v1430
      %v1432 = vpop.f32.mrf.mxu0
      %v1433 = vpop.f32.mrf.mxu0
      %v1434 = vadd.f32 0.0, %v1433
      %v1435 = vpop.f32.mrf.mxu0
      %1436 = vmatprep.mubr.bf16.mxu0 0
      %1437 = vmatmul.mubr.bf16.gmra.mxu0 %v832
      %v1438 = vpop.f32.mrf.mxu0
      %v1439 = vadd.f32 0.0, %v1438
      %v1440 = vpop.f32.mrf.mxu0
      %v1441 = vpop.f32.mrf.mxu0
      %v1442 = vadd.f32 0.0, %v1441
      %v1443 = vpop.f32.mrf.mxu0
      %1444 = vdwg.mxu0
      %1445 = vmatprep.subr.bf16.mxu0 0
      %1446 = vmatpush1.bf16.msra.mxu0 0
      %1447 = vmatprep.subr.bf16.mxu0 0
      %1448 = vmatpush1.bf16.msra.mxu0 0
      %1449 = vmatprep.subr.bf16.mxu0 0
      %1450 = vmatpush1.bf16.msra.mxu0 0
      %1451 = vmatprep.subr.bf16.mxu0 0
      %1452 = vmatpush1.bf16.msra.mxu0 0
      %1453 = vmatprep.subr.bf16.mxu0 0
      %1454 = vmatpush1.bf16.msra.mxu0 0
      %1455 = vmatprep.subr.bf16.mxu0 0
      %1456 = vmatpush1.bf16.msra.mxu0 0
      %1457 = vmatprep.subr.bf16.mxu0 0
      %1458 = vmatpush1.bf16.msra.mxu0 %v1395
      %1459 = vmatprep.subr.bf16.mxu0 0
      %1460 = vmatpush1.bf16.msra.mxu0 %v1394
      %1461 = vmatprep.subr.bf16.mxu0 0
      %1462 = vmatpush2.bf16.msra.mxu0 0
      %1463 = vmatprep.subr.bf16.mxu0 0
      %1464 = vmatpush2.bf16.msra.mxu0 0
      %1465 = vmatprep.subr.bf16.mxu0 0
      %1466 = vmatpush2.bf16.msra.mxu0 0
      %1467 = vmatprep.subr.bf16.mxu0 0
      %1468 = vmatpush2.bf16.msra.mxu0 0
      %1469 = vmatprep.subr.bf16.mxu0 0
      %1470 = vmatpush2.bf16.msra.mxu0 0
      %1471 = vmatprep.subr.bf16.mxu0 0
      %1472 = vmatpush2.bf16.msra.mxu0 0
      %1473 = vmatprep.subr.bf16.mxu0 0
      %1474 = vmatpush2.bf16.msra.mxu0 0
      %1475 = vmatprep.subr.bf16.mxu0 0
      %1476 = vmatpush2.bf16.msra.mxu0 0
      %1477 = vmatprep.mubr.bf16.mxu0 0
      %1478 = vmatmul.mubr.bf16.gmra.mxu0 %v894
      %v1479 = vpop.f32.mrf.mxu0
      %v1480 = vadd.f32 0.0, %v1479
      %v1481 = vpop.f32.mrf.mxu0
      %v1482 = vpop.f32.mrf.mxu0
      %v1483 = vadd.f32 0.0, %v1482
      %v1484 = vpop.f32.mrf.mxu0
      %1485 = vmatprep.mubr.bf16.mxu0 0
      %1486 = vmatmul.mubr.bf16.gmra.mxu0 %v897
      %v1487 = vpop.f32.mrf.mxu0
      %v1488 = vadd.f32 0.0, %v1487
      %v1489 = vpop.f32.mrf.mxu0
      %v1490 = vpop.f32.mrf.mxu0
      %v1491 = vadd.f32 0.0, %v1490
      %v1492 = vpop.f32.mrf.mxu0
      %1493 = vdwg.mxu0
      %v1494 = vsub.f32 %v1431, %v1480
      %v1495 = vsub.f32 %v1434, %v1483
      %v1496 = vsub.f32 %v1439, %v1488
      %v1497 = vsub.f32 %v1442, %v1491
      %1498 = vmatprep.subr.bf16.mxu0 0
      %1499 = vmatpush1.bf16.msra.mxu0 0
      %1500 = vmatprep.subr.bf16.mxu0 0
      %1501 = vmatpush1.bf16.msra.mxu0 0
      %1502 = vmatprep.subr.bf16.mxu0 0
      %1503 = vmatpush1.bf16.msra.mxu0 0
      %1504 = vmatprep.subr.bf16.mxu0 0
      %1505 = vmatpush1.bf16.msra.mxu0 0
      %1506 = vmatprep.subr.bf16.mxu0 0
      %1507 = vmatpush1.bf16.msra.mxu0 0
      %1508 = vmatprep.subr.bf16.mxu0 0
      %1509 = vmatpush1.bf16.msra.mxu0 0
      %1510 = vmatprep.subr.bf16.mxu0 0
      %1511 = vmatpush1.bf16.msra.mxu0 %v1393
      %1512 = vmatprep.subr.bf16.mxu0 0
      %1513 = vmatpush1.bf16.msra.mxu0 %v1392
      %1514 = vmatprep.subr.bf16.mxu0 0
      %1515 = vmatpush2.bf16.msra.mxu0 0
      %1516 = vmatprep.subr.bf16.mxu0 0
      %1517 = vmatpush2.bf16.msra.mxu0 0
      %1518 = vmatprep.subr.bf16.mxu0 0
      %1519 = vmatpush2.bf16.msra.mxu0 0
      %1520 = vmatprep.subr.bf16.mxu0 0
      %1521 = vmatpush2.bf16.msra.mxu0 0
      %1522 = vmatprep.subr.bf16.mxu0 0
      %1523 = vmatpush2.bf16.msra.mxu0 0
      %1524 = vmatprep.subr.bf16.mxu0 0
      %1525 = vmatpush2.bf16.msra.mxu0 0
      %1526 = vmatprep.subr.bf16.mxu0 0
      %1527 = vmatpush2.bf16.msra.mxu0 0
      %1528 = vmatprep.subr.bf16.mxu0 0
      %1529 = vmatpush2.bf16.msra.mxu0 0
      %1530 = vmatprep.mubr.bf16.mxu0 0
      %1531 = vmatmul.mubr.bf16.gmra.mxu0 %v894
      %v1532 = vpop.f32.mrf.mxu0
      %v1533 = vadd.f32 0.0, %v1532
      %v1534 = vpop.f32.mrf.mxu0
      %v1535 = vpop.f32.mrf.mxu0
      %v1536 = vadd.f32 0.0, %v1535
      %v1537 = vpop.f32.mrf.mxu0
      %1538 = vmatprep.mubr.bf16.mxu0 0
      %1539 = vmatmul.mubr.bf16.gmra.mxu0 %v897
      %v1540 = vpop.f32.mrf.mxu0
      %v1541 = vadd.f32 0.0, %v1540
      %v1542 = vpop.f32.mrf.mxu0
      %v1543 = vpop.f32.mrf.mxu0
      %v1544 = vadd.f32 0.0, %v1543
      %v1545 = vpop.f32.mrf.mxu0
      %1546 = vdwg.mxu0
      %1547 = vmatprep.subr.bf16.mxu0 0
      %1548 = vmatpush1.bf16.msra.mxu0 0
      %1549 = vmatprep.subr.bf16.mxu0 0
      %1550 = vmatpush1.bf16.msra.mxu0 0
      %1551 = vmatprep.subr.bf16.mxu0 0
      %1552 = vmatpush1.bf16.msra.mxu0 0
      %1553 = vmatprep.subr.bf16.mxu0 0
      %1554 = vmatpush1.bf16.msra.mxu0 0
      %1555 = vmatprep.subr.bf16.mxu0 0
      %1556 = vmatpush1.bf16.msra.mxu0 0
      %1557 = vmatprep.subr.bf16.mxu0 0
      %1558 = vmatpush1.bf16.msra.mxu0 0
      %1559 = vmatprep.subr.bf16.mxu0 0
      %1560 = vmatpush1.bf16.msra.mxu0 %v1395
      %1561 = vmatprep.subr.bf16.mxu0 0
      %1562 = vmatpush1.bf16.msra.mxu0 %v1394
      %1563 = vmatprep.subr.bf16.mxu0 0
      %1564 = vmatpush2.bf16.msra.mxu0 0
      %1565 = vmatprep.subr.bf16.mxu0 0
      %1566 = vmatpush2.bf16.msra.mxu0 0
      %1567 = vmatprep.subr.bf16.mxu0 0
      %1568 = vmatpush2.bf16.msra.mxu0 0
      %1569 = vmatprep.subr.bf16.mxu0 0
      %1570 = vmatpush2.bf16.msra.mxu0 0
      %1571 = vmatprep.subr.bf16.mxu0 0
      %1572 = vmatpush2.bf16.msra.mxu0 0
      %1573 = vmatprep.subr.bf16.mxu0 0
      %1574 = vmatpush2.bf16.msra.mxu0 0
      %1575 = vmatprep.subr.bf16.mxu0 0
      %1576 = vmatpush2.bf16.msra.mxu0 0
      %1577 = vmatprep.subr.bf16.mxu0 0
      %1578 = vmatpush2.bf16.msra.mxu0 0
      %1579 = vmatprep.mubr.bf16.mxu0 0
      %1580 = vmatmul.mubr.bf16.gmra.mxu0 %v829
      %v1581 = vpop.f32.mrf.mxu0
      %v1582 = vadd.f32 %v1533, %v1581
      %v1583 = vpop.f32.mrf.mxu0
      %v1584 = vpop.f32.mrf.mxu0
      %v1585 = vadd.f32 %v1536, %v1584
      %v1586 = vpop.f32.mrf.mxu0
      %1587 = vmatprep.mubr.bf16.mxu0 0
      %1588 = vmatmul.mubr.bf16.gmra.mxu0 %v832
      %v1589 = vpop.f32.mrf.mxu0
      %v1590 = vadd.f32 %v1541, %v1589
      %v1591 = vpop.f32.mrf.mxu0
      %v1592 = vpop.f32.mrf.mxu0
      %v1593 = vadd.f32 %v1544, %v1592
      %v1594 = vpop.f32.mrf.mxu0
      %1595 = vdwg.mxu0
      %v1596 = vpack.c.bf16 %v1495, %v1494
      %v1597 = vpack.c.bf16 %v1497, %v1496
      %v1598 = vpack.c.bf16 %v1585, %v1582
      %v1599 = vpack.c.bf16 %v1593, %v1590
      %v1601 = vsel %vm1060, %v1596, 0
      %v1604 = vsel %vm1060, %v1597, 0
      %1606 = vmatprep.subr.bf16.mxu0 0
      %1607 = vmatpush1.bf16.msra.mxu0 0
      %1608 = vmatprep.subr.bf16.mxu0 0
      %1609 = vmatpush1.bf16.msra.mxu0 0
      %1610 = vmatprep.subr.bf16.mxu0 0
      %1611 = vmatpush1.bf16.msra.mxu0 0
      %1612 = vmatprep.subr.bf16.mxu0 0
      %1613 = vmatpush1.bf16.msra.mxu0 0
      %1614 = vmatprep.subr.bf16.mxu0 0
      %1615 = vmatpush1.bf16.msra.mxu0 0
      %1616 = vmatprep.subr.bf16.mxu0 0
      %1617 = vmatpush1.bf16.msra.mxu0 0
      %1618 = vmatprep.subr.bf16.mxu0 0
      %1619 = vmatpush1.bf16.msra.mxu0 0
      %1620 = vmatprep.subr.bf16.mxu0 0
      %1621 = vmatpush1.bf16.msra.mxu0 %v1058
      %1622 = vmatprep.subr.bf16.mxu0 0
      %1623 = vmatpush2.bf16.msra.mxu0 0
      %1624 = vmatprep.subr.bf16.mxu0 0
      %1625 = vmatpush2.bf16.msra.mxu0 0
      %1626 = vmatprep.subr.bf16.mxu0 0
      %1627 = vmatpush2.bf16.msra.mxu0 0
      %1628 = vmatprep.subr.bf16.mxu0 0
      %1629 = vmatpush2.bf16.msra.mxu0 0
      %1630 = vmatprep.subr.bf16.mxu0 0
      %1631 = vmatpush2.bf16.msra.mxu0 0
      %1632 = vmatprep.subr.bf16.mxu0 0
      %1633 = vmatpush2.bf16.msra.mxu0 0
      %1634 = vmatprep.subr.bf16.mxu0 0
      %1635 = vmatpush2.bf16.msra.mxu0 0
      %1636 = vmatprep.subr.bf16.mxu0 0
      %1637 = vmatpush2.bf16.msra.mxu0 0
      %1638 = vmatprep.mubr.bf16.mxu0 0
      %1639 = vmatmul.mubr.bf16.gmra.mxu0 %v1601
      %v1640 = vpop.f32.mrf.mxu0
      %v1641 = vadd.f32 0.0, %v1640
      %v1642 = vpop.f32.mrf.mxu0
      %v1643 = vpop.f32.mrf.mxu0
      %v1644 = vadd.f32 0.0, %v1643
      %v1645 = vpop.f32.mrf.mxu0
      %1646 = vmatprep.mubr.bf16.mxu0 0
      %1647 = vmatmul.mubr.bf16.gmra.mxu0 %v1604
      %v1648 = vpop.f32.mrf.mxu0
      %v1649 = vadd.f32 0.0, %v1648
      %v1650 = vpop.f32.mrf.mxu0
      %v1651 = vpop.f32.mrf.mxu0
      %v1652 = vadd.f32 0.0, %v1651
      %v1653 = vpop.f32.mrf.mxu0
      %1654 = vdwg.mxu0
      %v1656 = vsel %vm1060, %v1598, 0
      %v1659 = vsel %vm1060, %v1599, 0
      %1661 = vmatprep.subr.bf16.mxu0 0
      %1662 = vmatpush1.bf16.msra.mxu0 0
      %1663 = vmatprep.subr.bf16.mxu0 0
      %1664 = vmatpush1.bf16.msra.mxu0 0
      %1665 = vmatprep.subr.bf16.mxu0 0
      %1666 = vmatpush1.bf16.msra.mxu0 0
      %1667 = vmatprep.subr.bf16.mxu0 0
      %1668 = vmatpush1.bf16.msra.mxu0 0
      %1669 = vmatprep.subr.bf16.mxu0 0
      %1670 = vmatpush1.bf16.msra.mxu0 0
      %1671 = vmatprep.subr.bf16.mxu0 0
      %1672 = vmatpush1.bf16.msra.mxu0 0
      %1673 = vmatprep.subr.bf16.mxu0 0
      %1674 = vmatpush1.bf16.msra.mxu0 0
      %1675 = vmatprep.subr.bf16.mxu0 0
      %1676 = vmatpush1.bf16.msra.mxu0 %v1120
      %1677 = vmatprep.subr.bf16.mxu0 0
      %1678 = vmatpush2.bf16.msra.mxu0 0
      %1679 = vmatprep.subr.bf16.mxu0 0
      %1680 = vmatpush2.bf16.msra.mxu0 0
      %1681 = vmatprep.subr.bf16.mxu0 0
      %1682 = vmatpush2.bf16.msra.mxu0 0
      %1683 = vmatprep.subr.bf16.mxu0 0
      %1684 = vmatpush2.bf16.msra.mxu0 0
      %1685 = vmatprep.subr.bf16.mxu0 0
      %1686 = vmatpush2.bf16.msra.mxu0 0
      %1687 = vmatprep.subr.bf16.mxu0 0
      %1688 = vmatpush2.bf16.msra.mxu0 0
      %1689 = vmatprep.subr.bf16.mxu0 0
      %1690 = vmatpush2.bf16.msra.mxu0 0
      %1691 = vmatprep.subr.bf16.mxu0 0
      %1692 = vmatpush2.bf16.msra.mxu0 0
      %1693 = vmatprep.mubr.bf16.mxu0 0
      %1694 = vmatmul.mubr.bf16.gmra.mxu0 %v1656
      %v1695 = vpop.f32.mrf.mxu0
      %v1696 = vadd.f32 0.0, %v1695
      %v1697 = vpop.f32.mrf.mxu0
      %v1698 = vpop.f32.mrf.mxu0
      %v1699 = vadd.f32 0.0, %v1698
      %v1700 = vpop.f32.mrf.mxu0
      %1701 = vmatprep.mubr.bf16.mxu0 0
      %1702 = vmatmul.mubr.bf16.gmra.mxu0 %v1659
      %v1703 = vpop.f32.mrf.mxu0
      %v1704 = vadd.f32 0.0, %v1703
      %v1705 = vpop.f32.mrf.mxu0
      %v1706 = vpop.f32.mrf.mxu0
      %v1707 = vadd.f32 0.0, %v1706
      %v1708 = vpop.f32.mrf.mxu0
      %1709 = vdwg.mxu0
      %v1710 = vsub.f32 %v1641, %v1696
      %v1711 = vsub.f32 %v1644, %v1699
      %v1712 = vsub.f32 %v1649, %v1704
      %v1713 = vsub.f32 %v1652, %v1707
      %1714 = vmatprep.subr.bf16.mxu0 0
      %1715 = vmatpush1.bf16.msra.mxu0 0
      %1716 = vmatprep.subr.bf16.mxu0 0
      %1717 = vmatpush1.bf16.msra.mxu0 0
      %1718 = vmatprep.subr.bf16.mxu0 0
      %1719 = vmatpush1.bf16.msra.mxu0 0
      %1720 = vmatprep.subr.bf16.mxu0 0
      %1721 = vmatpush1.bf16.msra.mxu0 0
      %1722 = vmatprep.subr.bf16.mxu0 0
      %1723 = vmatpush1.bf16.msra.mxu0 0
      %1724 = vmatprep.subr.bf16.mxu0 0
      %1725 = vmatpush1.bf16.msra.mxu0 0
      %1726 = vmatprep.subr.bf16.mxu0 0
      %1727 = vmatpush1.bf16.msra.mxu0 0
      %1728 = vmatprep.subr.bf16.mxu0 0
      %1729 = vmatpush1.bf16.msra.mxu0 %v1120
      %1730 = vmatprep.subr.bf16.mxu0 0
      %1731 = vmatpush2.bf16.msra.mxu0 0
      %1732 = vmatprep.subr.bf16.mxu0 0
      %1733 = vmatpush2.bf16.msra.mxu0 0
      %1734 = vmatprep.subr.bf16.mxu0 0
      %1735 = vmatpush2.bf16.msra.mxu0 0
      %1736 = vmatprep.subr.bf16.mxu0 0
      %1737 = vmatpush2.bf16.msra.mxu0 0
      %1738 = vmatprep.subr.bf16.mxu0 0
      %1739 = vmatpush2.bf16.msra.mxu0 0
      %1740 = vmatprep.subr.bf16.mxu0 0
      %1741 = vmatpush2.bf16.msra.mxu0 0
      %1742 = vmatprep.subr.bf16.mxu0 0
      %1743 = vmatpush2.bf16.msra.mxu0 0
      %1744 = vmatprep.subr.bf16.mxu0 0
      %1745 = vmatpush2.bf16.msra.mxu0 0
      %1746 = vmatprep.mubr.bf16.mxu0 0
      %1747 = vmatmul.mubr.bf16.gmra.mxu0 %v1601
      %v1748 = vpop.f32.mrf.mxu0
      %v1749 = vadd.f32 0.0, %v1748
      %v1750 = vpop.f32.mrf.mxu0
      %v1751 = vpop.f32.mrf.mxu0
      %v1752 = vadd.f32 0.0, %v1751
      %v1753 = vpop.f32.mrf.mxu0
      %1754 = vmatprep.mubr.bf16.mxu0 0
      %1755 = vmatmul.mubr.bf16.gmra.mxu0 %v1604
      %v1756 = vpop.f32.mrf.mxu0
      %v1757 = vadd.f32 0.0, %v1756
      %v1758 = vpop.f32.mrf.mxu0
      %v1759 = vpop.f32.mrf.mxu0
      %v1760 = vadd.f32 0.0, %v1759
      %v1761 = vpop.f32.mrf.mxu0
      %1762 = vdwg.mxu0
      %1763 = vmatprep.subr.bf16.mxu0 0
      %1764 = vmatpush1.bf16.msra.mxu0 0
      %1765 = vmatprep.subr.bf16.mxu0 0
      %1766 = vmatpush1.bf16.msra.mxu0 0
      %1767 = vmatprep.subr.bf16.mxu0 0
      %1768 = vmatpush1.bf16.msra.mxu0 0
      %1769 = vmatprep.subr.bf16.mxu0 0
      %1770 = vmatpush1.bf16.msra.mxu0 0
      %1771 = vmatprep.subr.bf16.mxu0 0
      %1772 = vmatpush1.bf16.msra.mxu0 0
      %1773 = vmatprep.subr.bf16.mxu0 0
      %1774 = vmatpush1.bf16.msra.mxu0 0
      %1775 = vmatprep.subr.bf16.mxu0 0
      %1776 = vmatpush1.bf16.msra.mxu0 0
      %1777 = vmatprep.subr.bf16.mxu0 0
      %1778 = vmatpush1.bf16.msra.mxu0 %v1058
      %1779 = vmatprep.subr.bf16.mxu0 0
      %1780 = vmatpush2.bf16.msra.mxu0 0
      %1781 = vmatprep.subr.bf16.mxu0 0
      %1782 = vmatpush2.bf16.msra.mxu0 0
      %1783 = vmatprep.subr.bf16.mxu0 0
      %1784 = vmatpush2.bf16.msra.mxu0 0
      %1785 = vmatprep.subr.bf16.mxu0 0
      %1786 = vmatpush2.bf16.msra.mxu0 0
      %1787 = vmatprep.subr.bf16.mxu0 0
      %1788 = vmatpush2.bf16.msra.mxu0 0
      %1789 = vmatprep.subr.bf16.mxu0 0
      %1790 = vmatpush2.bf16.msra.mxu0 0
      %1791 = vmatprep.subr.bf16.mxu0 0
      %1792 = vmatpush2.bf16.msra.mxu0 0
      %1793 = vmatprep.subr.bf16.mxu0 0
      %1794 = vmatpush2.bf16.msra.mxu0 0
      %1795 = vmatprep.mubr.bf16.mxu0 0
      %1796 = vmatmul.mubr.bf16.gmra.mxu0 %v1656
      %v1797 = vpop.f32.mrf.mxu0
      %v1798 = vadd.f32 %v1749, %v1797
      %v1799 = vpop.f32.mrf.mxu0
      %v1800 = vpop.f32.mrf.mxu0
      %v1801 = vadd.f32 %v1752, %v1800
      %v1802 = vpop.f32.mrf.mxu0
      %1803 = vmatprep.mubr.bf16.mxu0 0
      %1804 = vmatmul.mubr.bf16.gmra.mxu0 %v1659
      %v1805 = vpop.f32.mrf.mxu0
      %v1806 = vadd.f32 %v1757, %v1805
      %v1807 = vpop.f32.mrf.mxu0
      %v1808 = vpop.f32.mrf.mxu0
      %v1809 = vadd.f32 %v1760, %v1808
      %v1810 = vpop.f32.mrf.mxu0
      %1811 = vdwg.mxu0
      %s1812 = scalar_lea.vmem %s668, 32
      %v1813 = vld [vmem:[%s1812] sm:$0xff]
      %v1814 = vld [vmem:[%s1812 + $0x8] sm:$0xff]
      %v1815 = vld [vmem:[%s1812 + $0x10] sm:$0xff]
      %v1816 = vld [vmem:[%s1812 + $0x18] sm:$0xff]
      %s1817 = scalar_lea.vmem %s679, 32
      %v1818 = vld [vmem:[%s1817] sm:$0xff]
      %v1819 = vld [vmem:[%s1817 + $0x8] sm:$0xff]
      %v1820 = vld [vmem:[%s1817 + $0x10] sm:$0xff]
      %v1821 = vld [vmem:[%s1817 + $0x18] sm:$0xff]
      %s1822 = scalar_lea.vmem %s690, 32
      %v1823 = vld [vmem:[%s1822] sm:$0xff]
      %v1824 = vld [vmem:[%s1822 + $0x8] sm:$0xff]
      %v1825 = vld [vmem:[%s1822 + $0x10] sm:$0xff]
      %v1826 = vld [vmem:[%s1822 + $0x18] sm:$0xff]
      %s1827 = scalar_lea.vmem %s701, 32
      %v1828 = vld [vmem:[%s1827] sm:$0xff]
      %v1829 = vld [vmem:[%s1827 + $0x8] sm:$0xff]
      %v1830 = vld [vmem:[%s1827 + $0x10] sm:$0xff]
      %v1831 = vld [vmem:[%s1827 + $0x18] sm:$0xff]
      %v1832 = vsub.f32 %v1813, %v1823
      %v1833 = vsub.f32 %v1814, %v1824
      %v1834 = vsub.f32 %v1815, %v1825
      %v1835 = vsub.f32 %v1816, %v1826
      %v1836 = vmul.f32 %v1832, %v1299
      %v1837 = vmul.f32 %v1833, %v1299
      %v1838 = vmul.f32 %v1834, %v1299
      %v1839 = vmul.f32 %v1835, %v1299
      %v1840 = vsel %vm1309, %v1836, 0.0
      %v1841 = vsel %vm1309, %v1837, 0.0
      %v1842 = vsel %vm1309, %v1838, 0.0
      %v1843 = vsel %vm1309, %v1839, 0.0
      %v1844 = vsub.f32 %v1813, %v1840
      %v1845 = vsub.f32 %v1814, %v1841
      %v1846 = vsub.f32 %v1815, %v1842
      %v1847 = vsub.f32 %v1816, %v1843
      %v1848 = vsub.f32 %v1844, %v1710
      %v1849 = vsub.f32 %v1845, %v1711
      %v1850 = vsub.f32 %v1846, %v1712
      %v1851 = vsub.f32 %v1847, %v1713
      %s1852 = scalar_lea.vmem %s734, 32
      %1853 = vst.msk [vmem:[%s1852] sm:$0xff] %vm1060, %v1848
      %1854 = vst.msk [vmem:[%s1852 + $0x8] sm:$0xff] %vm1060, %v1849
      %1855 = vst.msk [vmem:[%s1852 + $0x10] sm:$0xff] %vm1060, %v1850
      %1856 = vst.msk [vmem:[%s1852 + $0x18] sm:$0xff] %vm1060, %v1851
      %v1857 = vsub.f32 %v1818, %v1828
      %v1858 = vsub.f32 %v1819, %v1829
      %v1859 = vsub.f32 %v1820, %v1830
      %v1860 = vsub.f32 %v1821, %v1831
      %v1861 = vmul.f32 %v1857, %v1299
      %v1862 = vmul.f32 %v1858, %v1299
      %v1863 = vmul.f32 %v1859, %v1299
      %v1864 = vmul.f32 %v1860, %v1299
      %v1865 = vsel %vm1309, %v1861, 0.0
      %v1866 = vsel %vm1309, %v1862, 0.0
      %v1867 = vsel %vm1309, %v1863, 0.0
      %v1868 = vsel %vm1309, %v1864, 0.0
      %v1869 = vsub.f32 %v1818, %v1865
      %v1870 = vsub.f32 %v1819, %v1866
      %v1871 = vsub.f32 %v1820, %v1867
      %v1872 = vsub.f32 %v1821, %v1868
      %v1873 = vsub.f32 %v1869, %v1798
      %v1874 = vsub.f32 %v1870, %v1801
      %v1875 = vsub.f32 %v1871, %v1806
      %v1876 = vsub.f32 %v1872, %v1809
      %s1877 = scalar_lea.vmem %s745, 32
      %1878 = vst.msk [vmem:[%s1877] sm:$0xff] %vm1060, %v1873
      %1879 = vst.msk [vmem:[%s1877 + $0x8] sm:$0xff] %vm1060, %v1874
      %1880 = vst.msk [vmem:[%s1877 + $0x10] sm:$0xff] %vm1060, %v1875
      %1881 = vst.msk [vmem:[%s1877 + $0x18] sm:$0xff] %vm1060, %v1876
      %s1882 = smul.u32 2, %s31
      %p1883 = scmp.lt.s32.totalorder %s30, 1
      %s1884 = scalar_select %p1883, %s30, 1
      %p1885 = scmp.lt.s32.totalorder %s1882, 3
      %s1886 = scalar_select %p1885, %s1882, 3
      %s1887 = smul.addr %s1886, 4
      %s1888 = smul.addr %s1884, 16
      %s1889 = sadd.s32 %s1887, %s1888
      %s1890 = smul.addr %s1889, 8
      %s1891 = scalar_lea.vmem %s12, %s1890
      %s1892 = smul.u32 2, %s31
      %p1893 = scmp.lt.s32.totalorder %s30, 1
      %s1894 = scalar_select %p1893, %s30, 1
      %p1895 = scmp.lt.s32.totalorder %s1892, 3
      %s1896 = scalar_select %p1895, %s1892, 3
      %s1897 = smul.addr %s1896, 4
      %s1898 = smul.addr %s1894, 16
      %s1899 = sadd.s32 %s1897, %s1898
      %s1900 = smul.addr %s1899, 8
      %s1901 = scalar_lea.vmem %s13, %s1900
      // Predicated region
      $region69: #{varnet_cascade.5} parent=67 // pred_check
        %p1902 = pneg %p362
      $region70: #{varnet_cascade.5} parent=67 // pred_check_branch
        %1904 = sbr.rel (%p1902) target = $region72
      $region71: #{varnet_cascade.5} parent=67 // pred_region
        %s1905 = smul.u32 2, %s31
      $region72: #{varnet_cascade.5} parent=67 // pred_fallthru
        _
      // Predicated region
      $region73: #{varnet_cascade.5} parent=67 // pred_check
        %p1906 = pneg %p390
      $region74: #{varnet_cascade.5} parent=67 // pred_check_branch
        %1908 = sbr.rel (%p1906) target = $region76
      $region75: #{varnet_cascade.5} parent=67 // pred_region
        %s1909 = smul.u32 2, %s31
      $region76: #{varnet_cascade.5} parent=67 // pred_fallthru
        _
    $region68: #{varnet_cascade.5} parent=5 // pred_fallthru
      _
    %p1910 = scmp.le.s32.totalorder 2, %s21
    // Predicated region
    $region77: #{varnet_cascade.5} parent=5 // pred_check
      %p1911 = pneg %p1910
    $region78: #{varnet_cascade.5} parent=5 // pred_check_branch
      %1913 = sbr.rel (%p1911) target = $region80
    $region79: #{varnet_cascade.5} parent=5 // pred_region
      %s1914 = ssub.s32 %s21, 2
      // Predicated region
      $region81: #{varnet_cascade.5} parent=79 // pred_check
        %p1915 = pneg %p368
      $region82: #{varnet_cascade.5} parent=79 // pred_check_branch
        %1917 = sbr.rel (%p1915) target = $region84
      $region83: #{varnet_cascade.5} parent=79 // pred_region
        %s1918 = smul.u32 2, %s33
        %p1919 = scmp.lt.s32.totalorder %s32, 1
        %s1920 = scalar_select %p1919, %s32, 1
        %p1921 = scmp.lt.s32.totalorder %s1918, 3
        %s1922 = scalar_select %p1921, %s1918, 3
        %s1923 = smul.addr %s1922, 4
        %s1924 = smul.addr %s1920, 16
        %s1925 = sadd.s32 %s1923, %s1924
        %s1926 = smul.addr %s1925, 8
        %s1927 = scalar_lea.vmem %s12, %s1926
      $region84: #{varnet_cascade.5} parent=79 // pred_fallthru
        _
      // Predicated region
      $region85: #{varnet_cascade.5} parent=79 // pred_check
        %p1928 = pneg %p396
      $region86: #{varnet_cascade.5} parent=79 // pred_check_branch
        %1930 = sbr.rel (%p1928) target = $region88
      $region87: #{varnet_cascade.5} parent=79 // pred_region
        %s1931 = smul.u32 2, %s33
        %p1932 = scmp.lt.s32.totalorder %s32, 1
        %s1933 = scalar_select %p1932, %s32, 1
        %p1934 = scmp.lt.s32.totalorder %s1931, 3
        %s1935 = scalar_select %p1934, %s1931, 3
        %s1936 = smul.addr %s1935, 4
        %s1937 = smul.addr %s1933, 16
        %s1938 = sadd.s32 %s1936, %s1937
        %s1939 = smul.addr %s1938, 8
        %s1940 = scalar_lea.vmem %s13, %s1939
      $region88: #{varnet_cascade.5} parent=79 // pred_fallthru
        _
    $region80: #{varnet_cascade.5} parent=5 // pred_fallthru
      _
  $region6: #{varnet_cascade.5} parent=0 // loop_footer
    %s25 = sadd.s32 1, %s21
  $region7: #{varnet_cascade.5} parent=0 // loop_footer_branch
    %20 = sbr.rel target = $region3
  $region8: #{varnet_cascade.5} parent=0 // loop_exit
    _

// kernel: varnet_cascade.4
$region0: #{varnet_cascade.4}
  #allocation0 [shape = 'u32[]', space=smem, size = 0x4, offset = 0x4, fixed_abs, tag = 'smem constant byte address 0x4 - core index']
  #allocation1 [shape = 'u32[144,128]{1,0:T(1,128)}', space=vmem, size = 0x12000, scoped, tag = 'internal scratch']
  #allocation2 [shape = 'f32[16,16]{1,0:T(8,128)}', space=vmem, size = 0x2000, scoped, tag = 'scratch operand']
  #allocation3 [shape = 'f32[16,16]{1,0:T(8,128)}', space=vmem, size = 0x2000, scoped, tag = 'scratch operand']
  %s0 = inlined_call_operand.vmem [shape: f32[2,4,32,16], index: 0, kind: input, shape index: {}]
  %s1 = inlined_call_operand.vmem [shape: f32[2,4,32,16], index: 1, kind: input, shape index: {}]
  %s2 = inlined_call_operand.vmem [shape: bf16[2,4,32,16], index: 2, kind: input, shape index: {}]
  %s3 = inlined_call_operand.vmem [shape: bf16[2,4,32,16], index: 3, kind: input, shape index: {}]
  %s4 = inlined_call_operand.vmem [shape: bf16[3,32,32], index: 4, kind: input, shape index: {}]
  %s5 = inlined_call_operand.vmem [shape: bf16[3,16,16], index: 5, kind: input, shape index: {}]
  %s6 = inlined_call_operand.vmem [shape: f32[8,2], index: 6, kind: input, shape index: {}]
  %s7 = inlined_call_operand.vmem [shape: f32[1,8], index: 7, kind: input, shape index: {}]
  %s8 = inlined_call_operand.vmem [shape: f32[2,8], index: 8, kind: input, shape index: {}]
  %s9 = inlined_call_operand.vmem [shape: f32[1,2], index: 9, kind: input, shape index: {}]
  %s10 = inlined_call_operand.vmem [shape: f32[2,32,16], index: 10, kind: output, shape index: {0}]
  %s11 = inlined_call_operand.vmem [shape: f32[2,32,16], index: 11, kind: output, shape index: {1}]
  %12 = xla_tuple %s10, %s11
  %s13 = sld [smem:[#allocation0]]
  $region228: #{varnet_cascade.4} parent=0
    _
  %s15 = ssub.s32 1, %s13
  %s16 = scalar_select 0, %s15, %s13
  $region1: #{varnet_cascade.4} parent=0
    #allocation4 [shape = 'u8[16384]{0}', space=vmem, size = 0x4000, scoped, tag = 'input window, operand 2']
    #allocation5 [shape = 'u8[16384]{0}', space=vmem, size = 0x4000, scoped, tag = 'input window, operand 3']
    #allocation6 [shape = 'u8[12288]{0}', space=vmem, size = 0x3000, scoped, tag = 'input window, operand 4, single buffered']
    #allocation7 [shape = 'u8[4096]{0}', space=smem, size = 0x1000, scoped, tag = 'input window, operand 6, single buffered']
    #allocation8 [shape = 's32[2]{0}', space=sflag, size = 0x8, scoped, tag = 'scoped memory for varnet_cascade.4']
    #allocation9 [shape = 'u8[512]{0}', space=smem, size = 0x200, scoped, tag = 'input window, operand 7, single buffered']
    #allocation10 [shape = 's32[1]{0}', space=sflag, size = 0x4, scoped, tag = 'scoped memory for varnet_cascade.4']
    #allocation11 [shape = 'u8[1024]{0}', space=smem, size = 0x400, scoped, tag = 'input window, operand 8, single buffered']
    #allocation12 [shape = 'u8[512]{0}', space=smem, size = 0x200, scoped, tag = 'input window, operand 9, single buffered']
    #allocation13 [shape = 's32[1]{0}', space=sflag, size = 0x4, scoped, tag = 'scoped memory for varnet_cascade.4']
    %17 = vsyncpa [#allocation8], 0
    %18 = vsyncpa [#allocation10], 0
    %19 = vsyncpa [#allocation13], 0
    loop: start=0, step=1, limit=10
    $region2: #{varnet_cascade.4} parent=1 // loop_pre_header
      _
    $region3: #{varnet_cascade.4} parent=1 // loop_header
      %s21 = sphi 0, %s25
      %p22 = scmp.ge.s32.totalorder %s21, 10
      %s28 = sphi 0, %s47
      %s29 = sphi 0, %s43
      %s30 = sphi 0, %s39
      %s31 = sphi 0, %s28
      %s32 = sphi 0, %s29
      %s33 = sphi 0, %s30
      %s34 = sphi 0, %s31
      %s35 = sphi 0, %s32
      %s36 = sphi 0, %s33
      %s52 = sphi 0, %s54
      %s55 = sphi 0, %s52
      %s56 = sphi 0, %s55
      %s72 = sphi 0, %s56
      %s80 = sphi 0, %s82
      %s83 = sphi 0, %s80
      %s84 = sphi 0, %s83
      %s100 = sphi 0, %s84
      %s110 = sphi 0, %s112
      %s113 = sphi 0, %s110
      %s114 = sphi 0, %s113
      %s130 = sphi 0, %s114
      %s140 = sphi 0, %s142
      %s143 = sphi 0, %s140
      %s144 = sphi 0, %s143
      %s160 = sphi 0, %s144
      %s166 = sphi 0, %s168
      %s169 = sphi 0, %s166
      %s170 = sphi 0, %s169
      %s186 = sphi 0, %s170
      %s190 = sphi 0, %s190
      %s192 = sphi 0, %s190
      %s193 = sphi 0, %s192
      %s207 = sphi 0, %s193
      %s211 = sphi 0, %s211
      %s213 = sphi 0, %s211
      %s214 = sphi 0, %s213
      %s228 = sphi 0, %s214
      %s232 = sphi 0, %s232
      %s234 = sphi 0, %s232
      %s235 = sphi 0, %s234
      %s249 = sphi 0, %s235
      %s253 = sphi 0, %s253
      %s255 = sphi 0, %s253
      %s256 = sphi 0, %s255
      %s270 = sphi 0, %s256
      %s274 = sphi 0, %s274
      %s276 = sphi 0, %s274
      %s277 = sphi 0, %s276
      %s291 = sphi 0, %s277
      %s299 = sphi 0, %s301
      %s302 = sphi 0, %s299
      %s303 = sphi 0, %s302
      %s319 = sphi 0, %s303
      %s327 = sphi 0, %s329
      %s330 = sphi 0, %s327
      %s331 = sphi 0, %s330
      %s347 = sphi 0, %s331
    $region4: #{varnet_cascade.4} parent=1 // loop_header_branch
      %24 = sbr.rel (%p22) target = $region8
    $region5: #{varnet_cascade.4} parent=1 // loop_body
      %s26 = ssub.s32 %s21, 1
      %s27 = ssub.s32 %s21, 2
      %s37 = sadd.s32 1, %s30
      %p38 = scmp.ge.s32.totalorder %s37, 2
      %s39 = scalar_select %p38, 0, %s37
      %s40 = sadd.s32 1, %s29
      %s41 = scalar_select %p38, %s40, %s29
      %p42 = scmp.ge.s32.totalorder %s41, 2
      %s43 = scalar_select %p42, 0, %s41
      %s44 = sadd.s32 1, %s28
      %s45 = scalar_select %p42, %s44, %s28
      %p46 = scmp.ge.s32.totalorder %s45, 2
      %s47 = scalar_select %p46, 0, %s45
      %s48 = ssub.s32 %s28, %s47
      %s49 = ssub.s32 %s30, %s39
      %s50 = sor.u32 %s48, %s49
      %p51 = scmp.eq.s32.totalorder %s50, 0
      %s53 = sadd.s32 %s52, 1
      %s54 = scalar_select %p51, %s52, %s53
      %p57 = pneg %p51
      %p58 = scmp.eq.s32.totalorder %s21, 7
      %p59 = por %p57, %p58
      %p60 = scmp.ne.s32.totalorder %s52, %s55
      %p61 = scmp.eq.s32.totalorder %s21, 0
      %p62 = por %p60, %p61
      %p63 = scmp.ne.s32.totalorder %s52, %s55
      %p64 = scmp.eq.s32.totalorder %s26, 7
      %p65 = por %p63, %p64
      %p66 = scmp.ne.s32.totalorder %s55, %s56
      %p67 = scmp.eq.s32.totalorder %s26, 0
      %p68 = por %p66, %p67
      %p69 = scmp.ne.s32.totalorder %s55, %s56
      %p70 = scmp.eq.s32.totalorder %s27, 7
      %p71 = por %p69, %p70
      %p73 = scmp.ne.s32.totalorder %s56, %s72
      %p74 = scmp.eq.s32.totalorder %s27, 0
      %p75 = por %p73, %p74
      %s76 = ssub.s32 %s28, %s47
      %s77 = ssub.s32 %s30, %s39
      %s78 = sor.u32 %s76, %s77
      %p79 = scmp.eq.s32.totalorder %s78, 0
      %s81 = sadd.s32 %s80, 1
      %s82 = scalar_select %p79, %s80, %s81
      %p85 = pneg %p79
      %p86 = scmp.eq.s32.totalorder %s21, 7
      %p87 = por %p85, %p86
      %p88 = scmp.ne.s32.totalorder %s80, %s83
      %p89 = scmp.eq.s32.totalorder %s21, 0
      %p90 = por %p88, %p89
      %p91 = scmp.ne.s32.totalorder %s80, %s83
      %p92 = scmp.eq.s32.totalorder %s26, 7
      %p93 = por %p91, %p92
      %p94 = scmp.ne.s32.totalorder %s83, %s84
      %p95 = scmp.eq.s32.totalorder %s26, 0
      %p96 = por %p94, %p95
      %p97 = scmp.ne.s32.totalorder %s83, %s84
      %p98 = scmp.eq.s32.totalorder %s27, 7
      %p99 = por %p97, %p98
      %p101 = scmp.ne.s32.totalorder %s84, %s100
      %p102 = scmp.eq.s32.totalorder %s27, 0
      %p103 = por %p101, %p102
      %s104 = ssub.s32 %s28, %s47
      %s105 = ssub.s32 %s30, %s39
      %s106 = sor.u32 %s104, %s105
      %s107 = ssub.s32 %s29, %s43
      %s108 = sor.u32 %s106, %s107
      %p109 = scmp.eq.s32.totalorder %s108, 0
      %s111 = sadd.s32 %s110, 1
      %s112 = scalar_select %p109, %s110, %s111
      %p115 = pneg %p109
      %p116 = scmp.eq.s32.totalorder %s21, 7
      %p117 = por %p115, %p116
      %p118 = scmp.ne.s32.totalorder %s110, %s113
      %p119 = scmp.eq.s32.totalorder %s21, 0
      %p120 = por %p118, %p119
      %p121 = scmp.ne.s32.totalorder %s110, %s113
      %p122 = scmp.eq.s32.totalorder %s26, 7
      %p123 = por %p121, %p122
      %p124 = scmp.ne.s32.totalorder %s113, %s114
      %p125 = scmp.eq.s32.totalorder %s26, 0
      %p126 = por %p124, %p125
      %p127 = scmp.ne.s32.totalorder %s113, %s114
      %p128 = scmp.eq.s32.totalorder %s27, 7
      %p129 = por %p127, %p128
      %p131 = scmp.ne.s32.totalorder %s114, %s130
      %p132 = scmp.eq.s32.totalorder %s27, 0
      %p133 = por %p131, %p132
      %s134 = ssub.s32 %s28, %s47
      %s135 = ssub.s32 %s30, %s39
      %s136 = sor.u32 %s134, %s135
      %s137 = ssub.s32 %s29, %s43
      %s138 = sor.u32 %s136, %s137
      %p139 = scmp.eq.s32.totalorder %s138, 0
      %s141 = sadd.s32 %s140, 1
      %s142 = scalar_select %p139, %s140, %s141
      %p145 = pneg %p139
      %p146 = scmp.eq.s32.totalorder %s21, 7
      %p147 = por %p145, %p146
      %p148 = scmp.ne.s32.totalorder %s140, %s143
      %p149 = scmp.eq.s32.totalorder %s21, 0
      %p150 = por %p148, %p149
      %p151 = scmp.ne.s32.totalorder %s140, %s143
      %p152 = scmp.eq.s32.totalorder %s26, 7
      %p153 = por %p151, %p152
      %p154 = scmp.ne.s32.totalorder %s143, %s144
      %p155 = scmp.eq.s32.totalorder %s26, 0
      %p156 = por %p154, %p155
      %p157 = scmp.ne.s32.totalorder %s143, %s144
      %p158 = scmp.eq.s32.totalorder %s27, 7
      %p159 = por %p157, %p158
      %p161 = scmp.ne.s32.totalorder %s144, %s160
      %p162 = scmp.eq.s32.totalorder %s27, 0
      %p163 = por %p161, %p162
      %s164 = ssub.s32 %s29, %s43
      %p165 = scmp.eq.s32.totalorder %s164, 0
      %s167 = sadd.s32 %s166, 1
      %s168 = scalar_select %p165, %s166, %s167
      %p171 = pneg %p165
      %p172 = scmp.eq.s32.totalorder %s21, 7
      %p173 = por %p171, %p172
      %p174 = scmp.ne.s32.totalorder %s166, %s169
      %p175 = scmp.eq.s32.totalorder %s21, 0
      %p176 = por %p174, %p175
      %p177 = scmp.ne.s32.totalorder %s166, %s169
      %p178 = scmp.eq.s32.totalorder %s26, 7
      %p179 = por %p177, %p178
      %p180 = scmp.ne.s32.totalorder %s169, %s170
      %p181 = scmp.eq.s32.totalorder %s26, 0
      %p182 = por %p180, %p181
      %p183 = scmp.ne.s32.totalorder %s169, %s170
      %p184 = scmp.eq.s32.totalorder %s27, 7
      %p185 = por %p183, %p184
      %p187 = scmp.ne.s32.totalorder %s170, %s186
      %p188 = scmp.eq.s32.totalorder %s27, 0
      %p189 = por %p187, %p188
      %s191 = sadd.s32 %s190, 1
      %p194 = scmp.eq.s32.totalorder %s21, 7
      %p195 = scmp.ne.s32.totalorder %s190, %s192
      %p196 = scmp.eq.s32.totalorder %s21, 0
      %p197 = por %p195, %p196
      %p198 = scmp.ne.s32.totalorder %s190, %s192
      %p199 = scmp.eq.s32.totalorder %s26, 7
      %p200 = por %p198, %p199
      %p201 = scmp.ne.s32.totalorder %s192, %s193
      %p202 = scmp.eq.s32.totalorder %s26, 0
      %p203 = por %p201, %p202
      %p204 = scmp.ne.s32.totalorder %s192, %s193
      %p205 = scmp.eq.s32.totalorder %s27, 7
      %p206 = por %p204, %p205
      %p208 = scmp.ne.s32.totalorder %s193, %s207
      %p209 = scmp.eq.s32.totalorder %s27, 0
      %p210 = por %p208, %p209
      %s212 = sadd.s32 %s211, 1
      %p215 = scmp.eq.s32.totalorder %s21, 7
      %p216 = scmp.ne.s32.totalorder %s211, %s213
      %p217 = scmp.eq.s32.totalorder %s21, 0
      %p218 = por %p216, %p217
      %p219 = scmp.ne.s32.totalorder %s211, %s213
      %p220 = scmp.eq.s32.totalorder %s26, 7
      %p221 = por %p219, %p220
      %p222 = scmp.ne.s32.totalorder %s213, %s214
      %p223 = scmp.eq.s32.totalorder %s26, 0
      %p224 = por %p222, %p223
      %p225 = scmp.ne.s32.totalorder %s213, %s214
      %p226 = scmp.eq.s32.totalorder %s27, 7
      %p227 = por %p225, %p226
      %p229 = scmp.ne.s32.totalorder %s214, %s228
      %p230 = scmp.eq.s32.totalorder %s27, 0
      %p231 = por %p229, %p230
      %s233 = sadd.s32 %s232, 1
      %p236 = scmp.eq.s32.totalorder %s21, 7
      %p237 = scmp.ne.s32.totalorder %s232, %s234
      %p238 = scmp.eq.s32.totalorder %s21, 0
      %p239 = por %p237, %p238
      %p240 = scmp.ne.s32.totalorder %s232, %s234
      %p241 = scmp.eq.s32.totalorder %s26, 7
      %p242 = por %p240, %p241
      %p243 = scmp.ne.s32.totalorder %s234, %s235
      %p244 = scmp.eq.s32.totalorder %s26, 0
      %p245 = por %p243, %p244
      %p246 = scmp.ne.s32.totalorder %s234, %s235
      %p247 = scmp.eq.s32.totalorder %s27, 7
      %p248 = por %p246, %p247
      %p250 = scmp.ne.s32.totalorder %s235, %s249
      %p251 = scmp.eq.s32.totalorder %s27, 0
      %p252 = por %p250, %p251
      %s254 = sadd.s32 %s253, 1
      %p257 = scmp.eq.s32.totalorder %s21, 7
      %p258 = scmp.ne.s32.totalorder %s253, %s255
      %p259 = scmp.eq.s32.totalorder %s21, 0
      %p260 = por %p258, %p259
      %p261 = scmp.ne.s32.totalorder %s253, %s255
      %p262 = scmp.eq.s32.totalorder %s26, 7
      %p263 = por %p261, %p262
      %p264 = scmp.ne.s32.totalorder %s255, %s256
      %p265 = scmp.eq.s32.totalorder %s26, 0
      %p266 = por %p264, %p265
      %p267 = scmp.ne.s32.totalorder %s255, %s256
      %p268 = scmp.eq.s32.totalorder %s27, 7
      %p269 = por %p267, %p268
      %p271 = scmp.ne.s32.totalorder %s256, %s270
      %p272 = scmp.eq.s32.totalorder %s27, 0
      %p273 = por %p271, %p272
      %s275 = sadd.s32 %s274, 1
      %p278 = scmp.eq.s32.totalorder %s21, 7
      %p279 = scmp.ne.s32.totalorder %s274, %s276
      %p280 = scmp.eq.s32.totalorder %s21, 0
      %p281 = por %p279, %p280
      %p282 = scmp.ne.s32.totalorder %s274, %s276
      %p283 = scmp.eq.s32.totalorder %s26, 7
      %p284 = por %p282, %p283
      %p285 = scmp.ne.s32.totalorder %s276, %s277
      %p286 = scmp.eq.s32.totalorder %s26, 0
      %p287 = por %p285, %p286
      %p288 = scmp.ne.s32.totalorder %s276, %s277
      %p289 = scmp.eq.s32.totalorder %s27, 7
      %p290 = por %p288, %p289
      %p292 = scmp.ne.s32.totalorder %s277, %s291
      %p293 = scmp.eq.s32.totalorder %s27, 0
      %p294 = por %p292, %p293
      %s295 = ssub.s32 %s28, %s47
      %s296 = ssub.s32 %s29, %s43
      %s297 = sor.u32 %s295, %s296
      %p298 = scmp.eq.s32.totalorder %s297, 0
      %s300 = sadd.s32 %s299, 1
      %s301 = scalar_select %p298, %s299, %s300
      %p304 = pneg %p298
      %p305 = scmp.eq.s32.totalorder %s21, 7
      %p306 = por %p304, %p305
      %p307 = scmp.ne.s32.totalorder %s299, %s302
      %p308 = scmp.eq.s32.totalorder %s21, 0
      %p309 = por %p307, %p308
      %p310 = scmp.ne.s32.totalorder %s299, %s302
      %p311 = scmp.eq.s32.totalorder %s26, 7
      %p312 = por %p310, %p311
      %p313 = scmp.ne.s32.totalorder %s302, %s303
      %p314 = scmp.eq.s32.totalorder %s26, 0
      %p315 = por %p313, %p314
      %p316 = scmp.ne.s32.totalorder %s302, %s303
      %p317 = scmp.eq.s32.totalorder %s27, 7
      %p318 = por %p316, %p317
      %p320 = scmp.ne.s32.totalorder %s303, %s319
      %p321 = scmp.eq.s32.totalorder %s27, 0
      %p322 = por %p320, %p321
      %s323 = ssub.s32 %s28, %s47
      %s324 = ssub.s32 %s29, %s43
      %s325 = sor.u32 %s323, %s324
      %p326 = scmp.eq.s32.totalorder %s325, 0
      %s328 = sadd.s32 %s327, 1
      %s329 = scalar_select %p326, %s327, %s328
      %p332 = pneg %p326
      %p333 = scmp.eq.s32.totalorder %s21, 7
      %p334 = por %p332, %p333
      %p335 = scmp.ne.s32.totalorder %s327, %s330
      %p336 = scmp.eq.s32.totalorder %s21, 0
      %p337 = por %p335, %p336
      %p338 = scmp.ne.s32.totalorder %s327, %s330
      %p339 = scmp.eq.s32.totalorder %s26, 7
      %p340 = por %p338, %p339
      %p341 = scmp.ne.s32.totalorder %s330, %s331
      %p342 = scmp.eq.s32.totalorder %s26, 0
      %p343 = por %p341, %p342
      %p344 = scmp.ne.s32.totalorder %s330, %s331
      %p345 = scmp.eq.s32.totalorder %s27, 7
      %p346 = por %p344, %p345
      %p348 = scmp.ne.s32.totalorder %s331, %s347
      %p349 = scmp.eq.s32.totalorder %s27, 0
      %p350 = por %p348, %p349
      %p351 = scmp.le.s32.totalorder 1, %s21
      %p352 = scmp.lt.s32.totalorder %s21, 9
      %p353 = pnand %p351, %p352
      %p354 = pneg %p353
      // Predicated region
      $region9: #{varnet_cascade.4} parent=5 // pred_check
        _
      $region10: #{varnet_cascade.4} parent=5 // pred_check_branch
        %356 = sbr.rel (%p353) target = $region12
      $region11: #{varnet_cascade.4} parent=5 // pred_region
        %s357 = ssub.s32 %s21, 1
        // Predicated region
        $region13: #{varnet_cascade.4} parent=11 // pred_check
          %p358 = pneg %p182
        $region14: #{varnet_cascade.4} parent=11 // pred_check_branch
          %360 = sbr.rel (%p358) target = $region16
        $region15: #{varnet_cascade.4} parent=11 // pred_region
          %s361 = smul.u32 2, %s32
          %s362 = smul.addr %s361, 4
          %s363 = scalar_lea.vmem %s4, %s362
          // Predicated region
          $region17: #{varnet_cascade.4} parent=15 // pred_check
            _
          $region18: #{varnet_cascade.4} parent=15 // pred_check_branch
            %365 = sbr.rel (0) target = $region20
          $region19: #{varnet_cascade.4} parent=15 // pred_region
            // Predicated region
            $region21: #{varnet_cascade.4} parent=19 // pred_check
              _
            $region22: #{varnet_cascade.4} parent=19 // pred_check_branch
              %367 = sbr.rel target = $region24
            $region23: #{varnet_cascade.4} parent=19 // pred_region
              // Predicated region
              $region36: #{varnet_cascade.4} parent=23 // pred_check
                _
              $region37: #{varnet_cascade.4} parent=23 // pred_check_branch
                %393 = sbr.rel (0) target = $region39
              $region38: #{varnet_cascade.4} parent=23 // pred_region
                loop: start=0, step=1, limit=1
                $region40: #{varnet_cascade.4} parent=38 // loop_pre_header
                  _
                $region41: #{varnet_cascade.4} parent=38 // loop_header
                  %s395 = sphi 0, %s399
                  %p396 = scmp.ge.s32.totalorder %s395, 1
                  %s400 = sphi %s363, %s363
                  %s401 = sphi [#allocation6], [#allocation6]
                $region42: #{varnet_cascade.4} parent=38 // loop_header_branch
                  %398 = sbr.rel (%p396) target = $region46
                $region43: #{varnet_cascade.4} parent=38 // loop_body
                  _
                $region44: #{varnet_cascade.4} parent=38 // loop_footer
                  %s399 = sadd.s32 1, %s395
                $region45: #{varnet_cascade.4} parent=38 // loop_footer_branch
                  %394 = sbr.rel target = $region41
                $region46: #{varnet_cascade.4} parent=38 // loop_exit
                  _
                %s403 = ssub.s32 16, 1
                loop: start=0, step=1, limit=1
                $region47: #{varnet_cascade.4} parent=38 // loop_pre_header
                  _
                $region48: #{varnet_cascade.4} parent=38 // loop_header
                  %s405 = sphi 0, %s409
                  %p406 = scmp.ge.s32.totalorder %s405, 1
                  %s410 = sphi %s363, %s363
                  %s411 = sphi [#allocation6], [#allocation6]
                $region49: #{varnet_cascade.4} parent=38 // loop_header_branch
                  %408 = sbr.rel (%p406) target = $region53
                $region50: #{varnet_cascade.4} parent=38 // loop_body
                  %v412 = vld [vmem:[%s410] sm:%s403]
                  %413 = vst [vmem:[%s411] sm:%s403] %v412
                  %v414 = vld [vmem:[%s410 + $0x4] sm:%s403]
                  %415 = vst [vmem:[%s411 + $0x4] sm:%s403] %v414
                  %v416 = vld [vmem:[%s410 + $0x10] sm:%s403]
                  %417 = vst [vmem:[%s411 + $0x8] sm:%s403] %v416
                  %v418 = vld [vmem:[%s410 + $0x14] sm:%s403]
                  %419 = vst [vmem:[%s411 + $0xc] sm:%s403] %v418
                  %v420 = vld [vmem:[%s410 + $0x20] sm:%s403]
                  %421 = vst [vmem:[%s411 + $0x10] sm:%s403] %v420
                  %v422 = vld [vmem:[%s410 + $0x24] sm:%s403]
                  %423 = vst [vmem:[%s411 + $0x14] sm:%s403] %v422
                $region51: #{varnet_cascade.4} parent=38 // loop_footer
                  %s409 = sadd.s32 1, %s405
                $region52: #{varnet_cascade.4} parent=38 // loop_footer_branch
                  %404 = sbr.rel target = $region48
                $region53: #{varnet_cascade.4} parent=38 // loop_exit
                  _
              $region39: #{varnet_cascade.4} parent=23 // pred_fallthru
                _
            $region24: #{varnet_cascade.4} parent=19 // pred_fallthru
              _
            // Predicated region
            $region25: #{varnet_cascade.4} parent=19 // pred_check
              _
            $region26: #{varnet_cascade.4} parent=19 // pred_check_branch
              %369 = sbr.rel (0) target = $region28
            $region27: #{varnet_cascade.4} parent=19 // pred_region
              %s371 = ssub.s32 16, 1
              loop: start=0, step=1, limit=1
              $region29: #{varnet_cascade.4} parent=27 // loop_pre_header
                _
              $region30: #{varnet_cascade.4} parent=27 // loop_header
                %s373 = sphi 0, %s377
                %p374 = scmp.ge.s32.totalorder %s373, 1
                %s378 = sphi %s363, %s363
                %s379 = sphi [#allocation6], [#allocation6]
              $region31: #{varnet_cascade.4} parent=27 // loop_header_branch
                %376 = sbr.rel (%p374) target = $region35
              $region32: #{varnet_cascade.4} parent=27 // loop_body
                %v380 = vld [vmem:[%s378] sm:%s371]
                %381 = vst [vmem:[%s379] sm:%s371] %v380
                %v382 = vld [vmem:[%s378 + $0x4] sm:%s371]
                %383 = vst [vmem:[%s379 + $0x4] sm:%s371] %v382
                %v384 = vld [vmem:[%s378 + $0x10] sm:%s371]
                %385 = vst [vmem:[%s379 + $0x8] sm:%s371] %v384
                %v386 = vld [vmem:[%s378 + $0x14] sm:%s371]
                %387 = vst [vmem:[%s379 + $0xc] sm:%s371] %v386
                %v388 = vld [vmem:[%s378 + $0x20] sm:%s371]
                %389 = vst [vmem:[%s379 + $0x10] sm:%s371] %v388
                %v390 = vld [vmem:[%s378 + $0x24] sm:%s371]
                %391 = vst [vmem:[%s379 + $0x14] sm:%s371] %v390
              $region33: #{varnet_cascade.4} parent=27 // loop_footer
                %s377 = sadd.s32 1, %s373
              $region34: #{varnet_cascade.4} parent=27 // loop_footer_branch
                %372 = sbr.rel target = $region30
              $region35: #{varnet_cascade.4} parent=27 // loop_exit
                _
            $region28: #{varnet_cascade.4} parent=19 // pred_fallthru
              _
          $region20: #{varnet_cascade.4} parent=15 // pred_fallthru
            _
          %424 = vnop
        $region16: #{varnet_cascade.4} parent=11 // pred_fallthru
          _
        // Predicated region
        $region54: #{varnet_cascade.4} parent=11 // pred_check
          %p425 = pneg %p203
        $region55: #{varnet_cascade.4} parent=11 // pred_check_branch
          %427 = sbr.rel (%p425) target = $region57
        $region56: #{varnet_cascade.4} parent=11 // pred_region
          _
        $region57: #{varnet_cascade.4} parent=11 // pred_fallthru
          _
        // Predicated region
        $region58: #{varnet_cascade.4} parent=11 // pred_check
          %p428 = pneg %p224
        $region59: #{varnet_cascade.4} parent=11 // pred_check_branch
          %430 = sbr.rel (%p428) target = $region61
        $region60: #{varnet_cascade.4} parent=11 // pred_region
          %s432 = ssub.s32 128, 128
          %433 = vsyncadd [#allocation8], %s432
          %s435 = sshll.u32 %s6, 4
          %s436 = int_to_ptr.vmem [resolvable:$true] %s435
          %438 = dma.vmem_to_smem %s436, 128, [#allocation7], [#allocation8]
        $region61: #{varnet_cascade.4} parent=11 // pred_fallthru
          _
        // Predicated region
        $region62: #{varnet_cascade.4} parent=11 // pred_check
          %p439 = pneg %p245
        $region63: #{varnet_cascade.4} parent=11 // pred_check_branch
          %441 = sbr.rel (%p439) target = $region65
        $region64: #{varnet_cascade.4} parent=11 // pred_region
          %s443 = ssub.s32 16, 16
          %444 = vsyncadd [#allocation10], %s443
          %s446 = sshll.u32 %s7, 4
          %s447 = int_to_ptr.vmem [resolvable:$true] %s446
          %449 = dma.vmem_to_smem %s447, 16, [#allocation9], [#allocation10]
        $region65: #{varnet_cascade.4} parent=11 // pred_fallthru
          _
        // Predicated region
        $region66: #{varnet_cascade.4} parent=11 // pred_check
          %p450 = pneg %p266
        $region67: #{varnet_cascade.4} parent=11 // pred_check_branch
          %452 = sbr.rel (%p450) target = $region69
        $region68: #{varnet_cascade.4} parent=11 // pred_region
          %s454 = ssub.s32 32, 32
          %455 = vsyncadd [#allocation10], %s454
          %s457 = sshll.u32 %s8, 4
          %s458 = int_to_ptr.vmem [resolvable:$true] %s457
          %460 = dma.vmem_to_smem %s458, 32, [#allocation11], [#allocation10]
        $region69: #{varnet_cascade.4} parent=11 // pred_fallthru
          _
        // Predicated region
        $region70: #{varnet_cascade.4} parent=11 // pred_check
          %p461 = pneg %p287
        $region71: #{varnet_cascade.4} parent=11 // pred_check_branch
          %463 = sbr.rel (%p461) target = $region73
        $region72: #{varnet_cascade.4} parent=11 // pred_region
          %s465 = ssub.s32 16, 16
          %466 = vsyncadd [#allocation13], %s465
          %s468 = sshll.u32 %s9, 4
          %s469 = int_to_ptr.vmem [resolvable:$true] %s468
          %471 = dma.vmem_to_smem %s469, 16, [#allocation12], [#allocation13]
        $region73: #{varnet_cascade.4} parent=11 // pred_fallthru
          _
      $region12: #{varnet_cascade.4} parent=5 // pred_fallthru
        _
      %p472 = scmp.lt.s32.totalorder %s21, 8
      // Predicated region
      $region74: #{varnet_cascade.4} parent=5 // pred_check
        %p473 = pneg %p472
      $region75: #{varnet_cascade.4} parent=5 // pred_check_branch
        %475 = sbr.rel (%p473) target = $region77
      $region76: #{varnet_cascade.4} parent=5 // pred_region
        // Predicated region
        $region78: #{varnet_cascade.4} parent=76 // pred_check
          %p476 = pneg %p62
        $region79: #{varnet_cascade.4} parent=76 // pred_check_branch
          %478 = sbr.rel (%p476) target = $region81
        $region80: #{varnet_cascade.4} parent=76 // pred_region
          %s479 = smul.u32 2, %s30
          %p480 = scmp.lt.s32.totalorder %s28, 1
          %s481 = scalar_select %p480, %s28, 1
          %p482 = scmp.lt.s32.totalorder %s479, 3
          %s483 = scalar_select %p482, %s479, 3
          %s484 = smul.addr %s483, 4
          %s485 = smul.addr %s481, 16
          %s486 = sadd.s32 %s484, %s485
          %s487 = smul.addr %s486, 8
          %s488 = scalar_lea.vmem %s0, %s487
          %s489 = smul.u32 2, %s30
        $region81: #{varnet_cascade.4} parent=76 // pred_fallthru
          _
        // Predicated region
        $region82: #{varnet_cascade.4} parent=76 // pred_check
          %p490 = pneg %p90
        $region83: #{varnet_cascade.4} parent=76 // pred_check_branch
          %492 = sbr.rel (%p490) target = $region85
        $region84: #{varnet_cascade.4} parent=76 // pred_region
          %s493 = smul.u32 2, %s30
          %p494 = scmp.lt.s32.totalorder %s28, 1
          %s495 = scalar_select %p494, %s28, 1
          %p496 = scmp.lt.s32.totalorder %s493, 3
          %s497 = scalar_select %p496, %s493, 3
          %s498 = smul.addr %s497, 4
          %s499 = smul.addr %s495, 16
          %s500 = sadd.s32 %s498, %s499
          %s501 = smul.addr %s500, 8
          %s502 = scalar_lea.vmem %s1, %s501
          %s503 = smul.u32 2, %s30
        $region85: #{varnet_cascade.4} parent=76 // pred_fallthru
          _
        // Predicated region
        $region86: #{varnet_cascade.4} parent=76 // pred_check
          %p504 = pneg %p120
        $region87: #{varnet_cascade.4} parent=76 // pred_check_branch
          %506 = sbr.rel (%p504) target = $region89
        $region88: #{varnet_cascade.4} parent=76 // pred_region
          %s507 = sand.u32 %s110, 1
          %s508 = sand.u32 %s110, 1
          %s509 = smul.addr %s508, 16
          %s510 = scalar_lea.vmem [#allocation4], %s509
          %s511 = smul.u32 2, %s30
          %s512 = smul.u32 2, %s29
          %s513 = smul.addr %s511, 4
          %s514 = sadd.s32 %s512, %s513
          %s515 = smul.addr %s28, 16
          %s516 = sadd.s32 %s514, %s515
          %s517 = smul.addr %s516, 4
          %s518 = scalar_lea.vmem %s2, %s517
          // Predicated region
          $region90: #{varnet_cascade.4} parent=88 // pred_check
            _
          $region91: #{varnet_cascade.4} parent=88 // pred_check_branch
            %520 = sbr.rel (0) target = $region93
          $region92: #{varnet_cascade.4} parent=88 // pred_region
            // Predicated region
            $region94: #{varnet_cascade.4} parent=92 // pred_check
              _
            $region95: #{varnet_cascade.4} parent=92 // pred_check_branch
              %522 = sbr.rel target = $region97
            $region96: #{varnet_cascade.4} parent=92 // pred_region
              // Predicated region
              $region109: #{varnet_cascade.4} parent=96 // pred_check
                _
              $region110: #{varnet_cascade.4} parent=96 // pred_check_branch
                %544 = sbr.rel (0) target = $region112
              $region111: #{varnet_cascade.4} parent=96 // pred_region
                loop: start=0, step=1, limit=1
                $region113: #{varnet_cascade.4} parent=111 // loop_pre_header
                  _
                $region114: #{varnet_cascade.4} parent=111 // loop_header
                  %s546 = sphi 0, %s550
                  %p547 = scmp.ge.s32.totalorder %s546, 1
                  %s551 = sphi %s518, %s518
                  %s552 = sphi %s510, %s510
                $region115: #{varnet_cascade.4} parent=111 // loop_header_branch
                  %549 = sbr.rel (%p547) target = $region119
                $region116: #{varnet_cascade.4} parent=111 // loop_body
                  _
                $region117: #{varnet_cascade.4} parent=111 // loop_footer
                  %s550 = sadd.s32 1, %s546
                $region118: #{varnet_cascade.4} parent=111 // loop_footer_branch
                  %545 = sbr.rel target = $region114
                $region119: #{varnet_cascade.4} parent=111 // loop_exit
                  _
                %s554 = ssub.s32 16, 1
                loop: start=0, step=1, limit=1
                $region120: #{varnet_cascade.4} parent=111 // loop_pre_header
                  _
                $region121: #{varnet_cascade.4} parent=111 // loop_header
                  %s556 = sphi 0, %s560
                  %p557 = scmp.ge.s32.totalorder %s556, 1
                  %s561 = sphi %s518, %s518
                  %s562 = sphi %s510, %s510
                $region122: #{varnet_cascade.4} parent=111 // loop_header_branch
                  %559 = sbr.rel (%p557) target = $region126
                $region123: #{varnet_cascade.4} parent=111 // loop_body
                  %v563 = vld [vmem:[%s561] sm:%s554]
                  %564 = vst [vmem:[%s562] sm:%s554] %v563
                  %v565 = vld [vmem:[%s561 + $0x4] sm:%s554]
                  %566 = vst [vmem:[%s562 + $0x4] sm:%s554] %v565
                  %v567 = vld [vmem:[%s561 + $0x10] sm:%s554]
                  %568 = vst [vmem:[%s562 + $0x8] sm:%s554] %v567
                  %v569 = vld [vmem:[%s561 + $0x14] sm:%s554]
                  %570 = vst [vmem:[%s562 + $0xc] sm:%s554] %v569
                $region124: #{varnet_cascade.4} parent=111 // loop_footer
                  %s560 = sadd.s32 1, %s556
                $region125: #{varnet_cascade.4} parent=111 // loop_footer_branch
                  %555 = sbr.rel target = $region121
                $region126: #{varnet_cascade.4} parent=111 // loop_exit
                  _
              $region112: #{varnet_cascade.4} parent=96 // pred_fallthru
                _
            $region97: #{varnet_cascade.4} parent=92 // pred_fallthru
              _
            // Predicated region
            $region98: #{varnet_cascade.4} parent=92 // pred_check
              _
            $region99: #{varnet_cascade.4} parent=92 // pred_check_branch
              %524 = sbr.rel (0) target = $region101
            $region100: #{varnet_cascade.4} parent=92 // pred_region
              %s526 = ssub.s32 16, 1
              loop: start=0, step=1, limit=1
              $region102: #{varnet_cascade.4} parent=100 // loop_pre_header
                _
              $region103: #{varnet_cascade.4} parent=100 // loop_header
                %s528 = sphi 0, %s532
                %p529 = scmp.ge.s32.totalorder %s528, 1
                %s533 = sphi %s518, %s518
                %s534 = sphi %s510, %s510
              $region104: #{varnet_cascade.4} parent=100 // loop_header_branch
                %531 = sbr.rel (%p529) target = $region108
              $region105: #{varnet_cascade.4} parent=100 // loop_body
                %v535 = vld [vmem:[%s533] sm:%s526]
                %536 = vst [vmem:[%s534] sm:%s526] %v535
                %v537 = vld [vmem:[%s533 + $0x4] sm:%s526]
                %538 = vst [vmem:[%s534 + $0x4] sm:%s526] %v537
                %v539 = vld [vmem:[%s533 + $0x10] sm:%s526]
                %540 = vst [vmem:[%s534 + $0x8] sm:%s526] %v539
                %v541 = vld [vmem:[%s533 + $0x14] sm:%s526]
                %542 = vst [vmem:[%s534 + $0xc] sm:%s526] %v541
              $region106: #{varnet_cascade.4} parent=100 // loop_footer
                %s532 = sadd.s32 1, %s528
              $region107: #{varnet_cascade.4} parent=100 // loop_footer_branch
                %527 = sbr.rel target = $region103
              $region108: #{varnet_cascade.4} parent=100 // loop_exit
                _
            $region101: #{varnet_cascade.4} parent=92 // pred_fallthru
              _
          $region93: #{varnet_cascade.4} parent=88 // pred_fallthru
            _
          %571 = vnop
        $region89: #{varnet_cascade.4} parent=76 // pred_fallthru
          _
        // Predicated region
        $region127: #{varnet_cascade.4} parent=76 // pred_check
          %p572 = pneg %p150
        $region128: #{varnet_cascade.4} parent=76 // pred_check_branch
          %574 = sbr.rel (%p572) target = $region130
        $region129: #{varnet_cascade.4} parent=76 // pred_region
          %s575 = sand.u32 %s140, 1
          %s576 = sand.u32 %s140, 1
          %s577 = smul.addr %s576, 16
          %s578 = scalar_lea.vmem [#allocation5], %s577
          %s579 = smul.u32 2, %s30
          %s580 = smul.u32 2, %s29
          %s581 = smul.addr %s579, 4
          %s582 = sadd.s32 %s580, %s581
          %s583 = smul.addr %s28, 16
          %s584 = sadd.s32 %s582, %s583
          %s585 = smul.addr %s584, 4
          %s586 = scalar_lea.vmem %s3, %s585
          // Predicated region
          $region131: #{varnet_cascade.4} parent=129 // pred_check
            _
          $region132: #{varnet_cascade.4} parent=129 // pred_check_branch
            %588 = sbr.rel (0) target = $region134
          $region133: #{varnet_cascade.4} parent=129 // pred_region
            // Predicated region
            $region135: #{varnet_cascade.4} parent=133 // pred_check
              _
            $region136: #{varnet_cascade.4} parent=133 // pred_check_branch
              %590 = sbr.rel target = $region138
            $region137: #{varnet_cascade.4} parent=133 // pred_region
              // Predicated region
              $region150: #{varnet_cascade.4} parent=137 // pred_check
                _
              $region151: #{varnet_cascade.4} parent=137 // pred_check_branch
                %612 = sbr.rel (0) target = $region153
              $region152: #{varnet_cascade.4} parent=137 // pred_region
                loop: start=0, step=1, limit=1
                $region154: #{varnet_cascade.4} parent=152 // loop_pre_header
                  _
                $region155: #{varnet_cascade.4} parent=152 // loop_header
                  %s614 = sphi 0, %s618
                  %p615 = scmp.ge.s32.totalorder %s614, 1
                  %s619 = sphi %s586, %s586
                  %s620 = sphi %s578, %s578
                $region156: #{varnet_cascade.4} parent=152 // loop_header_branch
                  %617 = sbr.rel (%p615) target = $region160
                $region157: #{varnet_cascade.4} parent=152 // loop_body
                  _
                $region158: #{varnet_cascade.4} parent=152 // loop_footer
                  %s618 = sadd.s32 1, %s614
                $region159: #{varnet_cascade.4} parent=152 // loop_footer_branch
                  %613 = sbr.rel target = $region155
                $region160: #{varnet_cascade.4} parent=152 // loop_exit
                  _
                %s622 = ssub.s32 16, 1
                loop: start=0, step=1, limit=1
                $region161: #{varnet_cascade.4} parent=152 // loop_pre_header
                  _
                $region162: #{varnet_cascade.4} parent=152 // loop_header
                  %s624 = sphi 0, %s628
                  %p625 = scmp.ge.s32.totalorder %s624, 1
                  %s629 = sphi %s586, %s586
                  %s630 = sphi %s578, %s578
                $region163: #{varnet_cascade.4} parent=152 // loop_header_branch
                  %627 = sbr.rel (%p625) target = $region167
                $region164: #{varnet_cascade.4} parent=152 // loop_body
                  %v631 = vld [vmem:[%s629] sm:%s622]
                  %632 = vst [vmem:[%s630] sm:%s622] %v631
                  %v633 = vld [vmem:[%s629 + $0x4] sm:%s622]
                  %634 = vst [vmem:[%s630 + $0x4] sm:%s622] %v633
                  %v635 = vld [vmem:[%s629 + $0x10] sm:%s622]
                  %636 = vst [vmem:[%s630 + $0x8] sm:%s622] %v635
                  %v637 = vld [vmem:[%s629 + $0x14] sm:%s622]
                  %638 = vst [vmem:[%s630 + $0xc] sm:%s622] %v637
                $region165: #{varnet_cascade.4} parent=152 // loop_footer
                  %s628 = sadd.s32 1, %s624
                $region166: #{varnet_cascade.4} parent=152 // loop_footer_branch
                  %623 = sbr.rel target = $region162
                $region167: #{varnet_cascade.4} parent=152 // loop_exit
                  _
              $region153: #{varnet_cascade.4} parent=137 // pred_fallthru
                _
            $region138: #{varnet_cascade.4} parent=133 // pred_fallthru
              _
            // Predicated region
            $region139: #{varnet_cascade.4} parent=133 // pred_check
              _
            $region140: #{varnet_cascade.4} parent=133 // pred_check_branch
              %592 = sbr.rel (0) target = $region142
            $region141: #{varnet_cascade.4} parent=133 // pred_region
              %s594 = ssub.s32 16, 1
              loop: start=0, step=1, limit=1
              $region143: #{varnet_cascade.4} parent=141 // loop_pre_header
                _
              $region144: #{varnet_cascade.4} parent=141 // loop_header
                %s596 = sphi 0, %s600
                %p597 = scmp.ge.s32.totalorder %s596, 1
                %s601 = sphi %s586, %s586
                %s602 = sphi %s578, %s578
              $region145: #{varnet_cascade.4} parent=141 // loop_header_branch
                %599 = sbr.rel (%p597) target = $region149
              $region146: #{varnet_cascade.4} parent=141 // loop_body
                %v603 = vld [vmem:[%s601] sm:%s594]
                %604 = vst [vmem:[%s602] sm:%s594] %v603
                %v605 = vld [vmem:[%s601 + $0x4] sm:%s594]
                %606 = vst [vmem:[%s602 + $0x4] sm:%s594] %v605
                %v607 = vld [vmem:[%s601 + $0x10] sm:%s594]
                %608 = vst [vmem:[%s602 + $0x8] sm:%s594] %v607
                %v609 = vld [vmem:[%s601 + $0x14] sm:%s594]
                %610 = vst [vmem:[%s602 + $0xc] sm:%s594] %v609
              $region147: #{varnet_cascade.4} parent=141 // loop_footer
                %s600 = sadd.s32 1, %s596
              $region148: #{varnet_cascade.4} parent=141 // loop_footer_branch
                %595 = sbr.rel target = $region144
              $region149: #{varnet_cascade.4} parent=141 // loop_exit
                _
            $region142: #{varnet_cascade.4} parent=133 // pred_fallthru
              _
          $region134: #{varnet_cascade.4} parent=129 // pred_fallthru
            _
          %639 = vnop
        $region130: #{varnet_cascade.4} parent=76 // pred_fallthru
          _
      $region77: #{varnet_cascade.4} parent=5 // pred_fallthru
        _
      %p640 = scmp.le.s32.totalorder 1, %s21
      %p641 = scmp.lt.s32.totalorder %s21, 9
      %p642 = pnand %p640, %p641
      %p643 = pneg %p642
      // Predicated region
      $region168: #{varnet_cascade.4} parent=5 // pred_check
        _
      $region169: #{varnet_cascade.4} parent=5 // pred_check_branch
        %645 = sbr.rel (%p642) target = $region171
      $region170: #{varnet_cascade.4} parent=5 // pred_region
        %s646 = ssub.s32 %s21, 1
        %s647 = sand.u32 %s113, 1
        %s648 = sand.u32 %s113, 1
        %s649 = smul.addr %s648, 16
        %s650 = scalar_lea.vmem [#allocation4], %s649
        // Predicated region
        $region172: #{varnet_cascade.4} parent=170 // pred_check
          %p651 = pneg %p126
        $region173: #{varnet_cascade.4} parent=170 // pred_check_branch
          %653 = sbr.rel (%p651) target = $region175
        $region174: #{varnet_cascade.4} parent=170 // pred_region
          _
        $region175: #{varnet_cascade.4} parent=170 // pred_fallthru
          _
        %s654 = sand.u32 %s143, 1
        %s655 = sand.u32 %s143, 1
        %s656 = smul.addr %s655, 16
        %s657 = scalar_lea.vmem [#allocation5], %s656
        // Predicated region
        $region176: #{varnet_cascade.4} parent=170 // pred_check
          %p658 = pneg %p156
        $region177: #{varnet_cascade.4} parent=170 // pred_check_branch
          %660 = sbr.rel (%p658) target = $region179
        $region178: #{varnet_cascade.4} parent=170 // pred_region
          _
        $region179: #{varnet_cascade.4} parent=170 // pred_fallthru
          _
        // Predicated region
        $region180: #{varnet_cascade.4} parent=170 // pred_check
          %p661 = pneg %p182
        $region181: #{varnet_cascade.4} parent=170 // pred_check_branch
          %663 = sbr.rel (%p661) target = $region183
        $region182: #{varnet_cascade.4} parent=170 // pred_region
          _
        $region183: #{varnet_cascade.4} parent=170 // pred_fallthru
          _
        // Predicated region
        $region184: #{varnet_cascade.4} parent=170 // pred_check
          %p664 = pneg %p224
        $region185: #{varnet_cascade.4} parent=170 // pred_check_branch
          %666 = sbr.rel (%p664) target = $region187
        $region186: #{varnet_cascade.4} parent=170 // pred_region
          %667 = dma.done [#allocation8], 128
        $region187: #{varnet_cascade.4} parent=170 // pred_fallthru
          _
        // Predicated region
        $region188: #{varnet_cascade.4} parent=170 // pred_check
          %p668 = pneg %p245
        $region189: #{varnet_cascade.4} parent=170 // pred_check_branch
          %670 = sbr.rel (%p668) target = $region191
        $region190: #{varnet_cascade.4} parent=170 // pred_region
          %671 = dma.done [#allocation10], 16
        $region191: #{varnet_cascade.4} parent=170 // pred_fallthru
          _
        // Predicated region
        $region192: #{varnet_cascade.4} parent=170 // pred_check
          %p672 = pneg %p266
        $region193: #{varnet_cascade.4} parent=170 // pred_check_branch
          %674 = sbr.rel (%p672) target = $region195
        $region194: #{varnet_cascade.4} parent=170 // pred_region
          %675 = dma.done [#allocation10], 32
        $region195: #{varnet_cascade.4} parent=170 // pred_fallthru
          _
        // Predicated region
        $region196: #{varnet_cascade.4} parent=170 // pred_check
          %p676 = pneg %p287
        $region197: #{varnet_cascade.4} parent=170 // pred_check_branch
          %678 = sbr.rel (%p676) target = $region199
        $region198: #{varnet_cascade.4} parent=170 // pred_region
          %679 = dma.done [#allocation13], 16
        $region199: #{varnet_cascade.4} parent=170 // pred_fallthru
          _
        %680 = sfence
        %s681 = smul.u32 2, %s33
        %p682 = scmp.lt.s32.totalorder %s31, 1
        %s683 = scalar_select %p682, %s31, 1
        %p684 = scmp.lt.s32.totalorder %s681, 3
        %s685 = scalar_select %p684, %s681, 3
        %s686 = smul.addr %s685, 4
        %s687 = smul.addr %s683, 16
        %s688 = sadd.s32 %s686, %s687
        %s689 = smul.addr %s688, 8
        %s690 = scalar_lea.vmem %s0, %s689
        %p691 = pneg %p68
        %p692 = pneg %p65
        %s693 = smul.u32 2, %s33
        %p694 = scmp.lt.s32.totalorder %s31, 1
        %s695 = scalar_select %p694, %s31, 1
        %p696 = scmp.lt.s32.totalorder %s693, 3
        %s697 = scalar_select %p696, %s693, 3
        %s698 = smul.addr %s697, 4
        %s699 = smul.addr %s695, 16
        %s700 = sadd.s32 %s698, %s699
        %s701 = smul.addr %s700, 8
        %s702 = scalar_lea.vmem %s1, %s701
        %p703 = pneg %p96
        %p704 = pneg %p93
        %s705 = sand.u32 %s113, 1
        %s706 = sand.u32 %s113, 1
        %s707 = smul.addr %s706, 16
        %s708 = scalar_lea.vmem [#allocation4], %s707
        %p709 = pneg %p126
        %p710 = pneg %p123
        %s711 = sand.u32 %s143, 1
        %s712 = sand.u32 %s143, 1
        %s713 = smul.addr %s712, 16
        %s714 = scalar_lea.vmem [#allocation5], %s713
        %p715 = pneg %p156
        %p716 = pneg %p153
        %p717 = pneg %p182
        %p718 = pneg %p179
        %p719 = pneg %p203
        %p720 = pneg %p200
        %p721 = pneg %p224
        %p722 = pneg %p221
        %p723 = pneg %p245
        %p724 = pneg %p242
        %p725 = pneg %p266
        %p726 = pneg %p263
        %p727 = pneg %p287
        %p728 = pneg %p284
        %p729 = pneg %p315
        %p730 = pneg %p312
        %s731 = smul.u32 2, %s32
        %p732 = scmp.lt.s32.totalorder %s31, 1
        %s733 = scalar_select %p732, %s31, 1
        %p734 = scmp.lt.s32.totalorder %s731, 3
        %s735 = scalar_select %p734, %s731, 3
        %s736 = smul.addr %s733, 4
        %s737 = sadd.s32 %s735, %s736
        %s738 = smul.addr %s737, 8
        %s739 = scalar_lea.vmem %s10, %s738
        %p740 = pneg %p343
        %p741 = pneg %p340
        %s742 = smul.u32 2, %s32
        %p743 = scmp.lt.s32.totalorder %s31, 1
        %s744 = scalar_select %p743, %s31, 1
        %p745 = scmp.lt.s32.totalorder %s742, 3
        %s746 = scalar_select %p745, %s742, 3
        %s747 = smul.addr %s744, 4
        %s748 = sadd.s32 %s746, %s747
        %s749 = smul.addr %s748, 8
        %s750 = scalar_lea.vmem %s11, %s749
        %s751 = smul.u32 2, %s33
        %p752 = scmp.lt.s32.totalorder %s31, 1
        %s753 = scalar_select %p752, %s31, 1
        %p754 = scmp.lt.s32.totalorder %s751, 3
        %s755 = scalar_select %p754, %s751, 3
        %s756 = smul.addr %s755, 4
        %s757 = smul.addr %s753, 16
        %s758 = sadd.s32 %s756, %s757
        %s759 = smul.addr %s758, 8
        %s760 = scalar_lea.vmem %s0, %s759
        %s761 = smul.u32 2, %s33
        %s762 = smul.u32 2, %s33
        %p763 = scmp.lt.s32.totalorder %s31, 1
        %s764 = scalar_select %p763, %s31, 1
        %p765 = scmp.lt.s32.totalorder %s762, 3
        %s766 = scalar_select %p765, %s762, 3
        %s767 = smul.addr %s766, 4
        %s768 = smul.addr %s764, 16
        %s769 = sadd.s32 %s767, %s768
        %s770 = smul.addr %s769, 8
        %s771 = scalar_lea.vmem %s1, %s770
        %s772 = smul.u32 2, %s33
        %s773 = smul.u32 2, %s33
        %s774 = smul.u32 2, %s32
        %s775 = smul.u32 2, %s33
        %s776 = smul.u32 2, %s32
        %s777 = smul.u32 2, %s32
        %s778 = smul.u32 2, %s32
        %p779 = scmp.lt.s32.totalorder %s31, 1
        %s780 = scalar_select %p779, %s31, 1
        %p781 = scmp.lt.s32.totalorder %s778, 3
        %s782 = scalar_select %p781, %s778, 3
        %s783 = smul.addr %s780, 4
        %s784 = sadd.s32 %s782, %s783
        %s785 = smul.addr %s784, 8
        %s786 = scalar_lea.vmem %s10, %s785
        %s787 = smul.u32 2, %s32
        %s788 = smul.u32 2, %s32
        %p789 = scmp.lt.s32.totalorder %s31, 1
        %s790 = scalar_select %p789, %s31, 1
        %p791 = scmp.lt.s32.totalorder %s788, 3
        %s792 = scalar_select %p791, %s788, 3
        %s793 = smul.addr %s790, 4
        %s794 = sadd.s32 %s792, %s793
        %s795 = smul.addr %s794, 8
        %s796 = scalar_lea.vmem %s11, %s795
        %s797 = smul.u32 2, %s32
        %p799 = scmp.eq.s32.totalorder %s33, 0
        // Predicated region
        $region200: #{varnet_cascade.4} parent=170 // pred_check
          %p800 = pneg %p799
        $region201: #{varnet_cascade.4} parent=170 // pred_check_branch
          %802 = sbr.rel (%p800) target = $region203
        $region202: #{varnet_cascade.4} parent=170 // pred_region
          %vm803 = vcmask 130048
          %804 = vst.msk [vmem:[#allocation2] sm:$0xff] %vm803, 0.0
          %805 = vst.msk [vmem:[#allocation2 + $0x8] sm:$0xff] %vm803, 0.0
          %806 = vst.msk [vmem:[#allocation3] sm:$0xff] %vm803, 0.0
          %807 = vst.msk [vmem:[#allocation3 + $0x8] sm:$0xff] %vm803, 0.0
        $region203: #{varnet_cascade.4} parent=170 // pred_fallthru
          _
        %v808 = vld [vmem:[#allocation6] sm:$0xf]
        %v809 = vld [vmem:[#allocation6 + $0x4] sm:$0xf]
        %s810 = scalar_lea.vmem [#allocation6], 8
        %v811 = vld [vmem:[%s810] sm:$0xf]
        %v812 = vld [vmem:[%s810 + $0x4] sm:$0xf]
        %v813 = vld [vmem:[%s5] sm:$0xf]
        %v814 = vld [vmem:[%s5 + $0x4] sm:$0xf]
        %s815 = scalar_lea.vmem %s5, 8
        %v816 = vld [vmem:[%s815] sm:$0xf]
        %v817 = vld [vmem:[%s815 + $0x4] sm:$0xf]
        %v818 = vld [vmem:[#allocation2] sm:$0xff]
        %v819 = vld [vmem:[#allocation2 + $0x8] sm:$0xff]
        %v820 = vld [vmem:[#allocation3] sm:$0xff]
        %v821 = vld [vmem:[#allocation3 + $0x8] sm:$0xff]
        %v822 = vld [vmem:[%s760] sm:$0xff]
        %v823 = vld [vmem:[%s760 + $0x8] sm:$0xff]
        %v824 = vld [vmem:[%s760 + $0x10] sm:$0xff]
        %v825 = vld [vmem:[%s760 + $0x18] sm:$0xff]
        %v826 = vld [vmem:[%s771] sm:$0xff]
        %v827 = vld [vmem:[%s771 + $0x8] sm:$0xff]
        %v828 = vld [vmem:[%s771 + $0x10] sm:$0xff]
        %v829 = vld [vmem:[%s771 + $0x18] sm:$0xff]
        %v830 = vpack.c.bf16 %v823, %v822
        %v831 = vpack.c.bf16 %v825, %v824
        %v832 = vpack.c.bf16 %v827, %v826
        %v833 = vpack.c.bf16 %v829, %v828
        %v836 = vunpack.c.l.b16 %v808
        %v837 = vunpack.c.l.b16 %v809
        %v838 = vpack.c.b16 %v837, %v836
        %vm839 = vcmask 261120
        %v841 = vsel %vm839, %v838, 0
        %843 = vmatprep.subr.bf16.mxu0 0
        %844 = vmatpush1.bf16.msra.mxu0 0
        %845 = vmatprep.subr.bf16.mxu0 0
        %846 = vmatpush1.bf16.msra.mxu0 0
        %847 = vmatprep.subr.bf16.mxu0 0
        %848 = vmatpush1.bf16.msra.mxu0 0
        %849 = vmatprep.subr.bf16.mxu0 0
        %850 = vmatpush1.bf16.msra.mxu0 0
        %851 = vmatprep.subr.bf16.mxu0 0
        %852 = vmatpush1.bf16.msra.mxu0 0
        %853 = vmatprep.subr.bf16.mxu0 0
        %854 = vmatpush1.bf16.msra.mxu0 0
        %855 = vmatprep.subr.bf16.mxu0 0
        %856 = vmatpush1.bf16.msra.mxu0 %v831
        %857 = vmatprep.subr.bf16.mxu0 0
        %858 = vmatpush1.bf16.msra.mxu0 %v830
        %859 = vmatprep.subr.bf16.mxu0 0
        %860 = vmatpush2.bf16.msra.mxu0 0
        %861 = vmatprep.subr.bf16.mxu0 0
        %862 = vmatpush2.bf16.msra.mxu0 0
        %863 = vmatprep.subr.bf16.mxu0 0
        %864 = vmatpush2.bf16.msra.mxu0 0
        %865 = vmatprep.subr.bf16.mxu0 0
        %866 = vmatpush2.bf16.msra.mxu0 0
        %867 = vmatprep.subr.bf16.mxu0 0
        %868 = vmatpush2.bf16.msra.mxu0 0
        %869 = vmatprep.subr.bf16.mxu0 0
        %870 = vmatpush2.bf16.msra.mxu0 0
        %871 = vmatprep.subr.bf16.mxu0 0
        %872 = vmatpush2.bf16.msra.mxu0 0
        %873 = vmatprep.subr.bf16.mxu0 0
        %874 = vmatpush2.bf16.msra.mxu0 0
        %875 = vmatprep.mubr.bf16.mxu0 0
        %876 = vmatmul.mubr.bf16.gmra.mxu0 %v841
        %v877 = vpop.f32.mrf.mxu0
        %v878 = vadd.f32 0.0, %v877
        %v879 = vpop.f32.mrf.mxu0
        %v880 = vpop.f32.mrf.mxu0
        %v881 = vadd.f32 0.0, %v880
        %v882 = vpop.f32.mrf.mxu0
        %883 = vdwg.mxu0
        %v886 = vunpack.c.l.b16 %v811
        %v887 = vunpack.c.l.b16 %v812
        %v888 = vpack.c.b16 %v887, %v886
        %v890 = vsel %vm839, %v888, 0
        %892 = vmatprep.subr.bf16.mxu0 0
        %893 = vmatpush1.bf16.msra.mxu0 0
        %894 = vmatprep.subr.bf16.mxu0 0
        %895 = vmatpush1.bf16.msra.mxu0 0
        %896 = vmatprep.subr.bf16.mxu0 0
        %897 = vmatpush1.bf16.msra.mxu0 0
        %898 = vmatprep.subr.bf16.mxu0 0
        %899 = vmatpush1.bf16.msra.mxu0 0
        %900 = vmatprep.subr.bf16.mxu0 0
        %901 = vmatpush1.bf16.msra.mxu0 0
        %902 = vmatprep.subr.bf16.mxu0 0
        %903 = vmatpush1.bf16.msra.mxu0 0
        %904 = vmatprep.subr.bf16.mxu0 0
        %905 = vmatpush1.bf16.msra.mxu0 %v833
        %906 = vmatprep.subr.bf16.mxu0 0
        %907 = vmatpush1.bf16.msra.mxu0 %v832
        %908 = vmatprep.subr.bf16.mxu0 0
        %909 = vmatpush2.bf16.msra.mxu0 0
        %910 = vmatprep.subr.bf16.mxu0 0
        %911 = vmatpush2.bf16.msra.mxu0 0
        %912 = vmatprep.subr.bf16.mxu0 0
        %913 = vmatpush2.bf16.msra.mxu0 0
        %914 = vmatprep.subr.bf16.mxu0 0
        %915 = vmatpush2.bf16.msra.mxu0 0
        %916 = vmatprep.subr.bf16.mxu0 0
        %917 = vmatpush2.bf16.msra.mxu0 0
        %918 = vmatprep.subr.bf16.mxu0 0
        %919 = vmatpush2.bf16.msra.mxu0 0
        %920 = vmatprep.subr.bf16.mxu0 0
        %921 = vmatpush2.bf16.msra.mxu0 0
        %922 = vmatprep.subr.bf16.mxu0 0
        %923 = vmatpush2.bf16.msra.mxu0 0
        %924 = vmatprep.mubr.bf16.mxu0 0
        %925 = vmatmul.mubr.bf16.gmra.mxu0 %v890
        %v926 = vpop.f32.mrf.mxu0
        %v927 = vadd.f32 0.0, %v926
        %v928 = vpop.f32.mrf.mxu0
        %v929 = vpop.f32.mrf.mxu0
        %v930 = vadd.f32 0.0, %v929
        %v931 = vpop.f32.mrf.mxu0
        %932 = vdwg.mxu0
        %v933 = vsub.f32 %v878, %v927
        %v934 = vsub.f32 %v881, %v930
        %935 = vmatprep.subr.bf16.mxu0 0
        %936 = vmatpush1.bf16.msra.mxu0 0
        %937 = vmatprep.subr.bf16.mxu0 0
        %938 = vmatpush1.bf16.msra.mxu0 0
        %939 = vmatprep.subr.bf16.mxu0 0
        %940 = vmatpush1.bf16.msra.mxu0 0
        %941 = vmatprep.subr.bf16.mxu0 0
        %942 = vmatpush1.bf16.msra.mxu0 0
        %943 = vmatprep.subr.bf16.mxu0 0
        %944 = vmatpush1.bf16.msra.mxu0 0
        %945 = vmatprep.subr.bf16.mxu0 0
        %946 = vmatpush1.bf16.msra.mxu0 0
        %947 = vmatprep.subr.bf16.mxu0 0
        %948 = vmatpush1.bf16.msra.mxu0 %v831
        %949 = vmatprep.subr.bf16.mxu0 0
        %950 = vmatpush1.bf16.msra.mxu0 %v830
        %951 = vmatprep.subr.bf16.mxu0 0
        %952 = vmatpush2.bf16.msra.mxu0 0
        %953 = vmatprep.subr.bf16.mxu0 0
        %954 = vmatpush2.bf16.msra.mxu0 0
        %955 = vmatprep.subr.bf16.mxu0 0
        %956 = vmatpush2.bf16.msra.mxu0 0
        %957 = vmatprep.subr.bf16.mxu0 0
        %958 = vmatpush2.bf16.msra.mxu0 0
        %959 = vmatprep.subr.bf16.mxu0 0
        %960 = vmatpush2.bf16.msra.mxu0 0
        %961 = vmatprep.subr.bf16.mxu0 0
        %962 = vmatpush2.bf16.msra.mxu0 0
        %963 = vmatprep.subr.bf16.mxu0 0
        %964 = vmatpush2.bf16.msra.mxu0 0
        %965 = vmatprep.subr.bf16.mxu0 0
        %966 = vmatpush2.bf16.msra.mxu0 0
        %967 = vmatprep.mubr.bf16.mxu0 0
        %968 = vmatmul.mubr.bf16.gmra.mxu0 %v890
        %v969 = vpop.f32.mrf.mxu0
        %v970 = vadd.f32 0.0, %v969
        %v971 = vpop.f32.mrf.mxu0
        %v972 = vpop.f32.mrf.mxu0
        %v973 = vadd.f32 0.0, %v972
        %v974 = vpop.f32.mrf.mxu0
        %975 = vdwg.mxu0
        %976 = vmatprep.subr.bf16.mxu0 0
        %977 = vmatpush1.bf16.msra.mxu0 0
        %978 = vmatprep.subr.bf16.mxu0 0
        %979 = vmatpush1.bf16.msra.mxu0 0
        %980 = vmatprep.subr.bf16.mxu0 0
        %981 = vmatpush1.bf16.msra.mxu0 0
        %982 = vmatprep.subr.bf16.mxu0 0
        %983 = vmatpush1.bf16.msra.mxu0 0
        %984 = vmatprep.subr.bf16.mxu0 0
        %985 = vmatpush1.bf16.msra.mxu0 0
        %986 = vmatprep.subr.bf16.mxu0 0
        %987 = vmatpush1.bf16.msra.mxu0 0
        %988 = vmatprep.subr.bf16.mxu0 0
        %989 = vmatpush1.bf16.msra.mxu0 %v833
        %990 = vmatprep.subr.bf16.mxu0 0
        %991 = vmatpush1.bf16.msra.mxu0 %v832
        %992 = vmatprep.subr.bf16.mxu0 0
        %993 = vmatpush2.bf16.msra.mxu0 0
        %994 = vmatprep.subr.bf16.mxu0 0
        %995 = vmatpush2.bf16.msra.mxu0 0
        %996 = vmatprep.subr.bf16.mxu0 0
        %997 = vmatpush2.bf16.msra.mxu0 0
        %998 = vmatprep.subr.bf16.mxu0 0
        %999 = vmatpush2.bf16.msra.mxu0 0
        %1000 = vmatprep.subr.bf16.mxu0 0
        %1001 = vmatpush2.bf16.msra.mxu0 0
        %1002 = vmatprep.subr.bf16.mxu0 0
        %1003 = vmatpush2.bf16.msra.mxu0 0
        %1004 = vmatprep.subr.bf16.mxu0 0
        %1005 = vmatpush2.bf16.msra.mxu0 0
        %1006 = vmatprep.subr.bf16.mxu0 0
        %1007 = vmatpush2.bf16.msra.mxu0 0
        %1008 = vmatprep.mubr.bf16.mxu0 0
        %1009 = vmatmul.mubr.bf16.gmra.mxu0 %v841
        %v1010 = vpop.f32.mrf.mxu0
        %v1011 = vadd.f32 %v970, %v1010
        %v1012 = vpop.f32.mrf.mxu0
        %v1013 = vpop.f32.mrf.mxu0
        %v1014 = vadd.f32 %v973, %v1013
        %v1015 = vpop.f32.mrf.mxu0
        %1016 = vdwg.mxu0
        %v1017 = vpack.c.bf16 %v934, %v933
        %v1018 = vpack.c.bf16 %v1014, %v1011
        %v1021 = vunpack.c.l.b16 %v813
        %v1022 = vunpack.c.l.b16 %v814
        %v1023 = vpack.c.b16 %v1022, %v1021
        %vm1025 = vcmask 130048
        %v1027 = vsel %vm1025, %v1017, 0
        %1029 = vmatprep.subr.bf16.mxu0 0
        %1030 = vmatpush1.bf16.msra.mxu0 0
        %1031 = vmatprep.subr.bf16.mxu0 0
        %1032 = vmatpush1.bf16.msra.mxu0 0
        %1033 = vmatprep.subr.bf16.mxu0 0
        %1034 = vmatpush1.bf16.msra.mxu0 0
        %1035 = vmatprep.subr.bf16.mxu0 0
        %1036 = vmatpush1.bf16.msra.mxu0 0
        %1037 = vmatprep.subr.bf16.mxu0 0
        %1038 = vmatpush1.bf16.msra.mxu0 0
        %1039 = vmatprep.subr.bf16.mxu0 0
        %1040 = vmatpush1.bf16.msra.mxu0 0
        %1041 = vmatprep.subr.bf16.mxu0 0
        %1042 = vmatpush1.bf16.msra.mxu0 0
        %1043 = vmatprep.subr.bf16.mxu0 0
        %1044 = vmatpush1.bf16.msra.mxu0 %v1023
        %1045 = vmatprep.subr.bf16.mxu0 0
        %1046 = vmatpush2.bf16.msra.mxu0 0
        %1047 = vmatprep.subr.bf16.mxu0 0
        %1048 = vmatpush2.bf16.msra.mxu0 0
        %1049 = vmatprep.subr.bf16.mxu0 0
        %1050 = vmatpush2.bf16.msra.mxu0 0
        %1051 = vmatprep.subr.bf16.mxu0 0
        %1052 = vmatpush2.bf16.msra.mxu0 0
        %1053 = vmatprep.subr.bf16.mxu0 0
        %1054 = vmatpush2.bf16.msra.mxu0 0
        %1055 = vmatprep.subr.bf16.mxu0 0
        %1056 = vmatpush2.bf16.msra.mxu0 0
        %1057 = vmatprep.subr.bf16.mxu0 0
        %1058 = vmatpush2.bf16.msra.mxu0 0
        %1059 = vmatprep.subr.bf16.mxu0 0
        %1060 = vmatpush2.bf16.msra.mxu0 0
        %1061 = vmatprep.mubr.bf16.mxu0 0
        %1062 = vmatmul.mubr.bf16.gmra.mxu0 %v1027
        %v1063 = vpop.f32.mrf.mxu0
        %v1064 = vadd.f32 0.0, %v1063
        %v1065 = vpop.f32.mrf.mxu0
        %v1066 = vpop.f32.mrf.mxu0
        %v1067 = vadd.f32 0.0, %v1066
        %v1068 = vpop.f32.mrf.mxu0
        %1069 = vdwg.mxu0
        %v1072 = vunpack.c.l.b16 %v816
        %v1073 = vunpack.c.l.b16 %v817
        %v1074 = vpack.c.b16 %v1073, %v1072
        %v1077 = vsel %vm1025, %v1018, 0
        %1079 = vmatprep.subr.bf16.mxu0 0
        %1080 = vmatpush1.bf16.msra.mxu0 0
        %1081 = vmatprep.subr.bf16.mxu0 0
        %1082 = vmatpush1.bf16.msra.mxu0 0
        %1083 = vmatprep.subr.bf16.mxu0 0
        %1084 = vmatpush1.bf16.msra.mxu0 0
        %1085 = vmatprep.subr.bf16.mxu0 0
        %1086 = vmatpush1.bf16.msra.mxu0 0
        %1087 = vmatprep.subr.bf16.mxu0 0
        %1088 = vmatpush1.bf16.msra.mxu0 0
        %1089 = vmatprep.subr.bf16.mxu0 0
        %1090 = vmatpush1.bf16.msra.mxu0 0
        %1091 = vmatprep.subr.bf16.mxu0 0
        %1092 = vmatpush1.bf16.msra.mxu0 0
        %1093 = vmatprep.subr.bf16.mxu0 0
        %1094 = vmatpush1.bf16.msra.mxu0 %v1074
        %1095 = vmatprep.subr.bf16.mxu0 0
        %1096 = vmatpush2.bf16.msra.mxu0 0
        %1097 = vmatprep.subr.bf16.mxu0 0
        %1098 = vmatpush2.bf16.msra.mxu0 0
        %1099 = vmatprep.subr.bf16.mxu0 0
        %1100 = vmatpush2.bf16.msra.mxu0 0
        %1101 = vmatprep.subr.bf16.mxu0 0
        %1102 = vmatpush2.bf16.msra.mxu0 0
        %1103 = vmatprep.subr.bf16.mxu0 0
        %1104 = vmatpush2.bf16.msra.mxu0 0
        %1105 = vmatprep.subr.bf16.mxu0 0
        %1106 = vmatpush2.bf16.msra.mxu0 0
        %1107 = vmatprep.subr.bf16.mxu0 0
        %1108 = vmatpush2.bf16.msra.mxu0 0
        %1109 = vmatprep.subr.bf16.mxu0 0
        %1110 = vmatpush2.bf16.msra.mxu0 0
        %1111 = vmatprep.mubr.bf16.mxu0 0
        %1112 = vmatmul.mubr.bf16.gmra.mxu0 %v1077
        %v1113 = vpop.f32.mrf.mxu0
        %v1114 = vadd.f32 0.0, %v1113
        %v1115 = vpop.f32.mrf.mxu0
        %v1116 = vpop.f32.mrf.mxu0
        %v1117 = vadd.f32 0.0, %v1116
        %v1118 = vpop.f32.mrf.mxu0
        %1119 = vdwg.mxu0
        %v1120 = vsub.f32 %v1064, %v1114
        %v1121 = vsub.f32 %v1067, %v1117
        %1122 = vmatprep.subr.bf16.mxu0 0
        %1123 = vmatpush1.bf16.msra.mxu0 0
        %1124 = vmatprep.subr.bf16.mxu0 0
        %1125 = vmatpush1.bf16.msra.mxu0 0
        %1126 = vmatprep.subr.bf16.mxu0 0
        %1127 = vmatpush1.bf16.msra.mxu0 0
        %1128 = vmatprep.subr.bf16.mxu0 0
        %1129 = vmatpush1.bf16.msra.mxu0 0
        %1130 = vmatprep.subr.bf16.mxu0 0
        %1131 = vmatpush1.bf16.msra.mxu0 0
        %1132 = vmatprep.subr.bf16.mxu0 0
        %1133 = vmatpush1.bf16.msra.mxu0 0
        %1134 = vmatprep.subr.bf16.mxu0 0
        %1135 = vmatpush1.bf16.msra.mxu0 0
        %1136 = vmatprep.subr.bf16.mxu0 0
        %1137 = vmatpush1.bf16.msra.mxu0 %v1074
        %1138 = vmatprep.subr.bf16.mxu0 0
        %1139 = vmatpush2.bf16.msra.mxu0 0
        %1140 = vmatprep.subr.bf16.mxu0 0
        %1141 = vmatpush2.bf16.msra.mxu0 0
        %1142 = vmatprep.subr.bf16.mxu0 0
        %1143 = vmatpush2.bf16.msra.mxu0 0
        %1144 = vmatprep.subr.bf16.mxu0 0
        %1145 = vmatpush2.bf16.msra.mxu0 0
        %1146 = vmatprep.subr.bf16.mxu0 0
        %1147 = vmatpush2.bf16.msra.mxu0 0
        %1148 = vmatprep.subr.bf16.mxu0 0
        %1149 = vmatpush2.bf16.msra.mxu0 0
        %1150 = vmatprep.subr.bf16.mxu0 0
        %1151 = vmatpush2.bf16.msra.mxu0 0
        %1152 = vmatprep.subr.bf16.mxu0 0
        %1153 = vmatpush2.bf16.msra.mxu0 0
        %1154 = vmatprep.mubr.bf16.mxu0 0
        %1155 = vmatmul.mubr.bf16.gmra.mxu0 %v1027
        %v1156 = vpop.f32.mrf.mxu0
        %v1157 = vadd.f32 0.0, %v1156
        %v1158 = vpop.f32.mrf.mxu0
        %v1159 = vpop.f32.mrf.mxu0
        %v1160 = vadd.f32 0.0, %v1159
        %v1161 = vpop.f32.mrf.mxu0
        %1162 = vdwg.mxu0
        %1163 = vmatprep.subr.bf16.mxu0 0
        %1164 = vmatpush1.bf16.msra.mxu0 0
        %1165 = vmatprep.subr.bf16.mxu0 0
        %1166 = vmatpush1.bf16.msra.mxu0 0
        %1167 = vmatprep.subr.bf16.mxu0 0
        %1168 = vmatpush1.bf16.msra.mxu0 0
        %1169 = vmatprep.subr.bf16.mxu0 0
        %1170 = vmatpush1.bf16.msra.mxu0 0
        %1171 = vmatprep.subr.bf16.mxu0 0
        %1172 = vmatpush1.bf16.msra.mxu0 0
        %1173 = vmatprep.subr.bf16.mxu0 0
        %1174 = vmatpush1.bf16.msra.mxu0 0
        %1175 = vmatprep.subr.bf16.mxu0 0
        %1176 = vmatpush1.bf16.msra.mxu0 0
        %1177 = vmatprep.subr.bf16.mxu0 0
        %1178 = vmatpush1.bf16.msra.mxu0 %v1023
        %1179 = vmatprep.subr.bf16.mxu0 0
        %1180 = vmatpush2.bf16.msra.mxu0 0
        %1181 = vmatprep.subr.bf16.mxu0 0
        %1182 = vmatpush2.bf16.msra.mxu0 0
        %1183 = vmatprep.subr.bf16.mxu0 0
        %1184 = vmatpush2.bf16.msra.mxu0 0
        %1185 = vmatprep.subr.bf16.mxu0 0
        %1186 = vmatpush2.bf16.msra.mxu0 0
        %1187 = vmatprep.subr.bf16.mxu0 0
        %1188 = vmatpush2.bf16.msra.mxu0 0
        %1189 = vmatprep.subr.bf16.mxu0 0
        %1190 = vmatpush2.bf16.msra.mxu0 0
        %1191 = vmatprep.subr.bf16.mxu0 0
        %1192 = vmatpush2.bf16.msra.mxu0 0
        %1193 = vmatprep.subr.bf16.mxu0 0
        %1194 = vmatpush2.bf16.msra.mxu0 0
        %1195 = vmatprep.mubr.bf16.mxu0 0
        %1196 = vmatmul.mubr.bf16.gmra.mxu0 %v1077
        %v1197 = vpop.f32.mrf.mxu0
        %v1198 = vadd.f32 %v1157, %v1197
        %v1199 = vpop.f32.mrf.mxu0
        %v1200 = vpop.f32.mrf.mxu0
        %v1201 = vadd.f32 %v1160, %v1200
        %v1202 = vpop.f32.mrf.mxu0
        %1203 = vdwg.mxu0
        %v1204 = vld [vmem:[%s650] sm:$0xf]
        %v1205 = vld [vmem:[%s650 + $0x4] sm:$0xf]
        %v1206 = vunpack.c.l.bf16 %v1204
        %v1207 = vunpack.c.l.bf16 %v1205
        %v1208 = vld [vmem:[%s657] sm:$0xf]
        %v1209 = vld [vmem:[%s657 + $0x4] sm:$0xf]
        %v1210 = vunpack.c.l.bf16 %v1208
        %v1211 = vunpack.c.l.bf16 %v1209
        %v1212 = vmul.f32 %v1120, %v1206
        %v1213 = vmul.f32 %v1121, %v1207
        %v1214 = vadd.f32 %v818, %v1212
        %v1215 = vadd.f32 %v819, %v1213
        %v1216 = vmul.f32 %v1198, %v1210
        %v1217 = vmul.f32 %v1201, %v1211
        %v1218 = vadd.f32 %v1214, %v1216
        %v1219 = vadd.f32 %v1215, %v1217
        %v1220 = vmul.f32 %v1198, %v1206
        %v1221 = vmul.f32 %v1201, %v1207
        %v1222 = vadd.f32 %v820, %v1220
        %v1223 = vadd.f32 %v821, %v1221
        %v1224 = vmul.f32 %v1120, %v1210
        %v1225 = vmul.f32 %v1121, %v1211
        %v1226 = vsub.f32 %v1222, %v1224
        %v1227 = vsub.f32 %v1223, %v1225
        %s1228 = scalar_lea.vmem %s760, 32
        %v1229 = vld [vmem:[%s1228] sm:$0xff]
        %v1230 = vld [vmem:[%s1228 + $0x8] sm:$0xff]
        %v1231 = vld [vmem:[%s1228 + $0x10] sm:$0xff]
        %v1232 = vld [vmem:[%s1228 + $0x18] sm:$0xff]
        %s1233 = scalar_lea.vmem %s771, 32
        %v1234 = vld [vmem:[%s1233] sm:$0xff]
        %v1235 = vld [vmem:[%s1233 + $0x8] sm:$0xff]
        %v1236 = vld [vmem:[%s1233 + $0x10] sm:$0xff]
        %v1237 = vld [vmem:[%s1233 + $0x18] sm:$0xff]
        %v1238 = vpack.c.bf16 %v1230, %v1229
        %v1239 = vpack.c.bf16 %v1232, %v1231
        %v1240 = vpack.c.bf16 %v1235, %v1234
        %v1241 = vpack.c.bf16 %v1237, %v1236
        %1242 = vmatprep.subr.bf16.mxu0 0
        %1243 = vmatpush1.bf16.msra.mxu0 0
        %1244 = vmatprep.subr.bf16.mxu0 0
        %1245 = vmatpush1.bf16.msra.mxu0 0
        %1246 = vmatprep.subr.bf16.mxu0 0
        %1247 = vmatpush1.bf16.msra.mxu0 0
        %1248 = vmatprep.subr.bf16.mxu0 0
        %1249 = vmatpush1.bf16.msra.mxu0 0
        %1250 = vmatprep.subr.bf16.mxu0 0
        %1251 = vmatpush1.bf16.msra.mxu0 0
        %1252 = vmatprep.subr.bf16.mxu0 0
        %1253 = vmatpush1.bf16.msra.mxu0 0
        %1254 = vmatprep.subr.bf16.mxu0 0
        %1255 = vmatpush1.bf16.msra.mxu0 %v1239
        %1256 = vmatprep.subr.bf16.mxu0 0
        %1257 = vmatpush1.bf16.msra.mxu0 %v1238
        %1258 = vmatprep.subr.bf16.mxu0 0
        %1259 = vmatpush2.bf16.msra.mxu0 0
        %1260 = vmatprep.subr.bf16.mxu0 0
        %1261 = vmatpush2.bf16.msra.mxu0 0
        %1262 = vmatprep.subr.bf16.mxu0 0
        %1263 = vmatpush2.bf16.msra.mxu0 0
        %1264 = vmatprep.subr.bf16.mxu0 0
        %1265 = vmatpush2.bf16.msra.mxu0 0
        %1266 = vmatprep.subr.bf16.mxu0 0
        %1267 = vmatpush2.bf16.msra.mxu0 0
        %1268 = vmatprep.subr.bf16.mxu0 0
        %1269 = vmatpush2.bf16.msra.mxu0 0
        %1270 = vmatprep.subr.bf16.mxu0 0
        %1271 = vmatpush2.bf16.msra.mxu0 0
        %1272 = vmatprep.subr.bf16.mxu0 0
        %1273 = vmatpush2.bf16.msra.mxu0 0
        %1274 = vmatprep.mubr.bf16.mxu0 0
        %1275 = vmatmul.mubr.bf16.gmra.mxu0 %v841
        %v1276 = vpop.f32.mrf.mxu0
        %v1277 = vadd.f32 0.0, %v1276
        %v1278 = vpop.f32.mrf.mxu0
        %v1279 = vpop.f32.mrf.mxu0
        %v1280 = vadd.f32 0.0, %v1279
        %v1281 = vpop.f32.mrf.mxu0
        %1282 = vdwg.mxu0
        %1283 = vmatprep.subr.bf16.mxu0 0
        %1284 = vmatpush1.bf16.msra.mxu0 0
        %1285 = vmatprep.subr.bf16.mxu0 0
        %1286 = vmatpush1.bf16.msra.mxu0 0
        %1287 = vmatprep.subr.bf16.mxu0 0
        %1288 = vmatpush1.bf16.msra.mxu0 0
        %1289 = vmatprep.subr.bf16.mxu0 0
        %1290 = vmatpush1.bf16.msra.mxu0 0
        %1291 = vmatprep.subr.bf16.mxu0 0
        %1292 = vmatpush1.bf16.msra.mxu0 0
        %1293 = vmatprep.subr.bf16.mxu0 0
        %1294 = vmatpush1.bf16.msra.mxu0 0
        %1295 = vmatprep.subr.bf16.mxu0 0
        %1296 = vmatpush1.bf16.msra.mxu0 %v1241
        %1297 = vmatprep.subr.bf16.mxu0 0
        %1298 = vmatpush1.bf16.msra.mxu0 %v1240
        %1299 = vmatprep.subr.bf16.mxu0 0
        %1300 = vmatpush2.bf16.msra.mxu0 0
        %1301 = vmatprep.subr.bf16.mxu0 0
        %1302 = vmatpush2.bf16.msra.mxu0 0
        %1303 = vmatprep.subr.bf16.mxu0 0
        %1304 = vmatpush2.bf16.msra.mxu0 0
        %1305 = vmatprep.subr.bf16.mxu0 0
        %1306 = vmatpush2.bf16.msra.mxu0 0
        %1307 = vmatprep.subr.bf16.mxu0 0
        %1308 = vmatpush2.bf16.msra.mxu0 0
        %1309 = vmatprep.subr.bf16.mxu0 0
        %1310 = vmatpush2.bf16.msra.mxu0 0
        %1311 = vmatprep.subr.bf16.mxu0 0
        %1312 = vmatpush2.bf16.msra.mxu0 0
        %1313 = vmatprep.subr.bf16.mxu0 0
        %1314 = vmatpush2.bf16.msra.mxu0 0
        %1315 = vmatprep.mubr.bf16.mxu0 0
        %1316 = vmatmul.mubr.bf16.gmra.mxu0 %v890
        %v1317 = vpop.f32.mrf.mxu0
        %v1318 = vadd.f32 0.0, %v1317
        %v1319 = vpop.f32.mrf.mxu0
        %v1320 = vpop.f32.mrf.mxu0
        %v1321 = vadd.f32 0.0, %v1320
        %v1322 = vpop.f32.mrf.mxu0
        %1323 = vdwg.mxu0
        %v1324 = vsub.f32 %v1277, %v1318
        %v1325 = vsub.f32 %v1280, %v1321
        %1326 = vmatprep.subr.bf16.mxu0 0
        %1327 = vmatpush1.bf16.msra.mxu0 0
        %1328 = vmatprep.subr.bf16.mxu0 0
        %1329 = vmatpush1.bf16.msra.mxu0 0
        %1330 = vmatprep.subr.bf16.mxu0 0
        %1331 = vmatpush1.bf16.msra.mxu0 0
        %1332 = vmatprep.subr.bf16.mxu0 0
        %1333 = vmatpush1.bf16.msra.mxu0 0
        %1334 = vmatprep.subr.bf16.mxu0 0
        %1335 = vmatpush1.bf16.msra.mxu0 0
        %1336 = vmatprep.subr.bf16.mxu0 0
        %1337 = vmatpush1.bf16.msra.mxu0 0
        %1338 = vmatprep.subr.bf16.mxu0 0
        %1339 = vmatpush1.bf16.msra.mxu0 %v1239
        %1340 = vmatprep.subr.bf16.mxu0 0
        %1341 = vmatpush1.bf16.msra.mxu0 %v1238
        %1342 = vmatprep.subr.bf16.mxu0 0
        %1343 = vmatpush2.bf16.msra.mxu0 0
        %1344 = vmatprep.subr.bf16.mxu0 0
        %1345 = vmatpush2.bf16.msra.mxu0 0
        %1346 = vmatprep.subr.bf16.mxu0 0
        %1347 = vmatpush2.bf16.msra.mxu0 0
        %1348 = vmatprep.subr.bf16.mxu0 0
        %1349 = vmatpush2.bf16.msra.mxu0 0
        %1350 = vmatprep.subr.bf16.mxu0 0
        %1351 = vmatpush2.bf16.msra.mxu0 0
        %1352 = vmatprep.subr.bf16.mxu0 0
        %1353 = vmatpush2.bf16.msra.mxu0 0
        %1354 = vmatprep.subr.bf16.mxu0 0
        %1355 = vmatpush2.bf16.msra.mxu0 0
        %1356 = vmatprep.subr.bf16.mxu0 0
        %1357 = vmatpush2.bf16.msra.mxu0 0
        %1358 = vmatprep.mubr.bf16.mxu0 0
        %1359 = vmatmul.mubr.bf16.gmra.mxu0 %v890
        %v1360 = vpop.f32.mrf.mxu0
        %v1361 = vadd.f32 0.0, %v1360
        %v1362 = vpop.f32.mrf.mxu0
        %v1363 = vpop.f32.mrf.mxu0
        %v1364 = vadd.f32 0.0, %v1363
        %v1365 = vpop.f32.mrf.mxu0
        %1366 = vdwg.mxu0
        %1367 = vmatprep.subr.bf16.mxu0 0
        %1368 = vmatpush1.bf16.msra.mxu0 0
        %1369 = vmatprep.subr.bf16.mxu0 0
        %1370 = vmatpush1.bf16.msra.mxu0 0
        %1371 = vmatprep.subr.bf16.mxu0 0
        %1372 = vmatpush1.bf16.msra.mxu0 0
        %1373 = vmatprep.subr.bf16.mxu0 0
        %1374 = vmatpush1.bf16.msra.mxu0 0
        %1375 = vmatprep.subr.bf16.mxu0 0
        %1376 = vmatpush1.bf16.msra.mxu0 0
        %1377 = vmatprep.subr.bf16.mxu0 0
        %1378 = vmatpush1.bf16.msra.mxu0 0
        %1379 = vmatprep.subr.bf16.mxu0 0
        %1380 = vmatpush1.bf16.msra.mxu0 %v1241
        %1381 = vmatprep.subr.bf16.mxu0 0
        %1382 = vmatpush1.bf16.msra.mxu0 %v1240
        %1383 = vmatprep.subr.bf16.mxu0 0
        %1384 = vmatpush2.bf16.msra.mxu0 0
        %1385 = vmatprep.subr.bf16.mxu0 0
        %1386 = vmatpush2.bf16.msra.mxu0 0
        %1387 = vmatprep.subr.bf16.mxu0 0
        %1388 = vmatpush2.bf16.msra.mxu0 0
        %1389 = vmatprep.subr.bf16.mxu0 0
        %1390 = vmatpush2.bf16.msra.mxu0 0
        %1391 = vmatprep.subr.bf16.mxu0 0
        %1392 = vmatpush2.bf16.msra.mxu0 0
        %1393 = vmatprep.subr.bf16.mxu0 0
        %1394 = vmatpush2.bf16.msra.mxu0 0
        %1395 = vmatprep.subr.bf16.mxu0 0
        %1396 = vmatpush2.bf16.msra.mxu0 0
        %1397 = vmatprep.subr.bf16.mxu0 0
        %1398 = vmatpush2.bf16.msra.mxu0 0
        %1399 = vmatprep.mubr.bf16.mxu0 0
        %1400 = vmatmul.mubr.bf16.gmra.mxu0 %v841
        %v1401 = vpop.f32.mrf.mxu0
        %v1402 = vadd.f32 %v1361, %v1401
        %v1403 = vpop.f32.mrf.mxu0
        %v1404 = vpop.f32.mrf.mxu0
        %v1405 = vadd.f32 %v1364, %v1404
        %v1406 = vpop.f32.mrf.mxu0
        %1407 = vdwg.mxu0
        %v1408 = vpack.c.bf16 %v1325, %v1324
        %v1409 = vpack.c.bf16 %v1405, %v1402
        %v1411 = vsel %vm1025, %v1408, 0
        %1413 = vmatprep.subr.bf16.mxu0 0
        %1414 = vmatpush1.bf16.msra.mxu0 0
        %1415 = vmatprep.subr.bf16.mxu0 0
        %1416 = vmatpush1.bf16.msra.mxu0 0
        %1417 = vmatprep.subr.bf16.mxu0 0
        %1418 = vmatpush1.bf16.msra.mxu0 0
        %1419 = vmatprep.subr.bf16.mxu0 0
        %1420 = vmatpush1.bf16.msra.mxu0 0
        %1421 = vmatprep.subr.bf16.mxu0 0
        %1422 = vmatpush1.bf16.msra.mxu0 0
        %1423 = vmatprep.subr.bf16.mxu0 0
        %1424 = vmatpush1.bf16.msra.mxu0 0
        %1425 = vmatprep.subr.bf16.mxu0 0
        %1426 = vmatpush1.bf16.msra.mxu0 0
        %1427 = vmatprep.subr.bf16.mxu0 0
        %1428 = vmatpush1.bf16.msra.mxu0 %v1023
        %1429 = vmatprep.subr.bf16.mxu0 0
        %1430 = vmatpush2.bf16.msra.mxu0 0
        %1431 = vmatprep.subr.bf16.mxu0 0
        %1432 = vmatpush2.bf16.msra.mxu0 0
        %1433 = vmatprep.subr.bf16.mxu0 0
        %1434 = vmatpush2.bf16.msra.mxu0 0
        %1435 = vmatprep.subr.bf16.mxu0 0
        %1436 = vmatpush2.bf16.msra.mxu0 0
        %1437 = vmatprep.subr.bf16.mxu0 0
        %1438 = vmatpush2.bf16.msra.mxu0 0
        %1439 = vmatprep.subr.bf16.mxu0 0
        %1440 = vmatpush2.bf16.msra.mxu0 0
        %1441 = vmatprep.subr.bf16.mxu0 0
        %1442 = vmatpush2.bf16.msra.mxu0 0
        %1443 = vmatprep.subr.bf16.mxu0 0
        %1444 = vmatpush2.bf16.msra.mxu0 0
        %1445 = vmatprep.mubr.bf16.mxu0 0
        %1446 = vmatmul.mubr.bf16.gmra.mxu0 %v1411
        %v1447 = vpop.f32.mrf.mxu0
        %v1448 = vadd.f32 0.0, %v1447
        %v1449 = vpop.f32.mrf.mxu0
        %v1450 = vpop.f32.mrf.mxu0
        %v1451 = vadd.f32 0.0, %v1450
        %v1452 = vpop.f32.mrf.mxu0
        %1453 = vdwg.mxu0
        %v1455 = vsel %vm1025, %v1409, 0
        %1457 = vmatprep.subr.bf16.mxu0 0
        %1458 = vmatpush1.bf16.msra.mxu0 0
        %1459 = vmatprep.subr.bf16.mxu0 0
        %1460 = vmatpush1.bf16.msra.mxu0 0
        %1461 = vmatprep.subr.bf16.mxu0 0
        %1462 = vmatpush1.bf16.msra.mxu0 0
        %1463 = vmatprep.subr.bf16.mxu0 0
        %1464 = vmatpush1.bf16.msra.mxu0 0
        %1465 = vmatprep.subr.bf16.mxu0 0
        %1466 = vmatpush1.bf16.msra.mxu0 0
        %1467 = vmatprep.subr.bf16.mxu0 0
        %1468 = vmatpush1.bf16.msra.mxu0 0
        %1469 = vmatprep.subr.bf16.mxu0 0
        %1470 = vmatpush1.bf16.msra.mxu0 0
        %1471 = vmatprep.subr.bf16.mxu0 0
        %1472 = vmatpush1.bf16.msra.mxu0 %v1074
        %1473 = vmatprep.subr.bf16.mxu0 0
        %1474 = vmatpush2.bf16.msra.mxu0 0
        %1475 = vmatprep.subr.bf16.mxu0 0
        %1476 = vmatpush2.bf16.msra.mxu0 0
        %1477 = vmatprep.subr.bf16.mxu0 0
        %1478 = vmatpush2.bf16.msra.mxu0 0
        %1479 = vmatprep.subr.bf16.mxu0 0
        %1480 = vmatpush2.bf16.msra.mxu0 0
        %1481 = vmatprep.subr.bf16.mxu0 0
        %1482 = vmatpush2.bf16.msra.mxu0 0
        %1483 = vmatprep.subr.bf16.mxu0 0
        %1484 = vmatpush2.bf16.msra.mxu0 0
        %1485 = vmatprep.subr.bf16.mxu0 0
        %1486 = vmatpush2.bf16.msra.mxu0 0
        %1487 = vmatprep.subr.bf16.mxu0 0
        %1488 = vmatpush2.bf16.msra.mxu0 0
        %1489 = vmatprep.mubr.bf16.mxu0 0
        %1490 = vmatmul.mubr.bf16.gmra.mxu0 %v1455
        %v1491 = vpop.f32.mrf.mxu0
        %v1492 = vadd.f32 0.0, %v1491
        %v1493 = vpop.f32.mrf.mxu0
        %v1494 = vpop.f32.mrf.mxu0
        %v1495 = vadd.f32 0.0, %v1494
        %v1496 = vpop.f32.mrf.mxu0
        %1497 = vdwg.mxu0
        %v1498 = vsub.f32 %v1448, %v1492
        %v1499 = vsub.f32 %v1451, %v1495
        %1500 = vmatprep.subr.bf16.mxu0 0
        %1501 = vmatpush1.bf16.msra.mxu0 0
        %1502 = vmatprep.subr.bf16.mxu0 0
        %1503 = vmatpush1.bf16.msra.mxu0 0
        %1504 = vmatprep.subr.bf16.mxu0 0
        %1505 = vmatpush1.bf16.msra.mxu0 0
        %1506 = vmatprep.subr.bf16.mxu0 0
        %1507 = vmatpush1.bf16.msra.mxu0 0
        %1508 = vmatprep.subr.bf16.mxu0 0
        %1509 = vmatpush1.bf16.msra.mxu0 0
        %1510 = vmatprep.subr.bf16.mxu0 0
        %1511 = vmatpush1.bf16.msra.mxu0 0
        %1512 = vmatprep.subr.bf16.mxu0 0
        %1513 = vmatpush1.bf16.msra.mxu0 0
        %1514 = vmatprep.subr.bf16.mxu0 0
        %1515 = vmatpush1.bf16.msra.mxu0 %v1074
        %1516 = vmatprep.subr.bf16.mxu0 0
        %1517 = vmatpush2.bf16.msra.mxu0 0
        %1518 = vmatprep.subr.bf16.mxu0 0
        %1519 = vmatpush2.bf16.msra.mxu0 0
        %1520 = vmatprep.subr.bf16.mxu0 0
        %1521 = vmatpush2.bf16.msra.mxu0 0
        %1522 = vmatprep.subr.bf16.mxu0 0
        %1523 = vmatpush2.bf16.msra.mxu0 0
        %1524 = vmatprep.subr.bf16.mxu0 0
        %1525 = vmatpush2.bf16.msra.mxu0 0
        %1526 = vmatprep.subr.bf16.mxu0 0
        %1527 = vmatpush2.bf16.msra.mxu0 0
        %1528 = vmatprep.subr.bf16.mxu0 0
        %1529 = vmatpush2.bf16.msra.mxu0 0
        %1530 = vmatprep.subr.bf16.mxu0 0
        %1531 = vmatpush2.bf16.msra.mxu0 0
        %1532 = vmatprep.mubr.bf16.mxu0 0
        %1533 = vmatmul.mubr.bf16.gmra.mxu0 %v1411
        %v1534 = vpop.f32.mrf.mxu0
        %v1535 = vadd.f32 0.0, %v1534
        %v1536 = vpop.f32.mrf.mxu0
        %v1537 = vpop.f32.mrf.mxu0
        %v1538 = vadd.f32 0.0, %v1537
        %v1539 = vpop.f32.mrf.mxu0
        %1540 = vdwg.mxu0
        %1541 = vmatprep.subr.bf16.mxu0 0
        %1542 = vmatpush1.bf16.msra.mxu0 0
        %1543 = vmatprep.subr.bf16.mxu0 0
        %1544 = vmatpush1.bf16.msra.mxu0 0
        %1545 = vmatprep.subr.bf16.mxu0 0
        %1546 = vmatpush1.bf16.msra.mxu0 0
        %1547 = vmatprep.subr.bf16.mxu0 0
        %1548 = vmatpush1.bf16.msra.mxu0 0
        %1549 = vmatprep.subr.bf16.mxu0 0
        %1550 = vmatpush1.bf16.msra.mxu0 0
        %1551 = vmatprep.subr.bf16.mxu0 0
        %1552 = vmatpush1.bf16.msra.mxu0 0
        %1553 = vmatprep.subr.bf16.mxu0 0
        %1554 = vmatpush1.bf16.msra.mxu0 0
        %1555 = vmatprep.subr.bf16.mxu0 0
        %1556 = vmatpush1.bf16.msra.mxu0 %v1023
        %1557 = vmatprep.subr.bf16.mxu0 0
        %1558 = vmatpush2.bf16.msra.mxu0 0
        %1559 = vmatprep.subr.bf16.mxu0 0
        %1560 = vmatpush2.bf16.msra.mxu0 0
        %1561 = vmatprep.subr.bf16.mxu0 0
        %1562 = vmatpush2.bf16.msra.mxu0 0
        %1563 = vmatprep.subr.bf16.mxu0 0
        %1564 = vmatpush2.bf16.msra.mxu0 0
        %1565 = vmatprep.subr.bf16.mxu0 0
        %1566 = vmatpush2.bf16.msra.mxu0 0
        %1567 = vmatprep.subr.bf16.mxu0 0
        %1568 = vmatpush2.bf16.msra.mxu0 0
        %1569 = vmatprep.subr.bf16.mxu0 0
        %1570 = vmatpush2.bf16.msra.mxu0 0
        %1571 = vmatprep.subr.bf16.mxu0 0
        %1572 = vmatpush2.bf16.msra.mxu0 0
        %1573 = vmatprep.mubr.bf16.mxu0 0
        %1574 = vmatmul.mubr.bf16.gmra.mxu0 %v1455
        %v1575 = vpop.f32.mrf.mxu0
        %v1576 = vadd.f32 %v1535, %v1575
        %v1577 = vpop.f32.mrf.mxu0
        %v1578 = vpop.f32.mrf.mxu0
        %v1579 = vadd.f32 %v1538, %v1578
        %v1580 = vpop.f32.mrf.mxu0
        %1581 = vdwg.mxu0
        %s1582 = scalar_lea.vmem %s650, 8 [#allocation4]
        %v1583 = vld [vmem:[%s1582] sm:$0xf]
        %v1584 = vld [vmem:[%s1582 + $0x4] sm:$0xf]
        %v1585 = vunpack.c.l.bf16 %v1583
        %v1586 = vunpack.c.l.bf16 %v1584
        %s1587 = scalar_lea.vmem %s657, 8 [#allocation5]
        %v1588 = vld [vmem:[%s1587] sm:$0xf]
        %v1589 = vld [vmem:[%s1587 + $0x4] sm:$0xf]
        %v1590 = vunpack.c.l.bf16 %v1588
        %v1591 = vunpack.c.l.bf16 %v1589
        %v1592 = vmul.f32 %v1498, %v1585
        %v1593 = vmul.f32 %v1499, %v1586
        %v1594 = vadd.f32 %v1218, %v1592
        %v1595 = vadd.f32 %v1219, %v1593
        %v1596 = vmul.f32 %v1576, %v1590
        %v1597 = vmul.f32 %v1579, %v1591
        %v1598 = vadd.f32 %v1594, %v1596
        %v1599 = vadd.f32 %v1595, %v1597
        %v1600 = vmul.f32 %v1576, %v1585
        %v1601 = vmul.f32 %v1579, %v1586
        %v1602 = vadd.f32 %v1226, %v1600
        %v1603 = vadd.f32 %v1227, %v1601
        %v1604 = vmul.f32 %v1498, %v1590
        %v1605 = vmul.f32 %v1499, %v1591
        %v1606 = vsub.f32 %v1602, %v1604
        %v1607 = vsub.f32 %v1603, %v1605
        %1608 = vst.msk [vmem:[#allocation2] sm:$0xff] %vm1025, %v1598
        %1609 = vst.msk [vmem:[#allocation2 + $0x8] sm:$0xff] %vm1025, %v1599
        %1610 = vst.msk [vmem:[#allocation3] sm:$0xff] %vm1025, %v1606
        %1611 = vst.msk [vmem:[#allocation3 + $0x8] sm:$0xff] %vm1025, %v1607
        %p1612 = scmp.eq.s32.totalorder %s33, 1
        // Predicated region
        $region204: #{varnet_cascade.4} parent=170 // pred_check
          %p1613 = pneg %p1612
        $region205: #{varnet_cascade.4} parent=170 // pred_check_branch
          %1615 = sbr.rel (%p1613) target = $region207
        $region206: #{varnet_cascade.4} parent=170 // pred_region
          %v1616 = vld [vmem:[#allocation2] sm:$0xff]
          %v1617 = vld [vmem:[#allocation2 + $0x8] sm:$0xff]
          %v1618 = vld [vmem:[#allocation3] sm:$0xff]
          %v1619 = vld [vmem:[#allocation3 + $0x8] sm:$0xff]
          %s1620 = sld [smem:[#allocation7]]
          %v1621 = vstv %s1620
          %v1622 = vmul.f32 %v1616, %v1621
          %v1623 = vmul.f32 %v1617, %v1621
          %s1624 = sld [smem:[#allocation7 + $0x1]]
          %v1625 = vstv %s1624
          %v1626 = vmul.f32 %v1618, %v1625
          %v1627 = vmul.f32 %v1619, %v1625
          %v1628 = vadd.f32 %v1622, %v1626
          %v1629 = vadd.f32 %v1623, %v1627
          %s1630 = sld [smem:[#allocation9]]
          %v1631 = vstv %s1630
          %v1632 = vadd.f32 %v1628, %v1631
          %v1633 = vadd.f32 %v1629, %v1631
          %v1634 = vmax.f32 %v1632, 0.0
          %v1635 = vmax.f32 %v1633, 0.0
          %s1636 = sld [smem:[#allocation11]]
          %v1637 = vstv %s1636
          %v1638 = vmul.f32 %v1634, %v1637
          %v1639 = vmul.f32 %v1635, %v1637
          %v1640 = vadd.f32 %v1638, 0.0
          %v1641 = vadd.f32 %v1639, 0.0
          %s1642 = sld [smem:[#allocation11 + $0x80]]
          %v1643 = vstv %s1642
          %v1644 = vmul.f32 %v1634, %v1643
          %v1645 = vmul.f32 %v1635, %v1643
          %v1646 = vadd.f32 %v1644, 0.0
          %v1647 = vadd.f32 %v1645, 0.0
          %s1648 = sld [smem:[#allocation7 + $0x80]]
          %v1649 = vstv %s1648
          %v1650 = vmul.f32 %v1616, %v1649
          %v1651 = vmul.f32 %v1617, %v1649
          %s1652 = sld [smem:[#allocation7 + $0x81]]
          %v1653 = vstv %s1652
          %v1654 = vmul.f32 %v1618, %v1653
          %v1655 = vmul.f32 %v1619, %v1653
          %v1656 = vadd.f32 %v1650, %v1654
          %v1657 = vadd.f32 %v1651, %v1655
          %s1658 = sld [smem:[#allocation9 + $0x1]]
          %v1659 = vstv %s1658
          %v1660 = vadd.f32 %v1656, %v1659
          %v1661 = vadd.f32 %v1657, %v1659
          %v1662 = vmax.f32 %v1660, 0.0
          %v1663 = vmax.f32 %v1661, 0.0
          %s1664 = sld [smem:[#allocation11 + $0x1]]
          %v1665 = vstv %s1664
          %v1666 = vmul.f32 %v1662, %v1665
          %v1667 = vmul.f32 %v1663, %v1665
          %v1668 = vadd.f32 %v1640, %v1666
          %v1669 = vadd.f32 %v1641, %v1667
          %s1670 = sld [smem:[#allocation11 + $0x81]]
          %v1671 = vstv %s1670
          %v1672 = vmul.f32 %v1662, %v1671
          %v1673 = vmul.f32 %v1663, %v1671
          %v1674 = vadd.f32 %v1646, %v1672
          %v1675 = vadd.f32 %v1647, %v1673
          %s1676 = sld [smem:[#allocation7 + $0x100]]
          %v1677 = vstv %s1676
          %v1678 = vmul.f32 %v1616, %v1677
          %v1679 = vmul.f32 %v1617, %v1677
          %s1680 = sld [smem:[#allocation7 + $0x101]]
          %v1681 = vstv %s1680
          %v1682 = vmul.f32 %v1618, %v1681
          %v1683 = vmul.f32 %v1619, %v1681
          %v1684 = vadd.f32 %v1678, %v1682
          %v1685 = vadd.f32 %v1679, %v1683
          %s1686 = sld [smem:[#allocation9 + $0x2]]
          %v1687 = vstv %s1686
          %v1688 = vadd.f32 %v1684, %v1687
          %v1689 = vadd.f32 %v1685, %v1687
          %v1690 = vmax.f32 %v1688, 0.0
          %v1691 = vmax.f32 %v1689, 0.0
          %s1692 = sld [smem:[#allocation11 + $0x2]]
          %v1693 = vstv %s1692
          %v1694 = vmul.f32 %v1690, %v1693
          %v1695 = vmul.f32 %v1691, %v1693
          %v1696 = vadd.f32 %v1668, %v1694
          %v1697 = vadd.f32 %v1669, %v1695
          %s1698 = sld [smem:[#allocation11 + $0x82]]
          %v1699 = vstv %s1698
          %v1700 = vmul.f32 %v1690, %v1699
          %v1701 = vmul.f32 %v1691, %v1699
          %v1702 = vadd.f32 %v1674, %v1700
          %v1703 = vadd.f32 %v1675, %v1701
          %s1704 = sld [smem:[#allocation7 + $0x180]]
          %v1705 = vstv %s1704
          %v1706 = vmul.f32 %v1616, %v1705
          %v1707 = vmul.f32 %v1617, %v1705
          %s1708 = sld [smem:[#allocation7 + $0x181]]
          %v1709 = vstv %s1708
          %v1710 = vmul.f32 %v1618, %v1709
          %v1711 = vmul.f32 %v1619, %v1709
          %v1712 = vadd.f32 %v1706, %v1710
          %v1713 = vadd.f32 %v1707, %v1711
          %s1714 = sld [smem:[#allocation9 + $0x3]]
          %v1715 = vstv %s1714
          %v1716 = vadd.f32 %v1712, %v1715
          %v1717 = vadd.f32 %v1713, %v1715
          %v1718 = vmax.f32 %v1716, 0.0
          %v1719 = vmax.f32 %v1717, 0.0
          %s1720 = sld [smem:[#allocation11 + $0x3]]
          %v1721 = vstv %s1720
          %v1722 = vmul.f32 %v1718, %v1721
          %v1723 = vmul.f32 %v1719, %v1721
          %v1724 = vadd.f32 %v1696, %v1722
          %v1725 = vadd.f32 %v1697, %v1723
          %s1726 = sld [smem:[#allocation11 + $0x83]]
          %v1727 = vstv %s1726
          %v1728 = vmul.f32 %v1718, %v1727
          %v1729 = vmul.f32 %v1719, %v1727
          %v1730 = vadd.f32 %v1702, %v1728
          %v1731 = vadd.f32 %v1703, %v1729
          %s1732 = sld [smem:[#allocation7 + $0x200]]
          %v1733 = vstv %s1732
          %v1734 = vmul.f32 %v1616, %v1733
          %v1735 = vmul.f32 %v1617, %v1733
          %s1736 = sld [smem:[#allocation7 + $0x201]]
          %v1737 = vstv %s1736
          %v1738 = vmul.f32 %v1618, %v1737
          %v1739 = vmul.f32 %v1619, %v1737
          %v1740 = vadd.f32 %v1734, %v1738
          %v1741 = vadd.f32 %v1735, %v1739
          %s1742 = sld [smem:[#allocation9 + $0x4]]
          %v1743 = vstv %s1742
          %v1744 = vadd.f32 %v1740, %v1743
          %v1745 = vadd.f32 %v1741, %v1743
          %v1746 = vmax.f32 %v1744, 0.0
          %v1747 = vmax.f32 %v1745, 0.0
          %s1748 = sld [smem:[#allocation11 + $0x4]]
          %v1749 = vstv %s1748
          %v1750 = vmul.f32 %v1746, %v1749
          %v1751 = vmul.f32 %v1747, %v1749
          %v1752 = vadd.f32 %v1724, %v1750
          %v1753 = vadd.f32 %v1725, %v1751
          %s1754 = sld [smem:[#allocation11 + $0x84]]
          %v1755 = vstv %s1754
          %v1756 = vmul.f32 %v1746, %v1755
          %v1757 = vmul.f32 %v1747, %v1755
          %v1758 = vadd.f32 %v1730, %v1756
          %v1759 = vadd.f32 %v1731, %v1757
          %s1760 = sld [smem:[#allocation7 + $0x280]]
          %v1761 = vstv %s1760
          %v1762 = vmul.f32 %v1616, %v1761
          %v1763 = vmul.f32 %v1617, %v1761
          %s1764 = sld [smem:[#allocation7 + $0x281]]
          %v1765 = vstv %s1764
          %v1766 = vmul.f32 %v1618, %v1765
          %v1767 = vmul.f32 %v1619, %v1765
          %v1768 = vadd.f32 %v1762, %v1766
          %v1769 = vadd.f32 %v1763, %v1767
          %s1770 = sld [smem:[#allocation9 + $0x5]]
          %v1771 = vstv %s1770
          %v1772 = vadd.f32 %v1768, %v1771
          %v1773 = vadd.f32 %v1769, %v1771
          %v1774 = vmax.f32 %v1772, 0.0
          %v1775 = vmax.f32 %v1773, 0.0
          %s1776 = sld [smem:[#allocation11 + $0x5]]
          %v1777 = vstv %s1776
          %v1778 = vmul.f32 %v1774, %v1777
          %v1779 = vmul.f32 %v1775, %v1777
          %v1780 = vadd.f32 %v1752, %v1778
          %v1781 = vadd.f32 %v1753, %v1779
          %s1782 = sld [smem:[#allocation11 + $0x85]]
          %v1783 = vstv %s1782
          %v1784 = vmul.f32 %v1774, %v1783
          %v1785 = vmul.f32 %v1775, %v1783
          %v1786 = vadd.f32 %v1758, %v1784
          %v1787 = vadd.f32 %v1759, %v1785
          %s1788 = sld [smem:[#allocation7 + $0x300]]
          %v1789 = vstv %s1788
          %v1790 = vmul.f32 %v1616, %v1789
          %v1791 = vmul.f32 %v1617, %v1789
          %s1792 = sld [smem:[#allocation7 + $0x301]]
          %v1793 = vstv %s1792
          %v1794 = vmul.f32 %v1618, %v1793
          %v1795 = vmul.f32 %v1619, %v1793
          %v1796 = vadd.f32 %v1790, %v1794
          %v1797 = vadd.f32 %v1791, %v1795
          %s1798 = sld [smem:[#allocation9 + $0x6]]
          %v1799 = vstv %s1798
          %v1800 = vadd.f32 %v1796, %v1799
          %v1801 = vadd.f32 %v1797, %v1799
          %v1802 = vmax.f32 %v1800, 0.0
          %v1803 = vmax.f32 %v1801, 0.0
          %s1804 = sld [smem:[#allocation11 + $0x6]]
          %v1805 = vstv %s1804
          %v1806 = vmul.f32 %v1802, %v1805
          %v1807 = vmul.f32 %v1803, %v1805
          %v1808 = vadd.f32 %v1780, %v1806
          %v1809 = vadd.f32 %v1781, %v1807
          %s1810 = sld [smem:[#allocation11 + $0x86]]
          %v1811 = vstv %s1810
          %v1812 = vmul.f32 %v1802, %v1811
          %v1813 = vmul.f32 %v1803, %v1811
          %v1814 = vadd.f32 %v1786, %v1812
          %v1815 = vadd.f32 %v1787, %v1813
          %s1816 = sld [smem:[#allocation7 + $0x380]]
          %v1817 = vstv %s1816
          %v1818 = vmul.f32 %v1616, %v1817
          %v1819 = vmul.f32 %v1617, %v1817
          %s1820 = sld [smem:[#allocation7 + $0x381]]
          %v1821 = vstv %s1820
          %v1822 = vmul.f32 %v1618, %v1821
          %v1823 = vmul.f32 %v1619, %v1821
          %v1824 = vadd.f32 %v1818, %v1822
          %v1825 = vadd.f32 %v1819, %v1823
          %s1826 = sld [smem:[#allocation9 + $0x7]]
          %v1827 = vstv %s1826
          %v1828 = vadd.f32 %v1824, %v1827
          %v1829 = vadd.f32 %v1825, %v1827
          %v1830 = vmax.f32 %v1828, 0.0
          %v1831 = vmax.f32 %v1829, 0.0
          %s1832 = sld [smem:[#allocation11 + $0x7]]
          %v1833 = vstv %s1832
          %v1834 = vmul.f32 %v1830, %v1833
          %v1835 = vmul.f32 %v1831, %v1833
          %v1836 = vadd.f32 %v1808, %v1834
          %v1837 = vadd.f32 %v1809, %v1835
          %s1838 = sld [smem:[#allocation11 + $0x87]]
          %v1839 = vstv %s1838
          %v1840 = vmul.f32 %v1830, %v1839
          %v1841 = vmul.f32 %v1831, %v1839
          %v1842 = vadd.f32 %v1814, %v1840
          %v1843 = vadd.f32 %v1815, %v1841
          %s1844 = sld [smem:[#allocation12]]
          %v1845 = vstv %s1844
          %v1846 = vadd.f32 %v1836, %v1845
          %v1847 = vadd.f32 %v1837, %v1845
          %1848 = vst.msk [vmem:[%s786] sm:$0xff] %vm1025, %v1846
          %1849 = vst.msk [vmem:[%s786 + $0x8] sm:$0xff] %vm1025, %v1847
          %s1850 = sld [smem:[#allocation12 + $0x1]]
          %v1851 = vstv %s1850
          %v1852 = vadd.f32 %v1842, %v1851
          %v1853 = vadd.f32 %v1843, %v1851
          %1854 = vst.msk [vmem:[%s796] sm:$0xff] %vm1025, %v1852
          %1855 = vst.msk [vmem:[%s796 + $0x8] sm:$0xff] %vm1025, %v1853
        $region207: #{varnet_cascade.4} parent=170 // pred_fallthru
          _
        %s1856 = smul.u32 2, %s32
        %p1857 = scmp.lt.s32.totalorder %s31, 1
        %s1858 = scalar_select %p1857, %s31, 1
        %p1859 = scmp.lt.s32.totalorder %s1856, 3
        %s1860 = scalar_select %p1859, %s1856, 3
        %s1861 = smul.addr %s1858, 4
        %s1862 = sadd.s32 %s1860, %s1861
        %s1863 = smul.addr %s1862, 8
        %s1864 = scalar_lea.vmem %s10, %s1863
        %s1865 = smul.u32 2, %s32
        %p1866 = scmp.lt.s32.totalorder %s31, 1
        %s1867 = scalar_select %p1866, %s31, 1
        %p1868 = scmp.lt.s32.totalorder %s1865, 3
        %s1869 = scalar_select %p1868, %s1865, 3
        %s1870 = smul.addr %s1867, 4
        %s1871 = sadd.s32 %s1869, %s1870
        %s1872 = smul.addr %s1871, 8
        %s1873 = scalar_lea.vmem %s11, %s1872
        // Predicated region
        $region208: #{varnet_cascade.4} parent=170 // pred_check
          %p1874 = pneg %p312
        $region209: #{varnet_cascade.4} parent=170 // pred_check_branch
          %1876 = sbr.rel (%p1874) target = $region211
        $region210: #{varnet_cascade.4} parent=170 // pred_region
          %s1877 = smul.u32 2, %s32
        $region211: #{varnet_cascade.4} parent=170 // pred_fallthru
          _
        // Predicated region
        $region212: #{varnet_cascade.4} parent=170 // pred_check
          %p1878 = pneg %p340
        $region213: #{varnet_cascade.4} parent=170 // pred_check_branch
          %1880 = sbr.rel (%p1878) target = $region215
        $region214: #{varnet_cascade.4} parent=170 // pred_region
          %s1881 = smul.u32 2, %s32
        $region215: #{varnet_cascade.4} parent=170 // pred_fallthru
          _
      $region171: #{varnet_cascade.4} parent=5 // pred_fallthru
        _
      %p1882 = scmp.le.s32.totalorder 2, %s21
      // Predicated region
      $region216: #{varnet_cascade.4} parent=5 // pred_check
        %p1883 = pneg %p1882
      $region217: #{varnet_cascade.4} parent=5 // pred_check_branch
        %1885 = sbr.rel (%p1883) target = $region219
      $region218: #{varnet_cascade.4} parent=5 // pred_region
        %s1886 = ssub.s32 %s21, 2
        // Predicated region
        $region220: #{varnet_cascade.4} parent=218 // pred_check
          %p1887 = pneg %p318
        $region221: #{varnet_cascade.4} parent=218 // pred_check_branch
          %1889 = sbr.rel (%p1887) target = $region223
        $region222: #{varnet_cascade.4} parent=218 // pred_region
          %s1890 = smul.u32 2, %s35
          %p1891 = scmp.lt.s32.totalorder %s34, 1
          %s1892 = scalar_select %p1891, %s34, 1
          %p1893 = scmp.lt.s32.totalorder %s1890, 3
          %s1894 = scalar_select %p1893, %s1890, 3
          %s1895 = smul.addr %s1892, 4
          %s1896 = sadd.s32 %s1894, %s1895
          %s1897 = smul.addr %s1896, 8
          %s1898 = scalar_lea.vmem %s10, %s1897
        $region223: #{varnet_cascade.4} parent=218 // pred_fallthru
          _
        // Predicated region
        $region224: #{varnet_cascade.4} parent=218 // pred_check
          %p1899 = pneg %p346
        $region225: #{varnet_cascade.4} parent=218 // pred_check_branch
          %1901 = sbr.rel (%p1899) target = $region227
        $region226: #{varnet_cascade.4} parent=218 // pred_region
          %s1902 = smul.u32 2, %s35
          %p1903 = scmp.lt.s32.totalorder %s34, 1
          %s1904 = scalar_select %p1903, %s34, 1
          %p1905 = scmp.lt.s32.totalorder %s1902, 3
          %s1906 = scalar_select %p1905, %s1902, 3
          %s1907 = smul.addr %s1904, 4
          %s1908 = sadd.s32 %s1906, %s1907
          %s1909 = smul.addr %s1908, 8
          %s1910 = scalar_lea.vmem %s11, %s1909
        $region227: #{varnet_cascade.4} parent=218 // pred_fallthru
          _
      $region219: #{varnet_cascade.4} parent=5 // pred_fallthru
        _
    $region6: #{varnet_cascade.4} parent=1 // loop_footer
      %s25 = sadd.s32 1, %s21
    $region7: #{varnet_cascade.4} parent=1 // loop_footer_branch
      %20 = sbr.rel target = $region3
    $region8: #{varnet_cascade.4} parent=1 // loop_exit
      _
    %1911 = vsyncpa [#allocation8], 1
    %s1912 = scalar_lea.sflag [#allocation8], 1
    %1913 = vsyncpa %s1912, 1
    %1914 = vsyncpa [#allocation10], 1
    %1915 = vsyncpa [#allocation13], 1

</llo_original>
